<compile_context>
chip_gen: v7x
topology: tpu7x:2x2x1
jax: 0.10.0
libtpu: 0.0.40
codegen_flags: <defaults>
</compile_context>

<pallas_src>
import jax
import jax.numpy as jnp
from jax import lax
from jax.experimental import pallas as pl
from jax.experimental.pallas import tpu as pltpu


def _round_up(n, m):
    return ((n + m - 1) // m) * m


def _vmem_limit_bytes():
    # Explicit scoped-VMEM ceiling: generous on v5e/v6e (128 MiB physical),
    # conservative on v7x (64 MiB physical).
    try:
        cap = pltpu.get_tpu_info().vmem_capacity_bytes
    except Exception:
        cap = 64 << 20
    return int(max(32 << 20, min(cap - (16 << 20), 96 << 20)))


# --------------------------------------------------------------------------
# Stage 1: fused pointwise pass over x
#   a  = SiLU(BN(x @ W_cv1))      (Conv cv1)
#   h  = SiLU(BN(a @ W_m.cv1))    (Bottleneck.cv1)
#   y2 = x @ W_cv2                (plain cv2, no BN / act)
# Outputs: h and the combined [a | y2] slab (one wide output DMA stream).
# --------------------------------------------------------------------------
def _stage1_kernel(x_ref, w1_ref, sb1_ref, wm1_ref, sbm1_ref, w2_ref,
                   h_ref, ay_ref):
    x = x_ref[...]                                            # bf16 (cast in wrapper)

    a = jnp.dot(x, w1_ref[...], preferred_element_type=jnp.float32)
    a = a * sb1_ref[0, :] + sb1_ref[1, :]
    a = a * jax.nn.sigmoid(a)                                 # SiLU

    h = jnp.dot(a.astype(jnp.bfloat16), wm1_ref[...],
                preferred_element_type=jnp.float32)
    h = h * sbm1_ref[0, :] + sbm1_ref[1, :]
    h = h * jax.nn.sigmoid(h)
    h_ref[...] = h.astype(h_ref.dtype)

    y2 = jnp.dot(x, w2_ref[...], preferred_element_type=jnp.float32)
    ay_ref[...] = jnp.concatenate(
        [a.astype(ay_ref.dtype), y2.astype(ay_ref.dtype)], axis=-1)


def _choose_tm(M, cap=1024):
    # Prefer an exact divisor of M (no tail pad / slice copy) that gives >= 2 tiles,
    # so both TensorCores get balanced work under megacore partitioning.
    hi = min(cap, M if M < 16 else M // 2)
    hi = max(8, (hi // 8) * 8)
    for tm in range(hi, 7, -8):
        if M % tm == 0:
            return tm, M
    return hi, _round_up(M, hi)


def stage1(x2d, w1, sb1, wm1, sbm1, w2, vmem_limit):
    M, C1 = x2d.shape
    c_ = w1.shape[1]
    TM, M_pad = _choose_tm(M)
    if M_pad != M:
        x2d = jnp.pad(x2d, ((0, M_pad - M), (0, 0)))

    row_in = pl.BlockSpec((TM, C1), lambda i: (i, 0))
    h_out = pl.BlockSpec((TM, c_), lambda i: (i, 0))
    ay_out = pl.BlockSpec((TM, 2 * c_), lambda i: (i, 0))
    full = lambda shape: pl.BlockSpec(shape, lambda i: (0,) * len(shape))

    h, ay = pl.pallas_call(
        _stage1_kernel,
        out_shape=(jax.ShapeDtypeStruct((M_pad, c_), jnp.bfloat16),
                   jax.ShapeDtypeStruct((M_pad, 2 * c_), jnp.bfloat16)),
        grid_spec=pltpu.PrefetchScalarGridSpec(
            num_scalar_prefetch=0,
            grid=(M_pad // TM,),
            in_specs=[row_in,
                      full(w1.shape), full(sb1.shape),
                      full(wm1.shape), full(sbm1.shape),
                      full(w2.shape)],
            out_specs=[h_out, ay_out],
        ),
        compiler_params=pltpu.CompilerParams(
            dimension_semantics=("parallel",),
            vmem_limit_bytes=vmem_limit),
    )(x2d, w1, sb1, wm1, sbm1, w2)
    if M_pad != M:
        h, ay = h[:M], ay[:M]
    return h, ay


# --------------------------------------------------------------------------
# Stage 2: row-tiled 3x3 conv (Bottleneck.cv2) + BN + SiLU + shortcut, fused with
#   cv3, the standalone BN + LeakyReLU, and cv4 (+BN+SiLU).  Grid = (batch, row tiles).
#   Vertical halo rows are fetched via clamped index maps and zeroed at the borders.
# --------------------------------------------------------------------------
def _make_stage2_kernel(use_slab, fuse_w4):
    def kernel(hm_ref, ht_ref, hb_ref, ay_ref, w9_ref, sbm2_ref, w3_ref,
               sbn1_ref, sbn2_ref, w4_ref, sb4_ref, o_ref):
        t = pl.program_id(1)
        last_t = pl.num_programs(1) - 1
        th, wp2, cin = hm_ref.shape[1], hm_ref.shape[2], hm_ref.shape[3]
        w = wp2 - 2
        c2 = sb4_ref.shape[1]

        # (TH+2, W+2, c_) padded window: main rows + vertical halo rows.
        hm = hm_ref[0]
        top = ht_ref[0]
        bot = hb_ref[0]
        top = jnp.where(t == 0, jnp.zeros_like(top), top)
        bot = jnp.where(t == last_t, jnp.zeros_like(bot), bot)
        win = jnp.concatenate([top, hm, bot], axis=0).astype(jnp.bfloat16)

        # Bottleneck.cv2: 3x3 conv + folded BN + SiLU.
        if use_slab:
            # im2col slab -> one MXU contraction of depth 9*c_ (fills the MXU; v5e/v6e).
            cols = []
            for dy in range(3):
                rows = win[dy:dy + th]
                for dx in range(3):
                    cols.append(rows[:, dx:dx + w, :].reshape(th * w, cin))
            slab = jnp.concatenate(cols, axis=-1)              # (TH*W, 9*c_)
            y = jnp.dot(slab, w9_ref[...], preferred_element_type=jnp.float32)
        else:
            # Per-tap accumulation: ~half the peak VMEM (keeps v7x under 64 MiB).
            y = jnp.zeros((th * w, cin), jnp.float32)
            for k in range(9):
                dy, dx = divmod(k, 3)
                tap = win[dy:dy + th, dx:dx + w, :].reshape(th * w, cin)
                y = y + jnp.dot(tap, w9_ref[k * cin:(k + 1) * cin, :],
                                preferred_element_type=jnp.float32)
        y = y * sbm2_ref[0, :] + sbm2_ref[1, :]
        y = y * jax.nn.sigmoid(y)                              # SiLU

        ay = ay_ref[0].reshape(th * w, 2 * cin)                # [a | y2]
        a = ay[:, :cin].astype(jnp.float32)
        mres = y + a                                           # shortcut add

        # cv3 (plain 1x1 conv).
        y1 = jnp.dot(mres.astype(jnp.bfloat16), w3_ref[...],
                     preferred_element_type=jnp.float32)

        # standalone BN (per concat half) + LeakyReLU(0.1).
        z1 = y1 * sbn1_ref[0, :] + sbn1_ref[1, :]
        z1 = jnp.where(z1 >= 0, z1, 0.1 * z1)
        z2 = ay[:, cin:].astype(jnp.float32) * sbn2_ref[0, :] + sbn2_ref[1, :]
        z2 = jnp.where(z2 >= 0, z2, 0.1 * z2)

        # cv4: concat-free 1x1 conv + folded BN + SiLU.
        if fuse_w4:
            z = jnp.concatenate([z1.astype(jnp.bfloat16),
                                 z2.astype(jnp.bfloat16)], axis=-1)
            acc = jnp.dot(z, w4_ref[...], preferred_element_type=jnp.float32)
        else:
            acc = jnp.dot(z1.astype(jnp.bfloat16), w4_ref[:cin, :],
                          preferred_element_type=jnp.float32)
            acc = acc + jnp.dot(z2.astype(jnp.bfloat16), w4_ref[cin:, :],
                                preferred_element_type=jnp.float32)
        acc = acc * sb4_ref[0, :] + sb4_ref[1, :]
        out = acc * jax.nn.sigmoid(acc)                        # SiLU
        o_ref[0] = out.reshape(th, w, c2).astype(o_ref.dtype)

    return kernel


def _choose_th(H, W, c_, C2, budget):
    def tile_bytes(th):
        bf, f32 = 2, 4
        win = (th + 2) * (W + 2) * c_ * bf
        slab = th * W * 9 * c_ * bf
        interm = 6 * th * W * c_ * f32 + 2 * th * W * C2 * f32
        io = 2 * (th * W * (3 * c_ + C2) * bf + 2 * (W + 2) * c_ * bf)
        return win + slab + interm + io
    divs = [d for d in range(min(H, 64), 0, -1) if H % d == 0]
    for th in divs:
        if tile_bytes(th) <= budget:
            return th
    # TODO(synk): also tile W for very wide feature maps; tiny TH is a perf cliff.
    return divs[-1]


def stage2_fused(h_img, ay_img, w9, sbm2, w3, sbn1, sbn2, w4, sb4, vmem_limit):
    N, H, W, c_ = h_img.shape
    C2 = w4.shape[1]
    budget = max(vmem_limit // 3, 8 << 20)
    TH = _choose_th(H, W, c_, C2, budget)
    # Keep the deep K=9*c_ im2col contraction when its slab comfortably fits
    # (v5e/v6e); fall back to per-tap accumulation otherwise (v7x / huge tiles).
    use_slab = (4 * TH * W * 9 * c_ * 2) <= budget
    fuse_w4 = (c_ % 128 == 0)

    # 1-pixel zero halo on W only; the vertical halo is handled in-kernel so h is
    # never H-padded.
    # TODO(synk): fold the W halo into stage 1's output write to drop this last copy.
    hp = jnp.pad(h_img, ((0, 0), (0, 0), (1, 1), (0, 0)))
    Wp2 = W + 2

    h_main = pl.BlockSpec((1, TH, Wp2, c_), lambda n, t: (n, t, 0, 0))
    h_top = pl.BlockSpec((1, 1, Wp2, c_),
                         lambda n, t: (n, jnp.maximum(t * TH - 1, 0), 0, 0))
    h_bot = pl.BlockSpec((1, 1, Wp2, c_),
                         lambda n, t: (n, jnp.minimum(t * TH + TH, H - 1), 0, 0))
    ay_spec = pl.BlockSpec((1, TH, W, 2 * c_), lambda n, t: (n, t, 0, 0))
    out_spec = pl.BlockSpec((1, TH, W, C2), lambda n, t: (n, t, 0, 0))
    full = lambda shape: pl.BlockSpec(shape, lambda n, t: (0,) * len(shape))

    return pl.pallas_call(
        _make_stage2_kernel(use_slab, fuse_w4),
        out_shape=jax.ShapeDtypeStruct((N, H, W, C2), jnp.bfloat16),
        grid_spec=pltpu.PrefetchScalarGridSpec(
            num_scalar_prefetch=0,
            grid=(N, H // TH),
            in_specs=[h_main, h_top, h_bot, ay_spec,
                      full(w9.shape), full(sbm2.shape), full(w3.shape),
                      full(sbn1.shape), full(sbn2.shape),
                      full(w4.shape), full(sb4.shape)],
            out_specs=out_spec,
        ),
        compiler_params=pltpu.CompilerParams(
            dimension_semantics=("parallel", "parallel"),
            vmem_limit_bytes=vmem_limit),
    )(hp, hp, hp, ay_img, w9, sbm2, w3, sbn1, sbn2, w4, sb4)


# --------------------------------------------------------------------------
# Full BottleneckCSP forward (NCHW in / NCHW out).
# --------------------------------------------------------------------------
def bottleneck_csp_forward(x_nchw, params):
    N, C1, H, W = x_nchw.shape
    # NCHW -> NHWC in bf16 (halves boundary + stage-1 HBM traffic; MXU is bf16 anyway).
    x = jnp.transpose(x_nchw.astype(jnp.bfloat16), (0, 2, 3, 1))
    M = N * H * W
    x2d = x.reshape(M, C1)

    bf16 = jnp.bfloat16
    c_ = params["cv1_w"].shape[-1]
    w1 = params["cv1_w"][0, 0].astype(bf16)          # (C1, c_)
    wm1 = params["m1_w"][0, 0].astype(bf16)          # (c_, c_)
    w2 = params["cv2_w"][0, 0].astype(bf16)          # (C1, c_)
    w3 = params["cv3_w"][0, 0].astype(bf16)          # (c_, c_)
    w4 = params["cv4_w"][0, 0].astype(bf16)          # (2c_, C2)
    w9 = params["m2_w"].reshape(9 * c_, c_).astype(bf16)

    f32 = jnp.float32
    sb1 = jnp.stack(params["cv1_sb"]).astype(f32)    # (2, c_)
    sbm1 = jnp.stack(params["m1_sb"]).astype(f32)
    sbm2 = jnp.stack(params["m2_sb"]).astype(f32)
    sb4 = jnp.stack(params["cv4_sb"]).astype(f32)    # (2, C2)
    sbn = jnp.stack(params["bn_sb"]).astype(f32)     # (2, 2c_)
    sbn1, sbn2 = sbn[:, :c_], sbn[:, c_:]

    vmem_limit = _vmem_limit_bytes()

    # Stage 1: cv1 / Bottleneck.cv1 / cv2 in one pass over x.
    h2d, ay2d = stage1(x2d, w1, sb1, wm1, sbm1, w2, vmem_limit)
    h_img = h2d.reshape(N, H, W, c_)
    ay_img = ay2d.reshape(N, H, W, 2 * c_)

    # Stage 2: 3x3 conv + shortcut + cv3 + BN + LeakyReLU + cv4 (+BN+SiLU), all fused.
    out_img = stage2_fused(h_img, ay_img, w9, sbm2, w3, sbn1, sbn2, w4, sb4,
                           vmem_limit)
    return jnp.transpose(out_img, (0, 3, 1, 2)).astype(jnp.float32)   # NCHW, f32


# --------------------------------------------------------------------------
# Deterministic synthetic parameters with BatchNorm folding (eval mode).
# --------------------------------------------------------------------------
def _fold_bn(gamma, beta, mean, var, eps):
    scale = gamma / jnp.sqrt(var + eps)
    bias = beta - mean * scale
    return scale, bias


def _make_bn(key, c, eps):
    kg, kb, km, kv = jax.random.split(key, 4)
    gamma = 1.0 + 0.1 * jax.random.normal(kg, (c,), jnp.float32)
    beta = 0.1 * jax.random.normal(kb, (c,), jnp.float32)
    mean = 0.1 * jax.random.normal(km, (c,), jnp.float32)
    var = jnp.abs(jax.random.normal(kv, (c,), jnp.float32)) + 0.5
    return _fold_bn(gamma, beta, mean, var, eps)


def _make_w(key, cin, cout, k):
    return jax.random.normal(key, (k, k, cin, cout), jnp.float32) / jnp.sqrt(cin * k * k)


def make_bottleneck_csp_params(key, c1, c2, e=0.5):
    c_ = int(c2 * e)
    ks = jax.random.split(key, 11)
    return {
        "cv1_w": _make_w(ks[0], c1, c_, 1), "cv1_sb": _make_bn(ks[1], c_, 1e-5),
        "cv2_w": _make_w(ks[2], c1, c_, 1),                 # plain Conv2d
        "cv3_w": _make_w(ks[3], c_, c_, 1),                 # plain Conv2d
        "cv4_w": _make_w(ks[4], 2 * c_, c2, 1), "cv4_sb": _make_bn(ks[5], c2, 1e-5),
        "bn_sb": _make_bn(ks[6], 2 * c_, 1e-4),             # standalone BatchNorm2d
        "m1_w": _make_w(ks[7], c_, c_, 1), "m1_sb": _make_bn(ks[8], c_, 1e-5),
        "m2_w": _make_w(ks[9], c_, c_, 3), "m2_sb": _make_bn(ks[10], c_, 1e-5),
    }


# --------------------------------------------------------------------------
# Pure-JAX f32 reference for the correctness check.
# --------------------------------------------------------------------------
def _conv(x, w, pad):
    return lax.conv_general_dilated(x, w, (1, 1), pad,
                                    dimension_numbers=("NHWC", "HWIO", "NHWC"))


def _conv_bn_silu(x, w, sb, pad):
    y = _conv(x, w, pad)
    y = y * sb[0] + sb[1]
    return y * jax.nn.sigmoid(y)


def bottleneck_csp_ref(x_nchw, p):
    x = jnp.transpose(x_nchw, (0, 2, 3, 1)).astype(jnp.float32)
    a = _conv_bn_silu(x, p["cv1_w"], p["cv1_sb"], "VALID")
    h = _conv_bn_silu(a, p["m1_w"], p["m1_sb"], "VALID")
    m = a + _conv_bn_silu(h, p["m2_w"], p["m2_sb"], "SAME")
    y1 = _conv(m, p["cv3_w"], "VALID")
    y2 = _conv(x, p["cv2_w"], "VALID")
    cat = jnp.concatenate([y1, y2], axis=-1)
    z = cat * p["bn_sb"][0] + p["bn_sb"][1]
    z = jnp.where(z >= 0, z, 0.1 * z)
    out = _conv_bn_silu(z, p["cv4_w"], p["cv4_sb"], "VALID")
    return jnp.transpose(out, (0, 3, 1, 2))


if __name__ == "__main__":
    key = jax.random.PRNGKey(0)
    k_x, k_p = jax.random.split(key)

    N, C1, H, W = 2, 16, 16, 16          # c1 = c2 = 16 -> c_ = 8
    C2 = 16
    x = jax.random.normal(k_x, (N, C1, H, W), jnp.float32)
    params = make_bottleneck_csp_params(k_p, C1, C2, e=0.5)

    fwd = jax.jit(bottleneck_csp_forward)
    out = jax.block_until_ready(fwd(x, params))
    ref = jax.block_until_ready(bottleneck_csp_ref(x, params))

    assert out.shape == (N, C2, H, W), out.shape
    err = float(jnp.max(jnp.abs(out - ref)))
    ref_max = float(jnp.max(jnp.abs(ref))) + 1e-6
    assert err / ref_max < 5e-2, f"max abs err {err} (ref max {ref_max})"
    print("KERNEL_OK")
</pallas_src>

<mosaic_0001>
module attributes {stable_mosaic.version = 11 : i64} {
  func.func @_stage1_kernel(%arg0: i32, %arg1: memref<256x16xbf16, #tpu.memory_space<vmem>>, %arg2: memref<16x8xbf16, #tpu.memory_space<vmem>>, %arg3: memref<2x8xf32, #tpu.memory_space<vmem>>, %arg4: memref<8x8xbf16, #tpu.memory_space<vmem>>, %arg5: memref<2x8xf32, #tpu.memory_space<vmem>>, %arg6: memref<16x8xbf16, #tpu.memory_space<vmem>>, %arg7: memref<256x8xbf16, #tpu.memory_space<vmem>>, %arg8: memref<256x16xbf16, #tpu.memory_space<vmem>>) attributes {dimension_semantics = [#tpu.dimension_semantics<parallel>], iteration_bounds = array<i64: 2>, scalar_prefetch = 0 : i64, scratch_operands = 0 : i64, tpu.core_type = #tpu.core_type<tc>, window_params = [{transform_indices = @transform_0, window_bounds = array<i64: 256, 16>}, {pipeline_mode = #tpu.pipeline_mode<synchronous>, transform_indices = @transform_1, window_bounds = array<i64: 16, 8>}, {pipeline_mode = #tpu.pipeline_mode<synchronous>, transform_indices = @transform_2, window_bounds = array<i64: 2, 8>}, {pipeline_mode = #tpu.pipeline_mode<synchronous>, transform_indices = @transform_3, window_bounds = array<i64: 8, 8>}, {pipeline_mode = #tpu.pipeline_mode<synchronous>, transform_indices = @transform_4, window_bounds = array<i64: 2, 8>}, {pipeline_mode = #tpu.pipeline_mode<synchronous>, transform_indices = @transform_5, window_bounds = array<i64: 16, 8>}, {transform_indices = @transform_6, window_bounds = array<i64: 256, 8>}, {transform_indices = @transform_7, window_bounds = array<i64: 256, 16>}]} {
    %c0 = arith.constant 0 : index
    %c0_0 = arith.constant 0 : index
    %0 = vector.load %arg1[%c0, %c0_0] : memref<256x16xbf16, #tpu.memory_space<vmem>>, vector<256x16xbf16>
    %c0_1 = arith.constant 0 : index
    %c0_2 = arith.constant 0 : index
    %1 = vector.load %arg2[%c0_1, %c0_2] : memref<16x8xbf16, #tpu.memory_space<vmem>>, vector<16x8xbf16>
    %cst = arith.constant dense<0.000000e+00> : vector<256x8xf32>
    %2 = tpu.matmul %0, %1, %cst {dimension_numbers = #tpu.dot_dimension_numbers<[1], [0], [0], [1], [0, 0, 1, 1], [], []>} : vector<256x16xbf16>, vector<16x8xbf16>, vector<256x8xf32> -> vector<256x8xf32>
    %c0_3 = arith.constant 0 : index
    %c0_4 = arith.constant 0 : index
    %3 = vector.load %arg3[%c0_3, %c0_4] : memref<2x8xf32, #tpu.memory_space<vmem>>, vector<1x8xf32>
    %4 = vector.shape_cast %3 : vector<1x8xf32> to vector<8xf32>
    %5 = vector.shape_cast %4 : vector<8xf32> to vector<1x8xf32>
    %6 = vector.broadcast %5 : vector<1x8xf32> to vector<256x8xf32>
    %7 = arith.mulf %2, %6 : vector<256x8xf32>
    %c1 = arith.constant 1 : index
    %c0_5 = arith.constant 0 : index
    %8 = vector.load %arg3[%c1, %c0_5] : memref<2x8xf32, #tpu.memory_space<vmem>>, vector<1x8xf32>
    %9 = vector.shape_cast %8 : vector<1x8xf32> to vector<8xf32>
    %10 = vector.shape_cast %9 : vector<8xf32> to vector<1x8xf32>
    %11 = vector.broadcast %10 : vector<1x8xf32> to vector<256x8xf32>
    %12 = arith.addf %7, %11 : vector<256x8xf32>
    %13 = arith.negf %12 : vector<256x8xf32>
    %14 = math.exp %13 : vector<256x8xf32>
    %cst_6 = arith.constant 1.000000e+00 : f32
    %15 = vector.broadcast %cst_6 : f32 to vector<256x8xf32>
    %16 = arith.addf %15, %14 : vector<256x8xf32>
    %17 = arith.divf %15, %16 : vector<256x8xf32>
    %18 = arith.mulf %12, %17 : vector<256x8xf32>
    %19 = arith.truncf %18 : vector<256x8xf32> to vector<256x8xbf16>
    %c0_7 = arith.constant 0 : index
    %c0_8 = arith.constant 0 : index
    %20 = vector.load %arg4[%c0_7, %c0_8] : memref<8x8xbf16, #tpu.memory_space<vmem>>, vector<8x8xbf16>
    %cst_9 = arith.constant dense<0.000000e+00> : vector<256x8xf32>
    %21 = tpu.matmul %19, %20, %cst_9 {dimension_numbers = #tpu.dot_dimension_numbers<[1], [0], [0], [1], [0, 0, 1, 1], [], []>} : vector<256x8xbf16>, vector<8x8xbf16>, vector<256x8xf32> -> vector<256x8xf32>
    %c0_10 = arith.constant 0 : index
    %c0_11 = arith.constant 0 : index
    %22 = vector.load %arg5[%c0_10, %c0_11] : memref<2x8xf32, #tpu.memory_space<vmem>>, vector<1x8xf32>
    %23 = vector.shape_cast %22 : vector<1x8xf32> to vector<8xf32>
    %24 = vector.shape_cast %23 : vector<8xf32> to vector<1x8xf32>
    %25 = vector.broadcast %24 : vector<1x8xf32> to vector<256x8xf32>
    %26 = arith.mulf %21, %25 : vector<256x8xf32>
    %c1_12 = arith.constant 1 : index
    %c0_13 = arith.constant 0 : index
    %27 = vector.load %arg5[%c1_12, %c0_13] : memref<2x8xf32, #tpu.memory_space<vmem>>, vector<1x8xf32>
    %28 = vector.shape_cast %27 : vector<1x8xf32> to vector<8xf32>
    %29 = vector.shape_cast %28 : vector<8xf32> to vector<1x8xf32>
    %30 = vector.broadcast %29 : vector<1x8xf32> to vector<256x8xf32>
    %31 = arith.addf %26, %30 : vector<256x8xf32>
    %32 = arith.negf %31 : vector<256x8xf32>
    %33 = math.exp %32 : vector<256x8xf32>
    %cst_14 = arith.constant 1.000000e+00 : f32
    %34 = vector.broadcast %cst_14 : f32 to vector<256x8xf32>
    %35 = arith.addf %34, %33 : vector<256x8xf32>
    %36 = arith.divf %34, %35 : vector<256x8xf32>
    %37 = arith.mulf %31, %36 : vector<256x8xf32>
    %38 = arith.truncf %37 : vector<256x8xf32> to vector<256x8xbf16>
    %c0_15 = arith.constant 0 : index
    %c0_16 = arith.constant 0 : index
    %39 = vector.load %arg7[%c0_15, %c0_16] : memref<256x8xbf16, #tpu.memory_space<vmem>>, vector<256x8xbf16>
    tpu.vector_store %arg7[%c0_15, %c0_16], %38 {strides = array<i32>} : memref<256x8xbf16, #tpu.memory_space<vmem>>, vector<256x8xbf16>,
    %c0_17 = arith.constant 0 : index
    %c0_18 = arith.constant 0 : index
    %40 = vector.load %arg6[%c0_17, %c0_18] : memref<16x8xbf16, #tpu.memory_space<vmem>>, vector<16x8xbf16>
    %cst_19 = arith.constant dense<0.000000e+00> : vector<256x8xf32>
    %41 = tpu.matmul %0, %40, %cst_19 {dimension_numbers = #tpu.dot_dimension_numbers<[1], [0], [0], [1], [0, 0, 1, 1], [], []>} : vector<256x16xbf16>, vector<16x8xbf16>, vector<256x8xf32> -> vector<256x8xf32>
    %42 = arith.truncf %18 : vector<256x8xf32> to vector<256x8xbf16>
    %43 = arith.truncf %41 : vector<256x8xf32> to vector<256x8xbf16>
    %44 = tpu.concatenate %42, %43 in 1 : vector<256x8xbf16>, vector<256x8xbf16> -> vector<256x16xbf16>
    %c0_20 = arith.constant 0 : index
    %c0_21 = arith.constant 0 : index
    %45 = vector.load %arg8[%c0_20, %c0_21] : memref<256x16xbf16, #tpu.memory_space<vmem>>, vector<256x16xbf16>
    tpu.vector_store %arg8[%c0_20, %c0_21], %44 {strides = array<i32>} : memref<256x16xbf16, #tpu.memory_space<vmem>>, vector<256x16xbf16>,
    return
  }
  func.func @transform_0(%arg0: i32) -> (i32, i32) {
    %c0_i32 = arith.constant 0 : i32
    %c0_i32_0 = arith.constant 0 : i32
    return %arg0, %c0_i32 : i32, i32
  }
  func.func @transform_1(%arg0: i32) -> (i32, i32) {
    %c0_i32 = arith.constant 0 : i32
    %c0_i32_0 = arith.constant 0 : i32
    %c0_i32_1 = arith.constant 0 : i32
    return %c0_i32, %c0_i32_0 : i32, i32
  }
  func.func @transform_2(%arg0: i32) -> (i32, i32) {
    %c0_i32 = arith.constant 0 : i32
    %c0_i32_0 = arith.constant 0 : i32
    %c0_i32_1 = arith.constant 0 : i32
    return %c0_i32, %c0_i32_0 : i32, i32
  }
  func.func @transform_3(%arg0: i32) -> (i32, i32) {
    %c0_i32 = arith.constant 0 : i32
    %c0_i32_0 = arith.constant 0 : i32
    %c0_i32_1 = arith.constant 0 : i32
    return %c0_i32, %c0_i32_0 : i32, i32
  }
  func.func @transform_4(%arg0: i32) -> (i32, i32) {
    %c0_i32 = arith.constant 0 : i32
    %c0_i32_0 = arith.constant 0 : i32
    %c0_i32_1 = arith.constant 0 : i32
    return %c0_i32, %c0_i32_0 : i32, i32
  }
  func.func @transform_5(%arg0: i32) -> (i32, i32) {
    %c0_i32 = arith.constant 0 : i32
    %c0_i32_0 = arith.constant 0 : i32
    %c0_i32_1 = arith.constant 0 : i32
    return %c0_i32, %c0_i32_0 : i32, i32
  }
  func.func @transform_6(%arg0: i32) -> (i32, i32) {
    %c0_i32 = arith.constant 0 : i32
    %c0_i32_0 = arith.constant 0 : i32
    return %arg0, %c0_i32 : i32, i32
  }
  func.func @transform_7(%arg0: i32) -> (i32, i32) {
    %c0_i32 = arith.constant 0 : i32
    %c0_i32_0 = arith.constant 0 : i32
    return %arg0, %c0_i32 : i32, i32
  }
}

module attributes {stable_mosaic.version = 11 : i64} {
  func.func @kernel(%arg0: i32, %arg1: i32, %arg2: memref<1x16x18x8xbf16, #tpu.memory_space<vmem>>, %arg3: memref<1x1x18x8xbf16, #tpu.memory_space<vmem>>, %arg4: memref<1x1x18x8xbf16, #tpu.memory_space<vmem>>, %arg5: memref<1x16x16x16xbf16, #tpu.memory_space<vmem>>, %arg6: memref<72x8xbf16, #tpu.memory_space<vmem>>, %arg7: memref<2x8xf32, #tpu.memory_space<vmem>>, %arg8: memref<8x8xbf16, #tpu.memory_space<vmem>>, %arg9: memref<2x8xf32, #tpu.memory_space<vmem>>, %arg10: memref<2x8xf32, #tpu.memory_space<vmem>>, %arg11: memref<16x16xbf16, #tpu.memory_space<vmem>>, %arg12: memref<2x16xf32, #tpu.memory_space<vmem>>, %arg13: memref<1x16x16x16xbf16, #tpu.memory_space<vmem>>) attributes {dimension_semantics = [#tpu.dimension_semantics<parallel>, #tpu.dimension_semantics<parallel>], iteration_bounds = array<i64: 2, 1>, scalar_prefetch = 0 : i64, scratch_operands = 0 : i64, tpu.core_type = #tpu.core_type<tc>, window_params = [{transform_indices = @transform_0, window_bounds = array<i64: 1, 16, 18, 8>}, {transform_indices = @transform_1, window_bounds = array<i64: 1, 1, 18, 8>}, {transform_indices = @transform_2, window_bounds = array<i64: 1, 1, 18, 8>}, {transform_indices = @transform_3, window_bounds = array<i64: 1, 16, 16, 16>}, {pipeline_mode = #tpu.pipeline_mode<synchronous>, transform_indices = @transform_4, window_bounds = array<i64: 72, 8>}, {pipeline_mode = #tpu.pipeline_mode<synchronous>, transform_indices = @transform_5, window_bounds = array<i64: 2, 8>}, {pipeline_mode = #tpu.pipeline_mode<synchronous>, transform_indices = @transform_6, window_bounds = array<i64: 8, 8>}, {pipeline_mode = #tpu.pipeline_mode<synchronous>, transform_indices = @transform_7, window_bounds = array<i64: 2, 8>}, {pipeline_mode = #tpu.pipeline_mode<synchronous>, transform_indices = @transform_8, window_bounds = array<i64: 2, 8>}, {pipeline_mode = #tpu.pipeline_mode<synchronous>, transform_indices = @transform_9, window_bounds = array<i64: 16, 16>}, {pipeline_mode = #tpu.pipeline_mode<synchronous>, transform_indices = @transform_10, window_bounds = array<i64: 2, 16>}, {transform_indices = @transform_11, window_bounds = array<i64: 1, 16, 16, 16>}]} {
    %c0 = arith.constant 0 : index
    %c0_0 = arith.constant 0 : index
    %c0_1 = arith.constant 0 : index
    %c0_2 = arith.constant 0 : index
    %0 = vector.load %arg2[%c0, %c0_0, %c0_1, %c0_2] : memref<1x16x18x8xbf16, #tpu.memory_space<vmem>>, vector<1x16x18x8xbf16>
    %1 = vector.shape_cast %0 : vector<1x16x18x8xbf16> to vector<16x18x8xbf16>
    %c0_3 = arith.constant 0 : index
    %c0_4 = arith.constant 0 : index
    %c0_5 = arith.constant 0 : index
    %c0_6 = arith.constant 0 : index
    %2 = vector.load %arg3[%c0_3, %c0_4, %c0_5, %c0_6] : memref<1x1x18x8xbf16, #tpu.memory_space<vmem>>, vector<1x1x18x8xbf16>
    %3 = vector.shape_cast %2 : vector<1x1x18x8xbf16> to vector<1x18x8xbf16>
    %c0_7 = arith.constant 0 : index
    %c0_8 = arith.constant 0 : index
    %c0_9 = arith.constant 0 : index
    %c0_10 = arith.constant 0 : index
    %4 = vector.load %arg4[%c0_7, %c0_8, %c0_9, %c0_10] : memref<1x1x18x8xbf16, #tpu.memory_space<vmem>>, vector<1x1x18x8xbf16>
    %5 = vector.shape_cast %4 : vector<1x1x18x8xbf16> to vector<1x18x8xbf16>
    %c0_i32 = arith.constant 0 : i32
    %6 = arith.cmpi eq, %arg1, %c0_i32 : i32
    %cst = arith.constant 0.000000e+00 : bf16
    %7 = vector.broadcast %cst : bf16 to vector<1x18x8xbf16>
    %8 = arith.select %6, %7, %3 : vector<1x18x8xbf16>
    %c0_i32_11 = arith.constant 0 : i32
    %9 = arith.cmpi eq, %arg1, %c0_i32_11 : i32
    %cst_12 = arith.constant 0.000000e+00 : bf16
    %10 = vector.broadcast %cst_12 : bf16 to vector<1x18x8xbf16>
    %11 = arith.select %9, %10, %5 : vector<1x18x8xbf16>
    %12 = tpu.concatenate %8, %1, %11 in 0 : vector<1x18x8xbf16>, vector<16x18x8xbf16>, vector<1x18x8xbf16> -> vector<18x18x8xbf16>
    %13 = vector.extract_strided_slice %12 {offsets = [0, 0, 0], sizes = [16, 18, 8], strides = [1, 1, 1]} : vector<18x18x8xbf16> to vector<16x18x8xbf16>
    %14 = vector.extract_strided_slice %13 {offsets = [0, 0, 0], sizes = [16, 16, 8], strides = [1, 1, 1]} : vector<16x18x8xbf16> to vector<16x16x8xbf16>
    %15 = vector.shape_cast %14 : vector<16x16x8xbf16> to vector<256x8xbf16>
    %16 = vector.extract_strided_slice %13 {offsets = [0, 1, 0], sizes = [16, 16, 8], strides = [1, 1, 1]} : vector<16x18x8xbf16> to vector<16x16x8xbf16>
    %17 = vector.shape_cast %16 : vector<16x16x8xbf16> to vector<256x8xbf16>
    %18 = vector.extract_strided_slice %13 {offsets = [0, 2, 0], sizes = [16, 16, 8], strides = [1, 1, 1]} : vector<16x18x8xbf16> to vector<16x16x8xbf16>
    %19 = vector.shape_cast %18 : vector<16x16x8xbf16> to vector<256x8xbf16>
    %20 = vector.extract_strided_slice %12 {offsets = [1, 0, 0], sizes = [16, 18, 8], strides = [1, 1, 1]} : vector<18x18x8xbf16> to vector<16x18x8xbf16>
    %21 = vector.extract_strided_slice %20 {offsets = [0, 0, 0], sizes = [16, 16, 8], strides = [1, 1, 1]} : vector<16x18x8xbf16> to vector<16x16x8xbf16>
    %22 = vector.shape_cast %21 : vector<16x16x8xbf16> to vector<256x8xbf16>
    %23 = vector.extract_strided_slice %20 {offsets = [0, 1, 0], sizes = [16, 16, 8], strides = [1, 1, 1]} : vector<16x18x8xbf16> to vector<16x16x8xbf16>
    %24 = vector.shape_cast %23 : vector<16x16x8xbf16> to vector<256x8xbf16>
    %25 = vector.extract_strided_slice %20 {offsets = [0, 2, 0], sizes = [16, 16, 8], strides = [1, 1, 1]} : vector<16x18x8xbf16> to vector<16x16x8xbf16>
    %26 = vector.shape_cast %25 : vector<16x16x8xbf16> to vector<256x8xbf16>
    %27 = vector.extract_strided_slice %12 {offsets = [2, 0, 0], sizes = [16, 18, 8], strides = [1, 1, 1]} : vector<18x18x8xbf16> to vector<16x18x8xbf16>
    %28 = vector.extract_strided_slice %27 {offsets = [0, 0, 0], sizes = [16, 16, 8], strides = [1, 1, 1]} : vector<16x18x8xbf16> to vector<16x16x8xbf16>
    %29 = vector.shape_cast %28 : vector<16x16x8xbf16> to vector<256x8xbf16>
    %30 = vector.extract_strided_slice %27 {offsets = [0, 1, 0], sizes = [16, 16, 8], strides = [1, 1, 1]} : vector<16x18x8xbf16> to vector<16x16x8xbf16>
    %31 = vector.shape_cast %30 : vector<16x16x8xbf16> to vector<256x8xbf16>
    %32 = vector.extract_strided_slice %27 {offsets = [0, 2, 0], sizes = [16, 16, 8], strides = [1, 1, 1]} : vector<16x18x8xbf16> to vector<16x16x8xbf16>
    %33 = vector.shape_cast %32 : vector<16x16x8xbf16> to vector<256x8xbf16>
    %34 = tpu.concatenate %15, %17, %19, %22, %24, %26, %29, %31, %33 in 1 : vector<256x8xbf16>, vector<256x8xbf16>, vector<256x8xbf16>, vector<256x8xbf16>, vector<256x8xbf16>, vector<256x8xbf16>, vector<256x8xbf16>, vector<256x8xbf16>, vector<256x8xbf16> -> vector<256x72xbf16>
    %c0_13 = arith.constant 0 : index
    %c0_14 = arith.constant 0 : index
    %35 = vector.load %arg6[%c0_13, %c0_14] : memref<72x8xbf16, #tpu.memory_space<vmem>>, vector<72x8xbf16>
    %cst_15 = arith.constant dense<0.000000e+00> : vector<256x8xf32>
    %36 = tpu.matmul %34, %35, %cst_15 {dimension_numbers = #tpu.dot_dimension_numbers<[1], [0], [0], [1], [0, 0, 1, 1], [], []>} : vector<256x72xbf16>, vector<72x8xbf16>, vector<256x8xf32> -> vector<256x8xf32>
    %c0_16 = arith.constant 0 : index
    %c0_17 = arith.constant 0 : index
    %37 = vector.load %arg7[%c0_16, %c0_17] : memref<2x8xf32, #tpu.memory_space<vmem>>, vector<1x8xf32>
    %38 = vector.shape_cast %37 : vector<1x8xf32> to vector<8xf32>
    %39 = vector.shape_cast %38 : vector<8xf32> to vector<1x8xf32>
    %40 = vector.broadcast %39 : vector<1x8xf32> to vector<256x8xf32>
    %41 = arith.mulf %36, %40 : vector<256x8xf32>
    %c1 = arith.constant 1 : index
    %c0_18 = arith.constant 0 : index
    %42 = vector.load %arg7[%c1, %c0_18] : memref<2x8xf32, #tpu.memory_space<vmem>>, vector<1x8xf32>
    %43 = vector.shape_cast %42 : vector<1x8xf32> to vector<8xf32>
    %44 = vector.shape_cast %43 : vector<8xf32> to vector<1x8xf32>
    %45 = vector.broadcast %44 : vector<1x8xf32> to vector<256x8xf32>
    %46 = arith.addf %41, %45 : vector<256x8xf32>
    %47 = arith.negf %46 : vector<256x8xf32>
    %48 = math.exp %47 : vector<256x8xf32>
    %cst_19 = arith.constant 1.000000e+00 : f32
    %49 = vector.broadcast %cst_19 : f32 to vector<256x8xf32>
    %50 = arith.addf %49, %48 : vector<256x8xf32>
    %51 = arith.divf %49, %50 : vector<256x8xf32>
    %52 = arith.mulf %46, %51 : vector<256x8xf32>
    %c0_20 = arith.constant 0 : index
    %c0_21 = arith.constant 0 : index
    %c0_22 = arith.constant 0 : index
    %c0_23 = arith.constant 0 : index
    %53 = vector.load %arg5[%c0_20, %c0_21, %c0_22, %c0_23] : memref<1x16x16x16xbf16, #tpu.memory_space<vmem>>, vector<1x16x16x16xbf16>
    %54 = vector.shape_cast %53 : vector<1x16x16x16xbf16> to vector<16x16x16xbf16>
    %55 = vector.shape_cast %54 : vector<16x16x16xbf16> to vector<256x16xbf16>
    %56 = vector.extract_strided_slice %55 {offsets = [0, 0], sizes = [256, 8], strides = [1, 1]} : vector<256x16xbf16> to vector<256x8xbf16>
    %57 = arith.extf %56 : vector<256x8xbf16> to vector<256x8xf32>
    %58 = arith.addf %52, %57 : vector<256x8xf32>
    %59 = arith.truncf %58 : vector<256x8xf32> to vector<256x8xbf16>
    %c0_24 = arith.constant 0 : index
    %c0_25 = arith.constant 0 : index
    %60 = vector.load %arg8[%c0_24, %c0_25] : memref<8x8xbf16, #tpu.memory_space<vmem>>, vector<8x8xbf16>
    %cst_26 = arith.constant dense<0.000000e+00> : vector<256x8xf32>
    %61 = tpu.matmul %59, %60, %cst_26 {dimension_numbers = #tpu.dot_dimension_numbers<[1], [0], [0], [1], [0, 0, 1, 1], [], []>} : vector<256x8xbf16>, vector<8x8xbf16>, vector<256x8xf32> -> vector<256x8xf32>
    %c0_27 = arith.constant 0 : index
    %c0_28 = arith.constant 0 : index
    %62 = vector.load %arg9[%c0_27, %c0_28] : memref<2x8xf32, #tpu.memory_space<vmem>>, vector<1x8xf32>
    %63 = vector.shape_cast %62 : vector<1x8xf32> to vector<8xf32>
    %64 = vector.shape_cast %63 : vector<8xf32> to vector<1x8xf32>
    %65 = vector.broadcast %64 : vector<1x8xf32> to vector<256x8xf32>
    %66 = arith.mulf %61, %65 : vector<256x8xf32>
    %c1_29 = arith.constant 1 : index
    %c0_30 = arith.constant 0 : index
    %67 = vector.load %arg9[%c1_29, %c0_30] : memref<2x8xf32, #tpu.memory_space<vmem>>, vector<1x8xf32>
    %68 = vector.shape_cast %67 : vector<1x8xf32> to vector<8xf32>
    %69 = vector.shape_cast %68 : vector<8xf32> to vector<1x8xf32>
    %70 = vector.broadcast %69 : vector<1x8xf32> to vector<256x8xf32>
    %71 = arith.addf %66, %70 : vector<256x8xf32>
    %cst_31 = arith.constant 0.000000e+00 : f32
    %72 = vector.broadcast %cst_31 : f32 to vector<256x8xf32>
    %73 = arith.cmpf oge, %71, %72 : vector<256x8xf32>
    %cst_32 = arith.constant 1.000000e-01 : f32
    %74 = vector.broadcast %cst_32 : f32 to vector<256x8xf32>
    %75 = arith.mulf %74, %71 : vector<256x8xf32>
    %76 = arith.select %73, %71, %75 : vector<256x8xi1>, vector<256x8xf32>
    %77 = vector.extract_strided_slice %55 {offsets = [0, 8], sizes = [256, 8], strides = [1, 1]} : vector<256x16xbf16> to vector<256x8xbf16>
    %78 = arith.extf %77 : vector<256x8xbf16> to vector<256x8xf32>
    %c0_33 = arith.constant 0 : index
    %c0_34 = arith.constant 0 : index
    %79 = vector.load %arg10[%c0_33, %c0_34] : memref<2x8xf32, #tpu.memory_space<vmem>>, vector<1x8xf32>
    %80 = vector.shape_cast %79 : vector<1x8xf32> to vector<8xf32>
    %81 = vector.shape_cast %80 : vector<8xf32> to vector<1x8xf32>
    %82 = vector.broadcast %81 : vector<1x8xf32> to vector<256x8xf32>
    %83 = arith.mulf %78, %82 : vector<256x8xf32>
    %c1_35 = arith.constant 1 : index
    %c0_36 = arith.constant 0 : index
    %84 = vector.load %arg10[%c1_35, %c0_36] : memref<2x8xf32, #tpu.memory_space<vmem>>, vector<1x8xf32>
    %85 = vector.shape_cast %84 : vector<1x8xf32> to vector<8xf32>
    %86 = vector.shape_cast %85 : vector<8xf32> to vector<1x8xf32>
    %87 = vector.broadcast %86 : vector<1x8xf32> to vector<256x8xf32>
    %88 = arith.addf %83, %87 : vector<256x8xf32>
    %cst_37 = arith.constant 0.000000e+00 : f32
    %89 = vector.broadcast %cst_37 : f32 to vector<256x8xf32>
    %90 = arith.cmpf oge, %88, %89 : vector<256x8xf32>
    %cst_38 = arith.constant 1.000000e-01 : f32
    %91 = vector.broadcast %cst_38 : f32 to vector<256x8xf32>
    %92 = arith.mulf %91, %88 : vector<256x8xf32>
    %93 = arith.select %90, %88, %92 : vector<256x8xi1>, vector<256x8xf32>
    %94 = arith.truncf %76 : vector<256x8xf32> to vector<256x8xbf16>
    %c0_39 = arith.constant 0 : index
    %c0_40 = arith.constant 0 : index
    %95 = vector.load %arg11[%c0_39, %c0_40] : memref<16x16xbf16, #tpu.memory_space<vmem>>, vector<8x16xbf16>
    %cst_41 = arith.constant dense<0.000000e+00> : vector<256x16xf32>
    %96 = tpu.matmul %94, %95, %cst_41 {dimension_numbers = #tpu.dot_dimension_numbers<[1], [0], [0], [1], [0, 0, 1, 1], [], []>} : vector<256x8xbf16>, vector<8x16xbf16>, vector<256x16xf32> -> vector<256x16xf32>
    %97 = arith.truncf %93 : vector<256x8xf32> to vector<256x8xbf16>
    %c8 = arith.constant 8 : index
    %c0_42 = arith.constant 0 : index
    %98 = vector.load %arg11[%c8, %c0_42] : memref<16x16xbf16, #tpu.memory_space<vmem>>, vector<8x16xbf16>
    %cst_43 = arith.constant dense<0.000000e+00> : vector<256x16xf32>
    %99 = tpu.matmul %97, %98, %cst_43 {dimension_numbers = #tpu.dot_dimension_numbers<[1], [0], [0], [1], [0, 0, 1, 1], [], []>} : vector<256x8xbf16>, vector<8x16xbf16>, vector<256x16xf32> -> vector<256x16xf32>
    %100 = arith.addf %96, %99 : vector<256x16xf32>
    %c0_44 = arith.constant 0 : index
    %c0_45 = arith.constant 0 : index
    %101 = vector.load %arg12[%c0_44, %c0_45] : memref<2x16xf32, #tpu.memory_space<vmem>>, vector<1x16xf32>
    %102 = vector.shape_cast %101 : vector<1x16xf32> to vector<16xf32>
    %103 = vector.shape_cast %102 : vector<16xf32> to vector<1x16xf32>
    %104 = vector.broadcast %103 : vector<1x16xf32> to vector<256x16xf32>
    %105 = arith.mulf %100, %104 : vector<256x16xf32>
    %c1_46 = arith.constant 1 : index
    %c0_47 = arith.constant 0 : index
    %106 = vector.load %arg12[%c1_46, %c0_47] : memref<2x16xf32, #tpu.memory_space<vmem>>, vector<1x16xf32>
    %107 = vector.shape_cast %106 : vector<1x16xf32> to vector<16xf32>
    %108 = vector.shape_cast %107 : vector<16xf32> to vector<1x16xf32>
    %109 = vector.broadcast %108 : vector<1x16xf32> to vector<256x16xf32>
    %110 = arith.addf %105, %109 : vector<256x16xf32>
    %111 = arith.negf %110 : vector<256x16xf32>
    %112 = math.exp %111 : vector<256x16xf32>
    %cst_48 = arith.constant 1.000000e+00 : f32
    %113 = vector.broadcast %cst_48 : f32 to vector<256x16xf32>
    %114 = arith.addf %113, %112 : vector<256x16xf32>
    %115 = arith.divf %113, %114 : vector<256x16xf32>
    %116 = arith.mulf %110, %115 : vector<256x16xf32>
    %117 = vector.shape_cast %116 : vector<256x16xf32> to vector<16x16x16xf32>
    %118 = arith.truncf %117 : vector<16x16x16xf32> to vector<16x16x16xbf16>
    %c0_49 = arith.constant 0 : index
    %c0_50 = arith.constant 0 : index
    %c0_51 = arith.constant 0 : index
    %c0_52 = arith.constant 0 : index
    %119 = vector.load %arg13[%c0_49, %c0_50, %c0_51, %c0_52] : memref<1x16x16x16xbf16, #tpu.memory_space<vmem>>, vector<1x16x16x16xbf16>
    %120 = vector.shape_cast %119 : vector<1x16x16x16xbf16> to vector<16x16x16xbf16>
    %121 = vector.shape_cast %118 : vector<16x16x16xbf16> to vector<1x16x16x16xbf16>
    tpu.vector_store %arg13[%c0_49, %c0_50, %c0_51, %c0_52], %121 {strides = array<i32>} : memref<1x16x16x16xbf16, #tpu.memory_space<vmem>>, vector<1x16x16x16xbf16>,
    return
  }
  func.func @transform_0(%arg0: i32, %arg1: i32) -> (i32, i32, i32, i32) {
    %c0_i32 = arith.constant 0 : i32
    %c0_i32_0 = arith.constant 0 : i32
    %c0_i32_1 = arith.constant 0 : i32
    return %arg0, %arg1, %c0_i32, %c0_i32_0 : i32, i32, i32, i32
  }
  func.func @transform_1(%arg0: i32, %arg1: i32) -> (i32, i32, i32, i32) {
    %c16_i32 = arith.constant 16 : i32
    %0 = arith.muli %arg1, %c16_i32 : i32
    %c1_i32 = arith.constant 1 : i32
    %1 = arith.subi %0, %c1_i32 : i32
    %c0_i32 = arith.constant 0 : i32
    %2 = arith.maxsi %1, %c0_i32 : i32
    %c0_i32_0 = arith.constant 0 : i32
    %c0_i32_1 = arith.constant 0 : i32
    %c0_i32_2 = arith.constant 0 : i32
    return %arg0, %2, %c0_i32_0, %c0_i32_1 : i32, i32, i32, i32
  }
  func.func @transform_2(%arg0: i32, %arg1: i32) -> (i32, i32, i32, i32) {
    %c16_i32 = arith.constant 16 : i32
    %0 = arith.muli %arg1, %c16_i32 : i32
    %c16_i32_0 = arith.constant 16 : i32
    %1 = arith.addi %0, %c16_i32_0 : i32
    %c15_i32 = arith.constant 15 : i32
    %2 = arith.minsi %1, %c15_i32 : i32
    %c0_i32 = arith.constant 0 : i32
    %c0_i32_1 = arith.constant 0 : i32
    %c0_i32_2 = arith.constant 0 : i32
    return %arg0, %2, %c0_i32, %c0_i32_1 : i32, i32, i32, i32
  }
  func.func @transform_3(%arg0: i32, %arg1: i32) -> (i32, i32, i32, i32) {
    %c0_i32 = arith.constant 0 : i32
    %c0_i32_0 = arith.constant 0 : i32
    %c0_i32_1 = arith.constant 0 : i32
    return %arg0, %arg1, %c0_i32, %c0_i32_0 : i32, i32, i32, i32
  }
  func.func @transform_4(%arg0: i32, %arg1: i32) -> (i32, i32) {
    %c0_i32 = arith.constant 0 : i32
    %c0_i32_0 = arith.constant 0 : i32
    %c0_i32_1 = arith.constant 0 : i32
    return %c0_i32, %c0_i32_0 : i32, i32
  }
  func.func @transform_5(%arg0: i32, %arg1: i32) -> (i32, i32) {
    %c0_i32 = arith.constant 0 : i32
    %c0_i32_0 = arith.constant 0 : i32
    %c0_i32_1 = arith.constant 0 : i32
    return %c0_i32, %c0_i32_0 : i32, i32
  }
  func.func @transform_6(%arg0: i32, %arg1: i32) -> (i32, i32) {
    %c0_i32 = arith.constant 0 : i32
    %c0_i32_0 = arith.constant 0 : i32
    %c0_i32_1 = arith.constant 0 : i32
    return %c0_i32, %c0_i32_0 : i32, i32
  }
  func.func @transform_7(%arg0: i32, %arg1: i32) -> (i32, i32) {
    %c0_i32 = arith.constant 0 : i32
    %c0_i32_0 = arith.constant 0 : i32
    %c0_i32_1 = arith.constant 0 : i32
    return %c0_i32, %c0_i32_0 : i32, i32
  }
  func.func @transform_8(%arg0: i32, %arg1: i32) -> (i32, i32) {
    %c0_i32 = arith.constant 0 : i32
    %c0_i32_0 = arith.constant 0 : i32
    %c0_i32_1 = arith.constant 0 : i32
    return %c0_i32, %c0_i32_0 : i32, i32
  }
  func.func @transform_9(%arg0: i32, %arg1: i32) -> (i32, i32) {
    %c0_i32 = arith.constant 0 : i32
    %c0_i32_0 = arith.constant 0 : i32
    %c0_i32_1 = arith.constant 0 : i32
    return %c0_i32, %c0_i32_0 : i32, i32
  }
  func.func @transform_10(%arg0: i32, %arg1: i32) -> (i32, i32) {
    %c0_i32 = arith.constant 0 : i32
    %c0_i32_0 = arith.constant 0 : i32
    %c0_i32_1 = arith.constant 0 : i32
    return %c0_i32, %c0_i32_0 : i32, i32
  }
  func.func @transform_11(%arg0: i32, %arg1: i32) -> (i32, i32, i32, i32) {
    %c0_i32 = arith.constant 0 : i32
    %c0_i32_0 = arith.constant 0 : i32
    %c0_i32_1 = arith.constant 0 : i32
    return %arg0, %arg1, %c0_i32, %c0_i32_0 : i32, i32, i32, i32
  }
}

</mosaic_0001>

<llo_original>
// kernel: bottleneck_csp_forward.2
$region0: #{bottleneck_csp_forward.2}
  #allocation0 [shape = 'u32[]', space=smem, size = 0x4, offset = 0x4, fixed_abs, tag = 'smem constant byte address 0x4 - core index']
  #allocation1 [shape = 'u32[144,128]{1,0:T(1,128)}', space=vmem, size = 0x12000, scoped, tag = 'internal scratch']
  %s0 = inlined_call_operand.vmem [shape: bf16[512,16], index: 0, kind: input, shape index: {}]
  %s1 = inlined_call_operand.vmem [shape: bf16[16,8], index: 1, kind: input, shape index: {}]
  %s2 = inlined_call_operand.vmem [shape: f32[2,8], index: 2, kind: input, shape index: {}]
  %s3 = inlined_call_operand.vmem [shape: bf16[8,8], index: 3, kind: input, shape index: {}]
  %s4 = inlined_call_operand.vmem [shape: f32[2,8], index: 4, kind: input, shape index: {}]
  %s5 = inlined_call_operand.vmem [shape: bf16[16,8], index: 5, kind: input, shape index: {}]
  %s6 = inlined_call_operand.vmem [shape: bf16[512,8], index: 6, kind: output, shape index: {0}]
  %s7 = inlined_call_operand.vmem [shape: bf16[512,16], index: 7, kind: output, shape index: {1}]
  %8 = xla_tuple %s6, %s7
  %s9 = sld [smem:[#allocation0]]
  $region65: #{bottleneck_csp_forward.2} parent=0
    _
  %s11 = ssub.s32 1, %s9
  %s12 = scalar_select 0, %s11, %s9
  loop: start=0, step=1, limit=4
  $region2: #{bottleneck_csp_forward.2} parent=0 // loop_pre_header
    _
  $region3: #{bottleneck_csp_forward.2} parent=0 // loop_header
    %s14 = sphi 0, %s18
    %p15 = scmp.ge.s32.totalorder %s14, 4
    %s24 = sphi 0, %s26
    %s27 = sphi 0, %s24
    %s28 = sphi 0, %s27
    %s44 = sphi 0, %s28
    %s48 = sphi 0, %s48
    %s50 = sphi 0, %s48
    %s51 = sphi 0, %s50
    %s65 = sphi 0, %s51
    %s69 = sphi 0, %s69
    %s71 = sphi 0, %s69
    %s72 = sphi 0, %s71
    %s86 = sphi 0, %s72
    %s90 = sphi 0, %s90
    %s92 = sphi 0, %s90
    %s93 = sphi 0, %s92
    %s107 = sphi 0, %s93
    %s111 = sphi 0, %s111
    %s113 = sphi 0, %s111
    %s114 = sphi 0, %s113
    %s128 = sphi 0, %s114
    %s132 = sphi 0, %s132
    %s134 = sphi 0, %s132
    %s135 = sphi 0, %s134
    %s149 = sphi 0, %s135
    %s155 = sphi 0, %s157
    %s158 = sphi 0, %s155
    %s159 = sphi 0, %s158
    %s175 = sphi 0, %s159
    %s181 = sphi 0, %s183
    %s184 = sphi 0, %s181
    %s185 = sphi 0, %s184
    %s201 = sphi 0, %s185
  $region4: #{bottleneck_csp_forward.2} parent=0 // loop_header_branch
    %17 = sbr.rel (%p15) target = $region8
  $region5: #{bottleneck_csp_forward.2} parent=0 // loop_body
    %s19 = ssub.s32 %s14, 1
    %s20 = ssub.s32 %s14, 2
    %s21 = sadd.s32 %s14, 1
    %s22 = ssub.s32 %s14, %s21
    %p23 = scmp.eq.s32.totalorder %s22, 0
    %s25 = sadd.s32 %s24, 1
    %s26 = scalar_select %p23, %s24, %s25
    %p29 = pneg %p23
    %p30 = scmp.eq.s32.totalorder %s14, 1
    %p31 = por %p29, %p30
    %p32 = scmp.ne.s32.totalorder %s24, %s27
    %p33 = scmp.eq.s32.totalorder %s14, 0
    %p34 = por %p32, %p33
    %p35 = scmp.ne.s32.totalorder %s24, %s27
    %p36 = scmp.eq.s32.totalorder %s19, 1
    %p37 = por %p35, %p36
    %p38 = scmp.ne.s32.totalorder %s27, %s28
    %p39 = scmp.eq.s32.totalorder %s19, 0
    %p40 = por %p38, %p39
    %p41 = scmp.ne.s32.totalorder %s27, %s28
    %p42 = scmp.eq.s32.totalorder %s20, 1
    %p43 = por %p41, %p42
    %p45 = scmp.ne.s32.totalorder %s28, %s44
    %p46 = scmp.eq.s32.totalorder %s20, 0
    %p47 = por %p45, %p46
    %s49 = sadd.s32 %s48, 1
    %p52 = scmp.eq.s32.totalorder %s14, 1
    %p53 = scmp.ne.s32.totalorder %s48, %s50
    %p54 = scmp.eq.s32.totalorder %s14, 0
    %p55 = por %p53, %p54
    %p56 = scmp.ne.s32.totalorder %s48, %s50
    %p57 = scmp.eq.s32.totalorder %s19, 1
    %p58 = por %p56, %p57
    %p59 = scmp.ne.s32.totalorder %s50, %s51
    %p60 = scmp.eq.s32.totalorder %s19, 0
    %p61 = por %p59, %p60
    %p62 = scmp.ne.s32.totalorder %s50, %s51
    %p63 = scmp.eq.s32.totalorder %s20, 1
    %p64 = por %p62, %p63
    %p66 = scmp.ne.s32.totalorder %s51, %s65
    %p67 = scmp.eq.s32.totalorder %s20, 0
    %p68 = por %p66, %p67
    %s70 = sadd.s32 %s69, 1
    %p73 = scmp.eq.s32.totalorder %s14, 1
    %p74 = scmp.ne.s32.totalorder %s69, %s71
    %p75 = scmp.eq.s32.totalorder %s14, 0
    %p76 = por %p74, %p75
    %p77 = scmp.ne.s32.totalorder %s69, %s71
    %p78 = scmp.eq.s32.totalorder %s19, 1
    %p79 = por %p77, %p78
    %p80 = scmp.ne.s32.totalorder %s71, %s72
    %p81 = scmp.eq.s32.totalorder %s19, 0
    %p82 = por %p80, %p81
    %p83 = scmp.ne.s32.totalorder %s71, %s72
    %p84 = scmp.eq.s32.totalorder %s20, 1
    %p85 = por %p83, %p84
    %p87 = scmp.ne.s32.totalorder %s72, %s86
    %p88 = scmp.eq.s32.totalorder %s20, 0
    %p89 = por %p87, %p88
    %s91 = sadd.s32 %s90, 1
    %p94 = scmp.eq.s32.totalorder %s14, 1
    %p95 = scmp.ne.s32.totalorder %s90, %s92
    %p96 = scmp.eq.s32.totalorder %s14, 0
    %p97 = por %p95, %p96
    %p98 = scmp.ne.s32.totalorder %s90, %s92
    %p99 = scmp.eq.s32.totalorder %s19, 1
    %p100 = por %p98, %p99
    %p101 = scmp.ne.s32.totalorder %s92, %s93
    %p102 = scmp.eq.s32.totalorder %s19, 0
    %p103 = por %p101, %p102
    %p104 = scmp.ne.s32.totalorder %s92, %s93
    %p105 = scmp.eq.s32.totalorder %s20, 1
    %p106 = por %p104, %p105
    %p108 = scmp.ne.s32.totalorder %s93, %s107
    %p109 = scmp.eq.s32.totalorder %s20, 0
    %p110 = por %p108, %p109
    %s112 = sadd.s32 %s111, 1
    %p115 = scmp.eq.s32.totalorder %s14, 1
    %p116 = scmp.ne.s32.totalorder %s111, %s113
    %p117 = scmp.eq.s32.totalorder %s14, 0
    %p118 = por %p116, %p117
    %p119 = scmp.ne.s32.totalorder %s111, %s113
    %p120 = scmp.eq.s32.totalorder %s19, 1
    %p121 = por %p119, %p120
    %p122 = scmp.ne.s32.totalorder %s113, %s114
    %p123 = scmp.eq.s32.totalorder %s19, 0
    %p124 = por %p122, %p123
    %p125 = scmp.ne.s32.totalorder %s113, %s114
    %p126 = scmp.eq.s32.totalorder %s20, 1
    %p127 = por %p125, %p126
    %p129 = scmp.ne.s32.totalorder %s114, %s128
    %p130 = scmp.eq.s32.totalorder %s20, 0
    %p131 = por %p129, %p130
    %s133 = sadd.s32 %s132, 1
    %p136 = scmp.eq.s32.totalorder %s14, 1
    %p137 = scmp.ne.s32.totalorder %s132, %s134
    %p138 = scmp.eq.s32.totalorder %s14, 0
    %p139 = por %p137, %p138
    %p140 = scmp.ne.s32.totalorder %s132, %s134
    %p141 = scmp.eq.s32.totalorder %s19, 1
    %p142 = por %p140, %p141
    %p143 = scmp.ne.s32.totalorder %s134, %s135
    %p144 = scmp.eq.s32.totalorder %s19, 0
    %p145 = por %p143, %p144
    %p146 = scmp.ne.s32.totalorder %s134, %s135
    %p147 = scmp.eq.s32.totalorder %s20, 1
    %p148 = por %p146, %p147
    %p150 = scmp.ne.s32.totalorder %s135, %s149
    %p151 = scmp.eq.s32.totalorder %s20, 0
    %p152 = por %p150, %p151
    %s153 = ssub.s32 %s14, %s21
    %p154 = scmp.eq.s32.totalorder %s153, 0
    %s156 = sadd.s32 %s155, 1
    %s157 = scalar_select %p154, %s155, %s156
    %p160 = pneg %p154
    %p161 = scmp.eq.s32.totalorder %s14, 1
    %p162 = por %p160, %p161
    %p163 = scmp.ne.s32.totalorder %s155, %s158
    %p164 = scmp.eq.s32.totalorder %s14, 0
    %p165 = por %p163, %p164
    %p166 = scmp.ne.s32.totalorder %s155, %s158
    %p167 = scmp.eq.s32.totalorder %s19, 1
    %p168 = por %p166, %p167
    %p169 = scmp.ne.s32.totalorder %s158, %s159
    %p170 = scmp.eq.s32.totalorder %s19, 0
    %p171 = por %p169, %p170
    %p172 = scmp.ne.s32.totalorder %s158, %s159
    %p173 = scmp.eq.s32.totalorder %s20, 1
    %p174 = por %p172, %p173
    %p176 = scmp.ne.s32.totalorder %s159, %s175
    %p177 = scmp.eq.s32.totalorder %s20, 0
    %p178 = por %p176, %p177
    %s179 = ssub.s32 %s14, %s21
    %p180 = scmp.eq.s32.totalorder %s179, 0
    %s182 = sadd.s32 %s181, 1
    %s183 = scalar_select %p180, %s181, %s182
    %p186 = pneg %p180
    %p187 = scmp.eq.s32.totalorder %s14, 1
    %p188 = por %p186, %p187
    %p189 = scmp.ne.s32.totalorder %s181, %s184
    %p190 = scmp.eq.s32.totalorder %s14, 0
    %p191 = por %p189, %p190
    %p192 = scmp.ne.s32.totalorder %s181, %s184
    %p193 = scmp.eq.s32.totalorder %s19, 1
    %p194 = por %p192, %p193
    %p195 = scmp.ne.s32.totalorder %s184, %s185
    %p196 = scmp.eq.s32.totalorder %s19, 0
    %p197 = por %p195, %p196
    %p198 = scmp.ne.s32.totalorder %s184, %s185
    %p199 = scmp.eq.s32.totalorder %s20, 1
    %p200 = por %p198, %p199
    %p202 = scmp.ne.s32.totalorder %s185, %s201
    %p203 = scmp.eq.s32.totalorder %s20, 0
    %p204 = por %p202, %p203
    %p205 = scmp.le.s32.totalorder 1, %s14
    %p206 = scmp.lt.s32.totalorder %s14, 3
    %p207 = pnand %p205, %p206
    %p208 = pneg %p207
    // Predicated region
    $region9: #{bottleneck_csp_forward.2} parent=5 // pred_check
      _
    $region10: #{bottleneck_csp_forward.2} parent=5 // pred_check_branch
      %210 = sbr.rel (%p207) target = $region12
    $region11: #{bottleneck_csp_forward.2} parent=5 // pred_region
      %s211 = ssub.s32 %s14, 1
      // Predicated region
      $region13: #{bottleneck_csp_forward.2} parent=11 // pred_check
        %p212 = pneg %p61
      $region14: #{bottleneck_csp_forward.2} parent=11 // pred_check_branch
        %214 = sbr.rel (%p212) target = $region16
      $region15: #{bottleneck_csp_forward.2} parent=11 // pred_region
        _
      $region16: #{bottleneck_csp_forward.2} parent=11 // pred_fallthru
        _
      // Predicated region
      $region17: #{bottleneck_csp_forward.2} parent=11 // pred_check
        %p215 = pneg %p82
      $region18: #{bottleneck_csp_forward.2} parent=11 // pred_check_branch
        %217 = sbr.rel (%p215) target = $region20
      $region19: #{bottleneck_csp_forward.2} parent=11 // pred_region
        _
      $region20: #{bottleneck_csp_forward.2} parent=11 // pred_fallthru
        _
      // Predicated region
      $region21: #{bottleneck_csp_forward.2} parent=11 // pred_check
        %p218 = pneg %p103
      $region22: #{bottleneck_csp_forward.2} parent=11 // pred_check_branch
        %220 = sbr.rel (%p218) target = $region24
      $region23: #{bottleneck_csp_forward.2} parent=11 // pred_region
        _
      $region24: #{bottleneck_csp_forward.2} parent=11 // pred_fallthru
        _
      // Predicated region
      $region25: #{bottleneck_csp_forward.2} parent=11 // pred_check
        %p221 = pneg %p124
      $region26: #{bottleneck_csp_forward.2} parent=11 // pred_check_branch
        %223 = sbr.rel (%p221) target = $region28
      $region27: #{bottleneck_csp_forward.2} parent=11 // pred_region
        _
      $region28: #{bottleneck_csp_forward.2} parent=11 // pred_fallthru
        _
      // Predicated region
      $region29: #{bottleneck_csp_forward.2} parent=11 // pred_check
        %p224 = pneg %p145
      $region30: #{bottleneck_csp_forward.2} parent=11 // pred_check_branch
        %226 = sbr.rel (%p224) target = $region32
      $region31: #{bottleneck_csp_forward.2} parent=11 // pred_region
        _
      $region32: #{bottleneck_csp_forward.2} parent=11 // pred_fallthru
        _
    $region12: #{bottleneck_csp_forward.2} parent=5 // pred_fallthru
      _
    %p227 = scmp.lt.s32.totalorder %s14, 2
    // Predicated region
    $region33: #{bottleneck_csp_forward.2} parent=5 // pred_check
      %p228 = pneg %p227
    $region34: #{bottleneck_csp_forward.2} parent=5 // pred_check_branch
      %230 = sbr.rel (%p228) target = $region36
    $region35: #{bottleneck_csp_forward.2} parent=5 // pred_region
      // Predicated region
      $region37: #{bottleneck_csp_forward.2} parent=35 // pred_check
        %p231 = pneg %p34
      $region38: #{bottleneck_csp_forward.2} parent=35 // pred_check_branch
        %233 = sbr.rel (%p231) target = $region40
      $region39: #{bottleneck_csp_forward.2} parent=35 // pred_region
        %s234 = smul.u32 32, %s14
        %p235 = scmp.lt.s32.totalorder %s234, 63
        %s236 = scalar_select %p235, %s234, 63
        %s237 = smul.addr %s236, 4
        %s238 = scalar_lea.vmem %s0, %s237
        %s239 = smul.u32 32, %s14
      $region40: #{bottleneck_csp_forward.2} parent=35 // pred_fallthru
        _
    $region36: #{bottleneck_csp_forward.2} parent=5 // pred_fallthru
      _
    %p240 = scmp.le.s32.totalorder 1, %s14
    %p241 = scmp.lt.s32.totalorder %s14, 3
    %p242 = pnand %p240, %p241
    %p243 = pneg %p242
    // Predicated region
    $region41: #{bottleneck_csp_forward.2} parent=5 // pred_check
      _
    $region42: #{bottleneck_csp_forward.2} parent=5 // pred_check_branch
      %245 = sbr.rel (%p242) target = $region44
    $region43: #{bottleneck_csp_forward.2} parent=5 // pred_region
      %s246 = ssub.s32 %s14, 1
      %s247 = smul.u32 32, %s19
      %p248 = scmp.lt.s32.totalorder %s247, 63
      %s249 = scalar_select %p248, %s247, 63
      %s250 = smul.addr %s249, 4
      %s251 = scalar_lea.vmem %s0, %s250
      %p252 = pneg %p40
      %p253 = pneg %p37
      %p254 = pneg %p61
      %p255 = pneg %p58
      %p256 = pneg %p82
      %p257 = pneg %p79
      %p258 = pneg %p103
      %p259 = pneg %p100
      %p260 = pneg %p124
      %p261 = pneg %p121
      %p262 = pneg %p145
      %p263 = pneg %p142
      %p264 = pneg %p171
      %p265 = pneg %p168
      %s266 = smul.u32 32, %s19
      %p267 = scmp.lt.s32.totalorder %s266, 63
      %s268 = scalar_select %p267, %s266, 63
      %s269 = smul.addr %s268, 4
      %s270 = scalar_lea.vmem %s6, %s269
      %p271 = pneg %p197
      %p272 = pneg %p194
      %s273 = smul.u32 32, %s19
      %p274 = scmp.lt.s32.totalorder %s273, 63
      %s275 = scalar_select %p274, %s273, 63
      %s276 = smul.addr %s275, 4
      %s277 = scalar_lea.vmem %s7, %s276
      %s278 = smul.u32 32, %s19
      %p279 = scmp.lt.s32.totalorder %s278, 63
      %s280 = scalar_select %p279, %s278, 63
      %s281 = smul.addr %s280, 4
      %s282 = scalar_lea.vmem %s0, %s281
      %s283 = smul.u32 32, %s19
      %s284 = smul.u32 32, %s19
      %p285 = scmp.lt.s32.totalorder %s284, 63
      %s286 = scalar_select %p285, %s284, 63
      %s287 = smul.addr %s286, 4
      %s288 = scalar_lea.vmem %s6, %s287
      %s289 = smul.u32 32, %s19
      %s290 = smul.u32 32, %s19
      %p291 = scmp.lt.s32.totalorder %s290, 63
      %s292 = scalar_select %p291, %s290, 63
      %s293 = smul.addr %s292, 4
      %s294 = scalar_lea.vmem %s7, %s293
      %s295 = smul.u32 32, %s19
      %v297 = vld [vmem:[%s282] sm:$0xf]
      %v298 = vld [vmem:[%s282 + $0x4] sm:$0xf]
      %v299 = vld [vmem:[%s282 + $0x8] sm:$0xf]
      %v300 = vld [vmem:[%s282 + $0xc] sm:$0xf]
      %v301 = vld [vmem:[%s282 + $0x10] sm:$0xf]
      %v302 = vld [vmem:[%s282 + $0x14] sm:$0xf]
      %v303 = vld [vmem:[%s282 + $0x18] sm:$0xf]
      %v304 = vld [vmem:[%s282 + $0x1c] sm:$0xf]
      %v305 = vld [vmem:[%s282 + $0x20] sm:$0xf]
      %v306 = vld [vmem:[%s282 + $0x24] sm:$0xf]
      %v307 = vld [vmem:[%s282 + $0x28] sm:$0xf]
      %v308 = vld [vmem:[%s282 + $0x2c] sm:$0xf]
      %v309 = vld [vmem:[%s282 + $0x30] sm:$0xf]
      %v310 = vld [vmem:[%s282 + $0x34] sm:$0xf]
      %v311 = vld [vmem:[%s282 + $0x38] sm:$0xf]
      %v312 = vld [vmem:[%s282 + $0x3c] sm:$0xf]
      %v313 = vld [vmem:[%s282 + $0x40] sm:$0xf]
      %v314 = vld [vmem:[%s282 + $0x44] sm:$0xf]
      %v315 = vld [vmem:[%s282 + $0x48] sm:$0xf]
      %v316 = vld [vmem:[%s282 + $0x4c] sm:$0xf]
      %v317 = vld [vmem:[%s282 + $0x50] sm:$0xf]
      %v318 = vld [vmem:[%s282 + $0x54] sm:$0xf]
      %v319 = vld [vmem:[%s282 + $0x58] sm:$0xf]
      %v320 = vld [vmem:[%s282 + $0x5c] sm:$0xf]
      %v321 = vld [vmem:[%s282 + $0x60] sm:$0xf]
      %v322 = vld [vmem:[%s282 + $0x64] sm:$0xf]
      %v323 = vld [vmem:[%s282 + $0x68] sm:$0xf]
      %v324 = vld [vmem:[%s282 + $0x6c] sm:$0xf]
      %v325 = vld [vmem:[%s282 + $0x70] sm:$0xf]
      %v326 = vld [vmem:[%s282 + $0x74] sm:$0xf]
      %v327 = vld [vmem:[%s282 + $0x78] sm:$0xf]
      %v328 = vld [vmem:[%s282 + $0x7c] sm:$0xf]
      %v329 = vld [vmem:[%s1] sm:$0xf]
      %v330 = vld [vmem:[%s1 + $0x4] sm:$0xf]
      %v363 = vunpack.c.l.b16 %v297
      %v364 = vunpack.c.l.b16 %v298
      %v365 = vunpack.c.l.b16 %v299
      %v366 = vunpack.c.l.b16 %v300
      %v367 = vunpack.c.l.b16 %v301
      %v368 = vunpack.c.l.b16 %v302
      %v369 = vunpack.c.l.b16 %v303
      %v370 = vunpack.c.l.b16 %v304
      %v371 = vunpack.c.l.b16 %v305
      %v372 = vunpack.c.l.b16 %v306
      %v373 = vunpack.c.l.b16 %v307
      %v374 = vunpack.c.l.b16 %v308
      %v375 = vunpack.c.l.b16 %v309
      %v376 = vunpack.c.l.b16 %v310
      %v377 = vunpack.c.l.b16 %v311
      %v378 = vunpack.c.l.b16 %v312
      %v379 = vunpack.c.l.b16 %v313
      %v380 = vunpack.c.l.b16 %v314
      %v381 = vunpack.c.l.b16 %v315
      %v382 = vunpack.c.l.b16 %v316
      %v383 = vunpack.c.l.b16 %v317
      %v384 = vunpack.c.l.b16 %v318
      %v385 = vunpack.c.l.b16 %v319
      %v386 = vunpack.c.l.b16 %v320
      %v387 = vunpack.c.l.b16 %v321
      %v388 = vunpack.c.l.b16 %v322
      %v389 = vunpack.c.l.b16 %v323
      %v390 = vunpack.c.l.b16 %v324
      %v391 = vunpack.c.l.b16 %v325
      %v392 = vunpack.c.l.b16 %v326
      %v393 = vunpack.c.l.b16 %v327
      %v394 = vunpack.c.l.b16 %v328
      %v395 = vpack.c.b16 %v364, %v363
      %v396 = vpack.c.b16 %v366, %v365
      %v397 = vpack.c.b16 %v368, %v367
      %v398 = vpack.c.b16 %v370, %v369
      %v399 = vpack.c.b16 %v372, %v371
      %v400 = vpack.c.b16 %v374, %v373
      %v401 = vpack.c.b16 %v376, %v375
      %v402 = vpack.c.b16 %v378, %v377
      %v403 = vpack.c.b16 %v380, %v379
      %v404 = vpack.c.b16 %v382, %v381
      %v405 = vpack.c.b16 %v384, %v383
      %v406 = vpack.c.b16 %v386, %v385
      %v407 = vpack.c.b16 %v388, %v387
      %v408 = vpack.c.b16 %v390, %v389
      %v409 = vpack.c.b16 %v392, %v391
      %v410 = vpack.c.b16 %v394, %v393
      %v413 = vunpack.c.l.b16 %v329
      %v414 = vunpack.c.l.b16 %v330
      %v415 = vpack.c.b16 %v414, %v413
      %vm417 = vcmask 130048
      %v419 = vsel %vm417, %v395, 0
      %v422 = vsel %vm417, %v396, 0
      %v425 = vsel %vm417, %v397, 0
      %v428 = vsel %vm417, %v398, 0
      %v431 = vsel %vm417, %v399, 0
      %v434 = vsel %vm417, %v400, 0
      %v437 = vsel %vm417, %v401, 0
      %v440 = vsel %vm417, %v402, 0
      %v443 = vsel %vm417, %v403, 0
      %v446 = vsel %vm417, %v404, 0
      %v449 = vsel %vm417, %v405, 0
      %v452 = vsel %vm417, %v406, 0
      %v455 = vsel %vm417, %v407, 0
      %v458 = vsel %vm417, %v408, 0
      %v461 = vsel %vm417, %v409, 0
      %v464 = vsel %vm417, %v410, 0
      %466 = vmatprep.subr.bf16.mxu0 0
      %467 = vmatpush1.bf16.msra.mxu0 %v415
      %468 = vmatprep.subr.bf16.mxu0 0
      %469 = vmatpush1.bf16.msra.mxu0 0
      %470 = vmatprep.subr.bf16.mxu0 0
      %471 = vmatpush1.bf16.msra.mxu0 0
      %472 = vmatprep.subr.bf16.mxu0 0
      %473 = vmatpush1.bf16.msra.mxu0 0
      %474 = vmatprep.subr.bf16.mxu0 0
      %475 = vmatpush1.bf16.msra.mxu0 0
      %476 = vmatprep.subr.bf16.mxu0 0
      %477 = vmatpush1.bf16.msra.mxu0 0
      %478 = vmatprep.subr.bf16.mxu0 0
      %479 = vmatpush1.bf16.msra.mxu0 0
      %480 = vmatprep.subr.bf16.mxu0 0
      %481 = vmatpush1.bf16.msra.mxu0 0
      %482 = vmatprep.subr.bf16.mxu0 0
      %483 = vmatpush1.bf16.msra.mxu0 0
      %484 = vmatprep.subr.bf16.mxu0 0
      %485 = vmatpush1.bf16.msra.mxu0 0
      %486 = vmatprep.subr.bf16.mxu0 0
      %487 = vmatpush1.bf16.msra.mxu0 0
      %488 = vmatprep.subr.bf16.mxu0 0
      %489 = vmatpush1.bf16.msra.mxu0 0
      %490 = vmatprep.subr.bf16.mxu0 0
      %491 = vmatpush1.bf16.msra.mxu0 0
      %492 = vmatprep.subr.bf16.mxu0 0
      %493 = vmatpush1.bf16.msra.mxu0 0
      %494 = vmatprep.subr.bf16.mxu0 0
      %495 = vmatpush1.bf16.msra.mxu0 0
      %496 = vmatprep.subr.bf16.mxu0 0
      %497 = vmatpush1.bf16.msra.mxu0 0
      %498 = vmatprep.mubr.bf16.mxu0 0
      %499 = vmatmul.mubr.bf16.gmra.mrb[0].mxu0 %v419
      %v500 = vpop.f32.mrb[0].mxu0
      %v501 = vadd.f32 0.0, %v500
      %v502 = vpop.f32.mrb[0].mxu0
      %v503 = vpop.f32.mrb[0].mxu0
      %v504 = vadd.f32 0.0, %v503
      %v505 = vpop.f32.mrb[0].mxu0
      %506 = vmatprep.mubr.bf16.mxu0 0
      %507 = vmatmul.mubr.bf16.gmra.mrb[0].mxu0 %v422
      %v508 = vpop.f32.mrb[0].mxu0
      %v509 = vadd.f32 0.0, %v508
      %v510 = vpop.f32.mrb[0].mxu0
      %v511 = vpop.f32.mrb[0].mxu0
      %v512 = vadd.f32 0.0, %v511
      %v513 = vpop.f32.mrb[0].mxu0
      %514 = vmatprep.mubr.bf16.mxu0 0
      %515 = vmatmul.mubr.bf16.gmra.mrb[0].mxu0 %v425
      %v516 = vpop.f32.mrb[0].mxu0
      %v517 = vadd.f32 0.0, %v516
      %v518 = vpop.f32.mrb[0].mxu0
      %v519 = vpop.f32.mrb[0].mxu0
      %v520 = vadd.f32 0.0, %v519
      %v521 = vpop.f32.mrb[0].mxu0
      %522 = vmatprep.mubr.bf16.mxu0 0
      %523 = vmatmul.mubr.bf16.gmra.mrb[0].mxu0 %v428
      %v524 = vpop.f32.mrb[0].mxu0
      %v525 = vadd.f32 0.0, %v524
      %v526 = vpop.f32.mrb[0].mxu0
      %v527 = vpop.f32.mrb[0].mxu0
      %v528 = vadd.f32 0.0, %v527
      %v529 = vpop.f32.mrb[0].mxu0
      %530 = vmatprep.mubr.bf16.mxu0 0
      %531 = vmatmul.mubr.bf16.gmra.mrb[0].mxu0 %v431
      %v532 = vpop.f32.mrb[0].mxu0
      %v533 = vadd.f32 0.0, %v532
      %v534 = vpop.f32.mrb[0].mxu0
      %v535 = vpop.f32.mrb[0].mxu0
      %v536 = vadd.f32 0.0, %v535
      %v537 = vpop.f32.mrb[0].mxu0
      %538 = vmatprep.mubr.bf16.mxu0 0
      %539 = vmatmul.mubr.bf16.gmra.mrb[0].mxu0 %v434
      %v540 = vpop.f32.mrb[0].mxu0
      %v541 = vadd.f32 0.0, %v540
      %v542 = vpop.f32.mrb[0].mxu0
      %v543 = vpop.f32.mrb[0].mxu0
      %v544 = vadd.f32 0.0, %v543
      %v545 = vpop.f32.mrb[0].mxu0
      %546 = vmatprep.mubr.bf16.mxu0 0
      %547 = vmatmul.mubr.bf16.gmra.mrb[0].mxu0 %v437
      %v548 = vpop.f32.mrb[0].mxu0
      %v549 = vadd.f32 0.0, %v548
      %v550 = vpop.f32.mrb[0].mxu0
      %v551 = vpop.f32.mrb[0].mxu0
      %v552 = vadd.f32 0.0, %v551
      %v553 = vpop.f32.mrb[0].mxu0
      %554 = vmatprep.mubr.bf16.mxu0 0
      %555 = vmatmul.mubr.bf16.gmra.mrb[0].mxu0 %v440
      %v556 = vpop.f32.mrb[0].mxu0
      %v557 = vadd.f32 0.0, %v556
      %v558 = vpop.f32.mrb[0].mxu0
      %v559 = vpop.f32.mrb[0].mxu0
      %v560 = vadd.f32 0.0, %v559
      %v561 = vpop.f32.mrb[0].mxu0
      %562 = vmatprep.mubr.bf16.mxu0 0
      %563 = vmatmul.mubr.bf16.gmra.mrb[0].mxu0 %v443
      %v564 = vpop.f32.mrb[0].mxu0
      %v565 = vadd.f32 0.0, %v564
      %v566 = vpop.f32.mrb[0].mxu0
      %v567 = vpop.f32.mrb[0].mxu0
      %v568 = vadd.f32 0.0, %v567
      %v569 = vpop.f32.mrb[0].mxu0
      %570 = vmatprep.mubr.bf16.mxu0 0
      %571 = vmatmul.mubr.bf16.gmra.mrb[0].mxu0 %v446
      %v572 = vpop.f32.mrb[0].mxu0
      %v573 = vadd.f32 0.0, %v572
      %v574 = vpop.f32.mrb[0].mxu0
      %v575 = vpop.f32.mrb[0].mxu0
      %v576 = vadd.f32 0.0, %v575
      %v577 = vpop.f32.mrb[0].mxu0
      %578 = vmatprep.mubr.bf16.mxu0 0
      %579 = vmatmul.mubr.bf16.gmra.mrb[0].mxu0 %v449
      %v580 = vpop.f32.mrb[0].mxu0
      %v581 = vadd.f32 0.0, %v580
      %v582 = vpop.f32.mrb[0].mxu0
      %v583 = vpop.f32.mrb[0].mxu0
      %v584 = vadd.f32 0.0, %v583
      %v585 = vpop.f32.mrb[0].mxu0
      %586 = vmatprep.mubr.bf16.mxu0 0
      %587 = vmatmul.mubr.bf16.gmra.mrb[0].mxu0 %v452
      %v588 = vpop.f32.mrb[0].mxu0
      %v589 = vadd.f32 0.0, %v588
      %v590 = vpop.f32.mrb[0].mxu0
      %v591 = vpop.f32.mrb[0].mxu0
      %v592 = vadd.f32 0.0, %v591
      %v593 = vpop.f32.mrb[0].mxu0
      %594 = vmatprep.mubr.bf16.mxu0 0
      %595 = vmatmul.mubr.bf16.gmra.mrb[0].mxu0 %v455
      %v596 = vpop.f32.mrb[0].mxu0
      %v597 = vadd.f32 0.0, %v596
      %v598 = vpop.f32.mrb[0].mxu0
      %v599 = vpop.f32.mrb[0].mxu0
      %v600 = vadd.f32 0.0, %v599
      %v601 = vpop.f32.mrb[0].mxu0
      %602 = vmatprep.mubr.bf16.mxu0 0
      %603 = vmatmul.mubr.bf16.gmra.mrb[0].mxu0 %v458
      %v604 = vpop.f32.mrb[0].mxu0
      %v605 = vadd.f32 0.0, %v604
      %v606 = vpop.f32.mrb[0].mxu0
      %v607 = vpop.f32.mrb[0].mxu0
      %v608 = vadd.f32 0.0, %v607
      %v609 = vpop.f32.mrb[0].mxu0
      %610 = vmatprep.mubr.bf16.mxu0 0
      %611 = vmatmul.mubr.bf16.gmra.mrb[0].mxu0 %v461
      %v612 = vpop.f32.mrb[0].mxu0
      %v613 = vadd.f32 0.0, %v612
      %v614 = vpop.f32.mrb[0].mxu0
      %v615 = vpop.f32.mrb[0].mxu0
      %v616 = vadd.f32 0.0, %v615
      %v617 = vpop.f32.mrb[0].mxu0
      %618 = vmatprep.mubr.bf16.mxu0 0
      %619 = vmatmul.mubr.bf16.gmra.mrb[0].mxu0 %v464
      %v620 = vpop.f32.mrb[0].mxu0
      %v621 = vadd.f32 0.0, %v620
      %v622 = vpop.f32.mrb[0].mxu0
      %v623 = vpop.f32.mrb[0].mxu0
      %v624 = vadd.f32 0.0, %v623
      %v625 = vpop.f32.mrb[0].mxu0
      %626 = vdwg.mxu0
      %v627 = vld [vmem:[%s2] sm:$0x1]
      %v628 = vlaneseq
      %v629 = vshrl.u32 %v628, 7
      %v630 = vsub.s32 0, %v629
      %v631 = vrot.slane %v627, %v630
      %v632 = vmul.f32 %v501, %v631
      %v633 = vmul.f32 %v504, %v631
      %v634 = vmul.f32 %v509, %v631
      %v635 = vmul.f32 %v512, %v631
      %v636 = vmul.f32 %v517, %v631
      %v637 = vmul.f32 %v520, %v631
      %v638 = vmul.f32 %v525, %v631
      %v639 = vmul.f32 %v528, %v631
      %v640 = vmul.f32 %v533, %v631
      %v641 = vmul.f32 %v536, %v631
      %v642 = vmul.f32 %v541, %v631
      %v643 = vmul.f32 %v544, %v631
      %v644 = vmul.f32 %v549, %v631
      %v645 = vmul.f32 %v552, %v631
      %v646 = vmul.f32 %v557, %v631
      %v647 = vmul.f32 %v560, %v631
      %v648 = vmul.f32 %v565, %v631
      %v649 = vmul.f32 %v568, %v631
      %v650 = vmul.f32 %v573, %v631
      %v651 = vmul.f32 %v576, %v631
      %v652 = vmul.f32 %v581, %v631
      %v653 = vmul.f32 %v584, %v631
      %v654 = vmul.f32 %v589, %v631
      %v655 = vmul.f32 %v592, %v631
      %v656 = vmul.f32 %v597, %v631
      %v657 = vmul.f32 %v600, %v631
      %v658 = vmul.f32 %v605, %v631
      %v659 = vmul.f32 %v608, %v631
      %v660 = vmul.f32 %v613, %v631
      %v661 = vmul.f32 %v616, %v631
      %v662 = vmul.f32 %v621, %v631
      %v663 = vmul.f32 %v624, %v631
      %v664 = vld [vmem:[%s2 + $0x1] sm:$0x1]
      %v665 = vlaneseq
      %v666 = vshrl.u32 %v665, 7
      %v667 = vsub.s32 0, %v666
      %v668 = vrot.slane %v664, %v667
      %v669 = vadd.f32 %v632, %v668
      %v670 = vadd.f32 %v633, %v668
      %v671 = vadd.f32 %v634, %v668
      %v672 = vadd.f32 %v635, %v668
      %v673 = vadd.f32 %v636, %v668
      %v674 = vadd.f32 %v637, %v668
      %v675 = vadd.f32 %v638, %v668
      %v676 = vadd.f32 %v639, %v668
      %v677 = vadd.f32 %v640, %v668
      %v678 = vadd.f32 %v641, %v668
      %v679 = vadd.f32 %v642, %v668
      %v680 = vadd.f32 %v643, %v668
      %v681 = vadd.f32 %v644, %v668
      %v682 = vadd.f32 %v645, %v668
      %v683 = vadd.f32 %v646, %v668
      %v684 = vadd.f32 %v647, %v668
      %v685 = vadd.f32 %v648, %v668
      %v686 = vadd.f32 %v649, %v668
      %v687 = vadd.f32 %v650, %v668
      %v688 = vadd.f32 %v651, %v668
      %v689 = vadd.f32 %v652, %v668
      %v690 = vadd.f32 %v653, %v668
      %v691 = vadd.f32 %v654, %v668
      %v692 = vadd.f32 %v655, %v668
      %v693 = vadd.f32 %v656, %v668
      %v694 = vadd.f32 %v657, %v668
      %v695 = vadd.f32 %v658, %v668
      %v696 = vadd.f32 %v659, %v668
      %v697 = vadd.f32 %v660, %v668
      %v698 = vadd.f32 %v661, %v668
      %v699 = vadd.f32 %v662, %v668
      %v700 = vadd.f32 %v663, %v668
      %v701 = vxor.u32 %v669, 2147483648
      %v702 = vxor.u32 %v670, 2147483648
      %v703 = vxor.u32 %v671, 2147483648
      %v704 = vxor.u32 %v672, 2147483648
      %v705 = vxor.u32 %v673, 2147483648
      %v706 = vxor.u32 %v674, 2147483648
      %v707 = vxor.u32 %v675, 2147483648
      %v708 = vxor.u32 %v676, 2147483648
      %v709 = vxor.u32 %v677, 2147483648
      %v710 = vxor.u32 %v678, 2147483648
      %v711 = vxor.u32 %v679, 2147483648
      %v712 = vxor.u32 %v680, 2147483648
      %v713 = vxor.u32 %v681, 2147483648
      %v714 = vxor.u32 %v682, 2147483648
      %v715 = vxor.u32 %v683, 2147483648
      %v716 = vxor.u32 %v684, 2147483648
      %v717 = vxor.u32 %v685, 2147483648
      %v718 = vxor.u32 %v686, 2147483648
      %v719 = vxor.u32 %v687, 2147483648
      %v720 = vxor.u32 %v688, 2147483648
      %v721 = vxor.u32 %v689, 2147483648
      %v722 = vxor.u32 %v690, 2147483648
      %v723 = vxor.u32 %v691, 2147483648
      %v724 = vxor.u32 %v692, 2147483648
      %v725 = vxor.u32 %v693, 2147483648
      %v726 = vxor.u32 %v694, 2147483648
      %v727 = vxor.u32 %v695, 2147483648
      %v728 = vxor.u32 %v696, 2147483648
      %v729 = vxor.u32 %v697, 2147483648
      %v730 = vxor.u32 %v698, 2147483648
      %v731 = vxor.u32 %v699, 2147483648
      %v732 = vxor.u32 %v700, 2147483648
      %v733 = vmul.f32 %v701, 1.442695
      %v734 = vpow.pop %v733
      %v735 = vmul.f32 %v702, 1.442695
      %v736 = vpow.pop %v735
      %v737 = vmul.f32 %v703, 1.442695
      %v738 = vpow.pop %v737
      %v739 = vmul.f32 %v704, 1.442695
      %v740 = vpow.pop %v739
      %v741 = vmul.f32 %v705, 1.442695
      %v742 = vpow.pop %v741
      %v743 = vmul.f32 %v706, 1.442695
      %v744 = vpow.pop %v743
      %v745 = vmul.f32 %v707, 1.442695
      %v746 = vpow.pop %v745
      %v747 = vmul.f32 %v708, 1.442695
      %v748 = vpow.pop %v747
      %v749 = vmul.f32 %v709, 1.442695
      %v750 = vpow.pop %v749
      %v751 = vmul.f32 %v710, 1.442695
      %v752 = vpow.pop %v751
      %v753 = vmul.f32 %v711, 1.442695
      %v754 = vpow.pop %v753
      %v755 = vmul.f32 %v712, 1.442695
      %v756 = vpow.pop %v755
      %v757 = vmul.f32 %v713, 1.442695
      %v758 = vpow.pop %v757
      %v759 = vmul.f32 %v714, 1.442695
      %v760 = vpow.pop %v759
      %v761 = vmul.f32 %v715, 1.442695
      %v762 = vpow.pop %v761
      %v763 = vmul.f32 %v716, 1.442695
      %v764 = vpow.pop %v763
      %v765 = vmul.f32 %v717, 1.442695
      %v766 = vpow.pop %v765
      %v767 = vmul.f32 %v718, 1.442695
      %v768 = vpow.pop %v767
      %v769 = vmul.f32 %v719, 1.442695
      %v770 = vpow.pop %v769
      %v771 = vmul.f32 %v720, 1.442695
      %v772 = vpow.pop %v771
      %v773 = vmul.f32 %v721, 1.442695
      %v774 = vpow.pop %v773
      %v775 = vmul.f32 %v722, 1.442695
      %v776 = vpow.pop %v775
      %v777 = vmul.f32 %v723, 1.442695
      %v778 = vpow.pop %v777
      %v779 = vmul.f32 %v724, 1.442695
      %v780 = vpow.pop %v779
      %v781 = vmul.f32 %v725, 1.442695
      %v782 = vpow.pop %v781
      %v783 = vmul.f32 %v726, 1.442695
      %v784 = vpow.pop %v783
      %v785 = vmul.f32 %v727, 1.442695
      %v786 = vpow.pop %v785
      %v787 = vmul.f32 %v728, 1.442695
      %v788 = vpow.pop %v787
      %v789 = vmul.f32 %v729, 1.442695
      %v790 = vpow.pop %v789
      %v791 = vmul.f32 %v730, 1.442695
      %v792 = vpow.pop %v791
      %v793 = vmul.f32 %v731, 1.442695
      %v794 = vpow.pop %v793
      %v795 = vmul.f32 %v732, 1.442695
      %v796 = vpow.pop %v795
      %v797 = vadd.f32 %v734, 1.0
      %v798 = vadd.f32 %v736, 1.0
      %v799 = vadd.f32 %v738, 1.0
      %v800 = vadd.f32 %v740, 1.0
      %v801 = vadd.f32 %v742, 1.0
      %v802 = vadd.f32 %v744, 1.0
      %v803 = vadd.f32 %v746, 1.0
      %v804 = vadd.f32 %v748, 1.0
      %v805 = vadd.f32 %v750, 1.0
      %v806 = vadd.f32 %v752, 1.0
      %v807 = vadd.f32 %v754, 1.0
      %v808 = vadd.f32 %v756, 1.0
      %v809 = vadd.f32 %v758, 1.0
      %v810 = vadd.f32 %v760, 1.0
      %v811 = vadd.f32 %v762, 1.0
      %v812 = vadd.f32 %v764, 1.0
      %v813 = vadd.f32 %v766, 1.0
      %v814 = vadd.f32 %v768, 1.0
      %v815 = vadd.f32 %v770, 1.0
      %v816 = vadd.f32 %v772, 1.0
      %v817 = vadd.f32 %v774, 1.0
      %v818 = vadd.f32 %v776, 1.0
      %v819 = vadd.f32 %v778, 1.0
      %v820 = vadd.f32 %v780, 1.0
      %v821 = vadd.f32 %v782, 1.0
      %v822 = vadd.f32 %v784, 1.0
      %v823 = vadd.f32 %v786, 1.0
      %v824 = vadd.f32 %v788, 1.0
      %v825 = vadd.f32 %v790, 1.0
      %v826 = vadd.f32 %v792, 1.0
      %v827 = vadd.f32 %v794, 1.0
      %v828 = vadd.f32 %v796, 1.0
      %v829 = vrcp.pop %v797
      %v830 = vmul.f32 1.0, %v829
      %v831 = vrcp.pop %v798
      %v832 = vmul.f32 1.0, %v831
      %v833 = vrcp.pop %v799
      %v834 = vmul.f32 1.0, %v833
      %v835 = vrcp.pop %v800
      %v836 = vmul.f32 1.0, %v835
      %v837 = vrcp.pop %v801
      %v838 = vmul.f32 1.0, %v837
      %v839 = vrcp.pop %v802
      %v840 = vmul.f32 1.0, %v839
      %v841 = vrcp.pop %v803
      %v842 = vmul.f32 1.0, %v841
      %v843 = vrcp.pop %v804
      %v844 = vmul.f32 1.0, %v843
      %v845 = vrcp.pop %v805
      %v846 = vmul.f32 1.0, %v845
      %v847 = vrcp.pop %v806
      %v848 = vmul.f32 1.0, %v847
      %v849 = vrcp.pop %v807
      %v850 = vmul.f32 1.0, %v849
      %v851 = vrcp.pop %v808
      %v852 = vmul.f32 1.0, %v851
      %v853 = vrcp.pop %v809
      %v854 = vmul.f32 1.0, %v853
      %v855 = vrcp.pop %v810
      %v856 = vmul.f32 1.0, %v855
      %v857 = vrcp.pop %v811
      %v858 = vmul.f32 1.0, %v857
      %v859 = vrcp.pop %v812
      %v860 = vmul.f32 1.0, %v859
      %v861 = vrcp.pop %v813
      %v862 = vmul.f32 1.0, %v861
      %v863 = vrcp.pop %v814
      %v864 = vmul.f32 1.0, %v863
      %v865 = vrcp.pop %v815
      %v866 = vmul.f32 1.0, %v865
      %v867 = vrcp.pop %v816
      %v868 = vmul.f32 1.0, %v867
      %v869 = vrcp.pop %v817
      %v870 = vmul.f32 1.0, %v869
      %v871 = vrcp.pop %v818
      %v872 = vmul.f32 1.0, %v871
      %v873 = vrcp.pop %v819
      %v874 = vmul.f32 1.0, %v873
      %v875 = vrcp.pop %v820
      %v876 = vmul.f32 1.0, %v875
      %v877 = vrcp.pop %v821
      %v878 = vmul.f32 1.0, %v877
      %v879 = vrcp.pop %v822
      %v880 = vmul.f32 1.0, %v879
      %v881 = vrcp.pop %v823
      %v882 = vmul.f32 1.0, %v881
      %v883 = vrcp.pop %v824
      %v884 = vmul.f32 1.0, %v883
      %v885 = vrcp.pop %v825
      %v886 = vmul.f32 1.0, %v885
      %v887 = vrcp.pop %v826
      %v888 = vmul.f32 1.0, %v887
      %v889 = vrcp.pop %v827
      %v890 = vmul.f32 1.0, %v889
      %v891 = vrcp.pop %v828
      %v892 = vmul.f32 1.0, %v891
      %v893 = vmul.f32 %v669, %v830
      %v894 = vmul.f32 %v670, %v832
      %v895 = vmul.f32 %v671, %v834
      %v896 = vmul.f32 %v672, %v836
      %v897 = vmul.f32 %v673, %v838
      %v898 = vmul.f32 %v674, %v840
      %v899 = vmul.f32 %v675, %v842
      %v900 = vmul.f32 %v676, %v844
      %v901 = vmul.f32 %v677, %v846
      %v902 = vmul.f32 %v678, %v848
      %v903 = vmul.f32 %v679, %v850
      %v904 = vmul.f32 %v680, %v852
      %v905 = vmul.f32 %v681, %v854
      %v906 = vmul.f32 %v682, %v856
      %v907 = vmul.f32 %v683, %v858
      %v908 = vmul.f32 %v684, %v860
      %v909 = vmul.f32 %v685, %v862
      %v910 = vmul.f32 %v686, %v864
      %v911 = vmul.f32 %v687, %v866
      %v912 = vmul.f32 %v688, %v868
      %v913 = vmul.f32 %v689, %v870
      %v914 = vmul.f32 %v690, %v872
      %v915 = vmul.f32 %v691, %v874
      %v916 = vmul.f32 %v692, %v876
      %v917 = vmul.f32 %v693, %v878
      %v918 = vmul.f32 %v694, %v880
      %v919 = vmul.f32 %v695, %v882
      %v920 = vmul.f32 %v696, %v884
      %v921 = vmul.f32 %v697, %v886
      %v922 = vmul.f32 %v698, %v888
      %v923 = vmul.f32 %v699, %v890
      %v924 = vmul.f32 %v700, %v892
      %v925 = vpack.c.bf16 %v894, %v893
      %v926 = vpack.c.bf16 %v896, %v895
      %v927 = vpack.c.bf16 %v898, %v897
      %v928 = vpack.c.bf16 %v900, %v899
      %v929 = vpack.c.bf16 %v902, %v901
      %v930 = vpack.c.bf16 %v904, %v903
      %v931 = vpack.c.bf16 %v906, %v905
      %v932 = vpack.c.bf16 %v908, %v907
      %v933 = vpack.c.bf16 %v910, %v909
      %v934 = vpack.c.bf16 %v912, %v911
      %v935 = vpack.c.bf16 %v914, %v913
      %v936 = vpack.c.bf16 %v916, %v915
      %v937 = vpack.c.bf16 %v918, %v917
      %v938 = vpack.c.bf16 %v920, %v919
      %v939 = vpack.c.bf16 %v922, %v921
      %v940 = vpack.c.bf16 %v924, %v923
      %v941 = vld [vmem:[%s3] sm:$0xf]
      %vm942 = vcmask 64512
      %v944 = vsel %vm942, %v925, 0
      %v947 = vsel %vm942, %v926, 0
      %v950 = vsel %vm942, %v927, 0
      %v953 = vsel %vm942, %v928, 0
      %v956 = vsel %vm942, %v929, 0
      %v959 = vsel %vm942, %v930, 0
      %v962 = vsel %vm942, %v931, 0
      %v965 = vsel %vm942, %v932, 0
      %v968 = vsel %vm942, %v933, 0
      %v971 = vsel %vm942, %v934, 0
      %v974 = vsel %vm942, %v935, 0
      %v977 = vsel %vm942, %v936, 0
      %v980 = vsel %vm942, %v937, 0
      %v983 = vsel %vm942, %v938, 0
      %v986 = vsel %vm942, %v939, 0
      %v989 = vsel %vm942, %v940, 0
      %vm991 = vcmask 1043456
      %v993 = vsel %vm991, %v941, 0
      %995 = vmatprep.subr.bf16.mxu0 0
      %996 = vmatpush1.bf16.msra.mxu0 %v993
      %997 = vmatprep.subr.bf16.mxu0 0
      %998 = vmatpush1.bf16.msra.mxu0 0
      %999 = vmatprep.subr.bf16.mxu0 0
      %1000 = vmatpush1.bf16.msra.mxu0 0
      %1001 = vmatprep.subr.bf16.mxu0 0
      %1002 = vmatpush1.bf16.msra.mxu0 0
      %1003 = vmatprep.subr.bf16.mxu0 0
      %1004 = vmatpush1.bf16.msra.mxu0 0
      %1005 = vmatprep.subr.bf16.mxu0 0
      %1006 = vmatpush1.bf16.msra.mxu0 0
      %1007 = vmatprep.subr.bf16.mxu0 0
      %1008 = vmatpush1.bf16.msra.mxu0 0
      %1009 = vmatprep.subr.bf16.mxu0 0
      %1010 = vmatpush1.bf16.msra.mxu0 0
      %1011 = vmatprep.subr.bf16.mxu0 0
      %1012 = vmatpush1.bf16.msra.mxu0 0
      %1013 = vmatprep.subr.bf16.mxu0 0
      %1014 = vmatpush1.bf16.msra.mxu0 0
      %1015 = vmatprep.subr.bf16.mxu0 0
      %1016 = vmatpush1.bf16.msra.mxu0 0
      %1017 = vmatprep.subr.bf16.mxu0 0
      %1018 = vmatpush1.bf16.msra.mxu0 0
      %1019 = vmatprep.subr.bf16.mxu0 0
      %1020 = vmatpush1.bf16.msra.mxu0 0
      %1021 = vmatprep.subr.bf16.mxu0 0
      %1022 = vmatpush1.bf16.msra.mxu0 0
      %1023 = vmatprep.subr.bf16.mxu0 0
      %1024 = vmatpush1.bf16.msra.mxu0 0
      %1025 = vmatprep.subr.bf16.mxu0 0
      %1026 = vmatpush1.bf16.msra.mxu0 0
      %1027 = vmatprep.mubr.bf16.mxu0 0
      %1028 = vmatmul.mubr.bf16.gmra.mrb[0].mxu0 %v944
      %v1029 = vpop.f32.mrb[0].mxu0
      %v1030 = vadd.f32 0.0, %v1029
      %v1031 = vpop.f32.mrb[0].mxu0
      %v1032 = vpop.f32.mrb[0].mxu0
      %v1033 = vadd.f32 0.0, %v1032
      %v1034 = vpop.f32.mrb[0].mxu0
      %1035 = vmatprep.mubr.bf16.mxu0 0
      %1036 = vmatmul.mubr.bf16.gmra.mrb[0].mxu0 %v947
      %v1037 = vpop.f32.mrb[0].mxu0
      %v1038 = vadd.f32 0.0, %v1037
      %v1039 = vpop.f32.mrb[0].mxu0
      %v1040 = vpop.f32.mrb[0].mxu0
      %v1041 = vadd.f32 0.0, %v1040
      %v1042 = vpop.f32.mrb[0].mxu0
      %1043 = vmatprep.mubr.bf16.mxu0 0
      %1044 = vmatmul.mubr.bf16.gmra.mrb[0].mxu0 %v950
      %v1045 = vpop.f32.mrb[0].mxu0
      %v1046 = vadd.f32 0.0, %v1045
      %v1047 = vpop.f32.mrb[0].mxu0
      %v1048 = vpop.f32.mrb[0].mxu0
      %v1049 = vadd.f32 0.0, %v1048
      %v1050 = vpop.f32.mrb[0].mxu0
      %1051 = vmatprep.mubr.bf16.mxu0 0
      %1052 = vmatmul.mubr.bf16.gmra.mrb[0].mxu0 %v953
      %v1053 = vpop.f32.mrb[0].mxu0
      %v1054 = vadd.f32 0.0, %v1053
      %v1055 = vpop.f32.mrb[0].mxu0
      %v1056 = vpop.f32.mrb[0].mxu0
      %v1057 = vadd.f32 0.0, %v1056
      %v1058 = vpop.f32.mrb[0].mxu0
      %1059 = vmatprep.mubr.bf16.mxu0 0
      %1060 = vmatmul.mubr.bf16.gmra.mrb[0].mxu0 %v956
      %v1061 = vpop.f32.mrb[0].mxu0
      %v1062 = vadd.f32 0.0, %v1061
      %v1063 = vpop.f32.mrb[0].mxu0
      %v1064 = vpop.f32.mrb[0].mxu0
      %v1065 = vadd.f32 0.0, %v1064
      %v1066 = vpop.f32.mrb[0].mxu0
      %1067 = vmatprep.mubr.bf16.mxu0 0
      %1068 = vmatmul.mubr.bf16.gmra.mrb[0].mxu0 %v959
      %v1069 = vpop.f32.mrb[0].mxu0
      %v1070 = vadd.f32 0.0, %v1069
      %v1071 = vpop.f32.mrb[0].mxu0
      %v1072 = vpop.f32.mrb[0].mxu0
      %v1073 = vadd.f32 0.0, %v1072
      %v1074 = vpop.f32.mrb[0].mxu0
      %1075 = vmatprep.mubr.bf16.mxu0 0
      %1076 = vmatmul.mubr.bf16.gmra.mrb[0].mxu0 %v962
      %v1077 = vpop.f32.mrb[0].mxu0
      %v1078 = vadd.f32 0.0, %v1077
      %v1079 = vpop.f32.mrb[0].mxu0
      %v1080 = vpop.f32.mrb[0].mxu0
      %v1081 = vadd.f32 0.0, %v1080
      %v1082 = vpop.f32.mrb[0].mxu0
      %1083 = vmatprep.mubr.bf16.mxu0 0
      %1084 = vmatmul.mubr.bf16.gmra.mrb[0].mxu0 %v965
      %v1085 = vpop.f32.mrb[0].mxu0
      %v1086 = vadd.f32 0.0, %v1085
      %v1087 = vpop.f32.mrb[0].mxu0
      %v1088 = vpop.f32.mrb[0].mxu0
      %v1089 = vadd.f32 0.0, %v1088
      %v1090 = vpop.f32.mrb[0].mxu0
      %1091 = vmatprep.mubr.bf16.mxu0 0
      %1092 = vmatmul.mubr.bf16.gmra.mrb[0].mxu0 %v968
      %v1093 = vpop.f32.mrb[0].mxu0
      %v1094 = vadd.f32 0.0, %v1093
      %v1095 = vpop.f32.mrb[0].mxu0
      %v1096 = vpop.f32.mrb[0].mxu0
      %v1097 = vadd.f32 0.0, %v1096
      %v1098 = vpop.f32.mrb[0].mxu0
      %1099 = vmatprep.mubr.bf16.mxu0 0
      %1100 = vmatmul.mubr.bf16.gmra.mrb[0].mxu0 %v971
      %v1101 = vpop.f32.mrb[0].mxu0
      %v1102 = vadd.f32 0.0, %v1101
      %v1103 = vpop.f32.mrb[0].mxu0
      %v1104 = vpop.f32.mrb[0].mxu0
      %v1105 = vadd.f32 0.0, %v1104
      %v1106 = vpop.f32.mrb[0].mxu0
      %1107 = vmatprep.mubr.bf16.mxu0 0
      %1108 = vmatmul.mubr.bf16.gmra.mrb[0].mxu0 %v974
      %v1109 = vpop.f32.mrb[0].mxu0
      %v1110 = vadd.f32 0.0, %v1109
      %v1111 = vpop.f32.mrb[0].mxu0
      %v1112 = vpop.f32.mrb[0].mxu0
      %v1113 = vadd.f32 0.0, %v1112
      %v1114 = vpop.f32.mrb[0].mxu0
      %1115 = vmatprep.mubr.bf16.mxu0 0
      %1116 = vmatmul.mubr.bf16.gmra.mrb[0].mxu0 %v977
      %v1117 = vpop.f32.mrb[0].mxu0
      %v1118 = vadd.f32 0.0, %v1117
      %v1119 = vpop.f32.mrb[0].mxu0
      %v1120 = vpop.f32.mrb[0].mxu0
      %v1121 = vadd.f32 0.0, %v1120
      %v1122 = vpop.f32.mrb[0].mxu0
      %1123 = vmatprep.mubr.bf16.mxu0 0
      %1124 = vmatmul.mubr.bf16.gmra.mrb[0].mxu0 %v980
      %v1125 = vpop.f32.mrb[0].mxu0
      %v1126 = vadd.f32 0.0, %v1125
      %v1127 = vpop.f32.mrb[0].mxu0
      %v1128 = vpop.f32.mrb[0].mxu0
      %v1129 = vadd.f32 0.0, %v1128
      %v1130 = vpop.f32.mrb[0].mxu0
      %1131 = vmatprep.mubr.bf16.mxu0 0
      %1132 = vmatmul.mubr.bf16.gmra.mrb[0].mxu0 %v983
      %v1133 = vpop.f32.mrb[0].mxu0
      %v1134 = vadd.f32 0.0, %v1133
      %v1135 = vpop.f32.mrb[0].mxu0
      %v1136 = vpop.f32.mrb[0].mxu0
      %v1137 = vadd.f32 0.0, %v1136
      %v1138 = vpop.f32.mrb[0].mxu0
      %1139 = vmatprep.mubr.bf16.mxu0 0
      %1140 = vmatmul.mubr.bf16.gmra.mrb[0].mxu0 %v986
      %v1141 = vpop.f32.mrb[0].mxu0
      %v1142 = vadd.f32 0.0, %v1141
      %v1143 = vpop.f32.mrb[0].mxu0
      %v1144 = vpop.f32.mrb[0].mxu0
      %v1145 = vadd.f32 0.0, %v1144
      %v1146 = vpop.f32.mrb[0].mxu0
      %1147 = vmatprep.mubr.bf16.mxu0 0
      %1148 = vmatmul.mubr.bf16.gmra.mrb[0].mxu0 %v989
      %v1149 = vpop.f32.mrb[0].mxu0
      %v1150 = vadd.f32 0.0, %v1149
      %v1151 = vpop.f32.mrb[0].mxu0
      %v1152 = vpop.f32.mrb[0].mxu0
      %v1153 = vadd.f32 0.0, %v1152
      %v1154 = vpop.f32.mrb[0].mxu0
      %1155 = vdwg.mxu0
      %v1156 = vld [vmem:[%s4] sm:$0x1]
      %v1157 = vlaneseq
      %v1158 = vshrl.u32 %v1157, 7
      %v1159 = vsub.s32 0, %v1158
      %v1160 = vrot.slane %v1156, %v1159
      %v1161 = vmul.f32 %v1030, %v1160
      %v1162 = vmul.f32 %v1033, %v1160
      %v1163 = vmul.f32 %v1038, %v1160
      %v1164 = vmul.f32 %v1041, %v1160
      %v1165 = vmul.f32 %v1046, %v1160
      %v1166 = vmul.f32 %v1049, %v1160
      %v1167 = vmul.f32 %v1054, %v1160
      %v1168 = vmul.f32 %v1057, %v1160
      %v1169 = vmul.f32 %v1062, %v1160
      %v1170 = vmul.f32 %v1065, %v1160
      %v1171 = vmul.f32 %v1070, %v1160
      %v1172 = vmul.f32 %v1073, %v1160
      %v1173 = vmul.f32 %v1078, %v1160
      %v1174 = vmul.f32 %v1081, %v1160
      %v1175 = vmul.f32 %v1086, %v1160
      %v1176 = vmul.f32 %v1089, %v1160
      %v1177 = vmul.f32 %v1094, %v1160
      %v1178 = vmul.f32 %v1097, %v1160
      %v1179 = vmul.f32 %v1102, %v1160
      %v1180 = vmul.f32 %v1105, %v1160
      %v1181 = vmul.f32 %v1110, %v1160
      %v1182 = vmul.f32 %v1113, %v1160
      %v1183 = vmul.f32 %v1118, %v1160
      %v1184 = vmul.f32 %v1121, %v1160
      %v1185 = vmul.f32 %v1126, %v1160
      %v1186 = vmul.f32 %v1129, %v1160
      %v1187 = vmul.f32 %v1134, %v1160
      %v1188 = vmul.f32 %v1137, %v1160
      %v1189 = vmul.f32 %v1142, %v1160
      %v1190 = vmul.f32 %v1145, %v1160
      %v1191 = vmul.f32 %v1150, %v1160
      %v1192 = vmul.f32 %v1153, %v1160
      %v1193 = vld [vmem:[%s4 + $0x1] sm:$0x1]
      %v1194 = vlaneseq
      %v1195 = vshrl.u32 %v1194, 7
      %v1196 = vsub.s32 0, %v1195
      %v1197 = vrot.slane %v1193, %v1196
      %v1198 = vadd.f32 %v1161, %v1197
      %v1199 = vadd.f32 %v1162, %v1197
      %v1200 = vadd.f32 %v1163, %v1197
      %v1201 = vadd.f32 %v1164, %v1197
      %v1202 = vadd.f32 %v1165, %v1197
      %v1203 = vadd.f32 %v1166, %v1197
      %v1204 = vadd.f32 %v1167, %v1197
      %v1205 = vadd.f32 %v1168, %v1197
      %v1206 = vadd.f32 %v1169, %v1197
      %v1207 = vadd.f32 %v1170, %v1197
      %v1208 = vadd.f32 %v1171, %v1197
      %v1209 = vadd.f32 %v1172, %v1197
      %v1210 = vadd.f32 %v1173, %v1197
      %v1211 = vadd.f32 %v1174, %v1197
      %v1212 = vadd.f32 %v1175, %v1197
      %v1213 = vadd.f32 %v1176, %v1197
      %v1214 = vadd.f32 %v1177, %v1197
      %v1215 = vadd.f32 %v1178, %v1197
      %v1216 = vadd.f32 %v1179, %v1197
      %v1217 = vadd.f32 %v1180, %v1197
      %v1218 = vadd.f32 %v1181, %v1197
      %v1219 = vadd.f32 %v1182, %v1197
      %v1220 = vadd.f32 %v1183, %v1197
      %v1221 = vadd.f32 %v1184, %v1197
      %v1222 = vadd.f32 %v1185, %v1197
      %v1223 = vadd.f32 %v1186, %v1197
      %v1224 = vadd.f32 %v1187, %v1197
      %v1225 = vadd.f32 %v1188, %v1197
      %v1226 = vadd.f32 %v1189, %v1197
      %v1227 = vadd.f32 %v1190, %v1197
      %v1228 = vadd.f32 %v1191, %v1197
      %v1229 = vadd.f32 %v1192, %v1197
      %v1230 = vxor.u32 %v1198, 2147483648
      %v1231 = vxor.u32 %v1199, 2147483648
      %v1232 = vxor.u32 %v1200, 2147483648
      %v1233 = vxor.u32 %v1201, 2147483648
      %v1234 = vxor.u32 %v1202, 2147483648
      %v1235 = vxor.u32 %v1203, 2147483648
      %v1236 = vxor.u32 %v1204, 2147483648
      %v1237 = vxor.u32 %v1205, 2147483648
      %v1238 = vxor.u32 %v1206, 2147483648
      %v1239 = vxor.u32 %v1207, 2147483648
      %v1240 = vxor.u32 %v1208, 2147483648
      %v1241 = vxor.u32 %v1209, 2147483648
      %v1242 = vxor.u32 %v1210, 2147483648
      %v1243 = vxor.u32 %v1211, 2147483648
      %v1244 = vxor.u32 %v1212, 2147483648
      %v1245 = vxor.u32 %v1213, 2147483648
      %v1246 = vxor.u32 %v1214, 2147483648
      %v1247 = vxor.u32 %v1215, 2147483648
      %v1248 = vxor.u32 %v1216, 2147483648
      %v1249 = vxor.u32 %v1217, 2147483648
      %v1250 = vxor.u32 %v1218, 2147483648
      %v1251 = vxor.u32 %v1219, 2147483648
      %v1252 = vxor.u32 %v1220, 2147483648
      %v1253 = vxor.u32 %v1221, 2147483648
      %v1254 = vxor.u32 %v1222, 2147483648
      %v1255 = vxor.u32 %v1223, 2147483648
      %v1256 = vxor.u32 %v1224, 2147483648
      %v1257 = vxor.u32 %v1225, 2147483648
      %v1258 = vxor.u32 %v1226, 2147483648
      %v1259 = vxor.u32 %v1227, 2147483648
      %v1260 = vxor.u32 %v1228, 2147483648
      %v1261 = vxor.u32 %v1229, 2147483648
      %v1262 = vmul.f32 %v1230, 1.442695
      %v1263 = vpow.pop %v1262
      %v1264 = vmul.f32 %v1231, 1.442695
      %v1265 = vpow.pop %v1264
      %v1266 = vmul.f32 %v1232, 1.442695
      %v1267 = vpow.pop %v1266
      %v1268 = vmul.f32 %v1233, 1.442695
      %v1269 = vpow.pop %v1268
      %v1270 = vmul.f32 %v1234, 1.442695
      %v1271 = vpow.pop %v1270
      %v1272 = vmul.f32 %v1235, 1.442695
      %v1273 = vpow.pop %v1272
      %v1274 = vmul.f32 %v1236, 1.442695
      %v1275 = vpow.pop %v1274
      %v1276 = vmul.f32 %v1237, 1.442695
      %v1277 = vpow.pop %v1276
      %v1278 = vmul.f32 %v1238, 1.442695
      %v1279 = vpow.pop %v1278
      %v1280 = vmul.f32 %v1239, 1.442695
      %v1281 = vpow.pop %v1280
      %v1282 = vmul.f32 %v1240, 1.442695
      %v1283 = vpow.pop %v1282
      %v1284 = vmul.f32 %v1241, 1.442695
      %v1285 = vpow.pop %v1284
      %v1286 = vmul.f32 %v1242, 1.442695
      %v1287 = vpow.pop %v1286
      %v1288 = vmul.f32 %v1243, 1.442695
      %v1289 = vpow.pop %v1288
      %v1290 = vmul.f32 %v1244, 1.442695
      %v1291 = vpow.pop %v1290
      %v1292 = vmul.f32 %v1245, 1.442695
      %v1293 = vpow.pop %v1292
      %v1294 = vmul.f32 %v1246, 1.442695
      %v1295 = vpow.pop %v1294
      %v1296 = vmul.f32 %v1247, 1.442695
      %v1297 = vpow.pop %v1296
      %v1298 = vmul.f32 %v1248, 1.442695
      %v1299 = vpow.pop %v1298
      %v1300 = vmul.f32 %v1249, 1.442695
      %v1301 = vpow.pop %v1300
      %v1302 = vmul.f32 %v1250, 1.442695
      %v1303 = vpow.pop %v1302
      %v1304 = vmul.f32 %v1251, 1.442695
      %v1305 = vpow.pop %v1304
      %v1306 = vmul.f32 %v1252, 1.442695
      %v1307 = vpow.pop %v1306
      %v1308 = vmul.f32 %v1253, 1.442695
      %v1309 = vpow.pop %v1308
      %v1310 = vmul.f32 %v1254, 1.442695
      %v1311 = vpow.pop %v1310
      %v1312 = vmul.f32 %v1255, 1.442695
      %v1313 = vpow.pop %v1312
      %v1314 = vmul.f32 %v1256, 1.442695
      %v1315 = vpow.pop %v1314
      %v1316 = vmul.f32 %v1257, 1.442695
      %v1317 = vpow.pop %v1316
      %v1318 = vmul.f32 %v1258, 1.442695
      %v1319 = vpow.pop %v1318
      %v1320 = vmul.f32 %v1259, 1.442695
      %v1321 = vpow.pop %v1320
      %v1322 = vmul.f32 %v1260, 1.442695
      %v1323 = vpow.pop %v1322
      %v1324 = vmul.f32 %v1261, 1.442695
      %v1325 = vpow.pop %v1324
      %v1326 = vadd.f32 %v1263, 1.0
      %v1327 = vadd.f32 %v1265, 1.0
      %v1328 = vadd.f32 %v1267, 1.0
      %v1329 = vadd.f32 %v1269, 1.0
      %v1330 = vadd.f32 %v1271, 1.0
      %v1331 = vadd.f32 %v1273, 1.0
      %v1332 = vadd.f32 %v1275, 1.0
      %v1333 = vadd.f32 %v1277, 1.0
      %v1334 = vadd.f32 %v1279, 1.0
      %v1335 = vadd.f32 %v1281, 1.0
      %v1336 = vadd.f32 %v1283, 1.0
      %v1337 = vadd.f32 %v1285, 1.0
      %v1338 = vadd.f32 %v1287, 1.0
      %v1339 = vadd.f32 %v1289, 1.0
      %v1340 = vadd.f32 %v1291, 1.0
      %v1341 = vadd.f32 %v1293, 1.0
      %v1342 = vadd.f32 %v1295, 1.0
      %v1343 = vadd.f32 %v1297, 1.0
      %v1344 = vadd.f32 %v1299, 1.0
      %v1345 = vadd.f32 %v1301, 1.0
      %v1346 = vadd.f32 %v1303, 1.0
      %v1347 = vadd.f32 %v1305, 1.0
      %v1348 = vadd.f32 %v1307, 1.0
      %v1349 = vadd.f32 %v1309, 1.0
      %v1350 = vadd.f32 %v1311, 1.0
      %v1351 = vadd.f32 %v1313, 1.0
      %v1352 = vadd.f32 %v1315, 1.0
      %v1353 = vadd.f32 %v1317, 1.0
      %v1354 = vadd.f32 %v1319, 1.0
      %v1355 = vadd.f32 %v1321, 1.0
      %v1356 = vadd.f32 %v1323, 1.0
      %v1357 = vadd.f32 %v1325, 1.0
      %v1358 = vrcp.pop %v1326
      %v1359 = vmul.f32 1.0, %v1358
      %v1360 = vrcp.pop %v1327
      %v1361 = vmul.f32 1.0, %v1360
      %v1362 = vrcp.pop %v1328
      %v1363 = vmul.f32 1.0, %v1362
      %v1364 = vrcp.pop %v1329
      %v1365 = vmul.f32 1.0, %v1364
      %v1366 = vrcp.pop %v1330
      %v1367 = vmul.f32 1.0, %v1366
      %v1368 = vrcp.pop %v1331
      %v1369 = vmul.f32 1.0, %v1368
      %v1370 = vrcp.pop %v1332
      %v1371 = vmul.f32 1.0, %v1370
      %v1372 = vrcp.pop %v1333
      %v1373 = vmul.f32 1.0, %v1372
      %v1374 = vrcp.pop %v1334
      %v1375 = vmul.f32 1.0, %v1374
      %v1376 = vrcp.pop %v1335
      %v1377 = vmul.f32 1.0, %v1376
      %v1378 = vrcp.pop %v1336
      %v1379 = vmul.f32 1.0, %v1378
      %v1380 = vrcp.pop %v1337
      %v1381 = vmul.f32 1.0, %v1380
      %v1382 = vrcp.pop %v1338
      %v1383 = vmul.f32 1.0, %v1382
      %v1384 = vrcp.pop %v1339
      %v1385 = vmul.f32 1.0, %v1384
      %v1386 = vrcp.pop %v1340
      %v1387 = vmul.f32 1.0, %v1386
      %v1388 = vrcp.pop %v1341
      %v1389 = vmul.f32 1.0, %v1388
      %v1390 = vrcp.pop %v1342
      %v1391 = vmul.f32 1.0, %v1390
      %v1392 = vrcp.pop %v1343
      %v1393 = vmul.f32 1.0, %v1392
      %v1394 = vrcp.pop %v1344
      %v1395 = vmul.f32 1.0, %v1394
      %v1396 = vrcp.pop %v1345
      %v1397 = vmul.f32 1.0, %v1396
      %v1398 = vrcp.pop %v1346
      %v1399 = vmul.f32 1.0, %v1398
      %v1400 = vrcp.pop %v1347
      %v1401 = vmul.f32 1.0, %v1400
      %v1402 = vrcp.pop %v1348
      %v1403 = vmul.f32 1.0, %v1402
      %v1404 = vrcp.pop %v1349
      %v1405 = vmul.f32 1.0, %v1404
      %v1406 = vrcp.pop %v1350
      %v1407 = vmul.f32 1.0, %v1406
      %v1408 = vrcp.pop %v1351
      %v1409 = vmul.f32 1.0, %v1408
      %v1410 = vrcp.pop %v1352
      %v1411 = vmul.f32 1.0, %v1410
      %v1412 = vrcp.pop %v1353
      %v1413 = vmul.f32 1.0, %v1412
      %v1414 = vrcp.pop %v1354
      %v1415 = vmul.f32 1.0, %v1414
      %v1416 = vrcp.pop %v1355
      %v1417 = vmul.f32 1.0, %v1416
      %v1418 = vrcp.pop %v1356
      %v1419 = vmul.f32 1.0, %v1418
      %v1420 = vrcp.pop %v1357
      %v1421 = vmul.f32 1.0, %v1420
      %v1422 = vmul.f32 %v1198, %v1359
      %v1423 = vmul.f32 %v1199, %v1361
      %v1424 = vmul.f32 %v1200, %v1363
      %v1425 = vmul.f32 %v1201, %v1365
      %v1426 = vmul.f32 %v1202, %v1367
      %v1427 = vmul.f32 %v1203, %v1369
      %v1428 = vmul.f32 %v1204, %v1371
      %v1429 = vmul.f32 %v1205, %v1373
      %v1430 = vmul.f32 %v1206, %v1375
      %v1431 = vmul.f32 %v1207, %v1377
      %v1432 = vmul.f32 %v1208, %v1379
      %v1433 = vmul.f32 %v1209, %v1381
      %v1434 = vmul.f32 %v1210, %v1383
      %v1435 = vmul.f32 %v1211, %v1385
      %v1436 = vmul.f32 %v1212, %v1387
      %v1437 = vmul.f32 %v1213, %v1389
      %v1438 = vmul.f32 %v1214, %v1391
      %v1439 = vmul.f32 %v1215, %v1393
      %v1440 = vmul.f32 %v1216, %v1395
      %v1441 = vmul.f32 %v1217, %v1397
      %v1442 = vmul.f32 %v1218, %v1399
      %v1443 = vmul.f32 %v1219, %v1401
      %v1444 = vmul.f32 %v1220, %v1403
      %v1445 = vmul.f32 %v1221, %v1405
      %v1446 = vmul.f32 %v1222, %v1407
      %v1447 = vmul.f32 %v1223, %v1409
      %v1448 = vmul.f32 %v1224, %v1411
      %v1449 = vmul.f32 %v1225, %v1413
      %v1450 = vmul.f32 %v1226, %v1415
      %v1451 = vmul.f32 %v1227, %v1417
      %v1452 = vmul.f32 %v1228, %v1419
      %v1453 = vmul.f32 %v1229, %v1421
      %v1454 = vpack.c.bf16 %v1423, %v1422
      %v1455 = vpack.c.bf16 %v1425, %v1424
      %v1456 = vpack.c.bf16 %v1427, %v1426
      %v1457 = vpack.c.bf16 %v1429, %v1428
      %v1458 = vpack.c.bf16 %v1431, %v1430
      %v1459 = vpack.c.bf16 %v1433, %v1432
      %v1460 = vpack.c.bf16 %v1435, %v1434
      %v1461 = vpack.c.bf16 %v1437, %v1436
      %v1462 = vpack.c.bf16 %v1439, %v1438
      %v1463 = vpack.c.bf16 %v1441, %v1440
      %v1464 = vpack.c.bf16 %v1443, %v1442
      %v1465 = vpack.c.bf16 %v1445, %v1444
      %v1466 = vpack.c.bf16 %v1447, %v1446
      %v1467 = vpack.c.bf16 %v1449, %v1448
      %v1468 = vpack.c.bf16 %v1451, %v1450
      %v1469 = vpack.c.bf16 %v1453, %v1452
      %v1486 = vunpack.c.l.b16 %v1454
      %v1487 = vunpack.c.h.b16 %v1454
      %v1488 = vunpack.c.l.b16 %v1455
      %v1489 = vunpack.c.h.b16 %v1455
      %v1490 = vunpack.c.l.b16 %v1456
      %v1491 = vunpack.c.h.b16 %v1456
      %v1492 = vunpack.c.l.b16 %v1457
      %v1493 = vunpack.c.h.b16 %v1457
      %v1494 = vunpack.c.l.b16 %v1458
      %v1495 = vunpack.c.h.b16 %v1458
      %v1496 = vunpack.c.l.b16 %v1459
      %v1497 = vunpack.c.h.b16 %v1459
      %v1498 = vunpack.c.l.b16 %v1460
      %v1499 = vunpack.c.h.b16 %v1460
      %v1500 = vunpack.c.l.b16 %v1461
      %v1501 = vunpack.c.h.b16 %v1461
      %v1502 = vunpack.c.l.b16 %v1462
      %v1503 = vunpack.c.h.b16 %v1462
      %v1504 = vunpack.c.l.b16 %v1463
      %v1505 = vunpack.c.h.b16 %v1463
      %v1506 = vunpack.c.l.b16 %v1464
      %v1507 = vunpack.c.h.b16 %v1464
      %v1508 = vunpack.c.l.b16 %v1465
      %v1509 = vunpack.c.h.b16 %v1465
      %v1510 = vunpack.c.l.b16 %v1466
      %v1511 = vunpack.c.h.b16 %v1466
      %v1512 = vunpack.c.l.b16 %v1467
      %v1513 = vunpack.c.h.b16 %v1467
      %v1514 = vunpack.c.l.b16 %v1468
      %v1515 = vunpack.c.h.b16 %v1468
      %v1516 = vunpack.c.l.b16 %v1469
      %v1517 = vunpack.c.h.b16 %v1469
      %v1518 = vpack.c.b16 %v1486, %v1486
      %v1519 = vpack.c.b16 %v1487, %v1487
      %v1520 = vpack.c.b16 %v1488, %v1488
      %v1521 = vpack.c.b16 %v1489, %v1489
      %v1522 = vpack.c.b16 %v1490, %v1490
      %v1523 = vpack.c.b16 %v1491, %v1491
      %v1524 = vpack.c.b16 %v1492, %v1492
      %v1525 = vpack.c.b16 %v1493, %v1493
      %v1526 = vpack.c.b16 %v1494, %v1494
      %v1527 = vpack.c.b16 %v1495, %v1495
      %v1528 = vpack.c.b16 %v1496, %v1496
      %v1529 = vpack.c.b16 %v1497, %v1497
      %v1530 = vpack.c.b16 %v1498, %v1498
      %v1531 = vpack.c.b16 %v1499, %v1499
      %v1532 = vpack.c.b16 %v1500, %v1500
      %v1533 = vpack.c.b16 %v1501, %v1501
      %v1534 = vpack.c.b16 %v1502, %v1502
      %v1535 = vpack.c.b16 %v1503, %v1503
      %v1536 = vpack.c.b16 %v1504, %v1504
      %v1537 = vpack.c.b16 %v1505, %v1505
      %v1538 = vpack.c.b16 %v1506, %v1506
      %v1539 = vpack.c.b16 %v1507, %v1507
      %v1540 = vpack.c.b16 %v1508, %v1508
      %v1541 = vpack.c.b16 %v1509, %v1509
      %v1542 = vpack.c.b16 %v1510, %v1510
      %v1543 = vpack.c.b16 %v1511, %v1511
      %v1544 = vpack.c.b16 %v1512, %v1512
      %v1545 = vpack.c.b16 %v1513, %v1513
      %v1546 = vpack.c.b16 %v1514, %v1514
      %v1547 = vpack.c.b16 %v1515, %v1515
      %v1548 = vpack.c.b16 %v1516, %v1516
      %v1549 = vpack.c.b16 %v1517, %v1517
      %vm1582 = vcmask 60416
      %1583 = vst.msk [vmem:[%s288] sm:$0xf] %vm1582, %v1518
      %1584 = vst.msk [vmem:[%s288 + $0x4] sm:$0xf] %vm1582, %v1519
      %1585 = vst.msk [vmem:[%s288 + $0x8] sm:$0xf] %vm1582, %v1520
      %1586 = vst.msk [vmem:[%s288 + $0xc] sm:$0xf] %vm1582, %v1521
      %1587 = vst.msk [vmem:[%s288 + $0x10] sm:$0xf] %vm1582, %v1522
      %1588 = vst.msk [vmem:[%s288 + $0x14] sm:$0xf] %vm1582, %v1523
      %1589 = vst.msk [vmem:[%s288 + $0x18] sm:$0xf] %vm1582, %v1524
      %1590 = vst.msk [vmem:[%s288 + $0x1c] sm:$0xf] %vm1582, %v1525
      %1591 = vst.msk [vmem:[%s288 + $0x20] sm:$0xf] %vm1582, %v1526
      %1592 = vst.msk [vmem:[%s288 + $0x24] sm:$0xf] %vm1582, %v1527
      %1593 = vst.msk [vmem:[%s288 + $0x28] sm:$0xf] %vm1582, %v1528
      %1594 = vst.msk [vmem:[%s288 + $0x2c] sm:$0xf] %vm1582, %v1529
      %1595 = vst.msk [vmem:[%s288 + $0x30] sm:$0xf] %vm1582, %v1530
      %1596 = vst.msk [vmem:[%s288 + $0x34] sm:$0xf] %vm1582, %v1531
      %1597 = vst.msk [vmem:[%s288 + $0x38] sm:$0xf] %vm1582, %v1532
      %1598 = vst.msk [vmem:[%s288 + $0x3c] sm:$0xf] %vm1582, %v1533
      %1599 = vst.msk [vmem:[%s288 + $0x40] sm:$0xf] %vm1582, %v1534
      %1600 = vst.msk [vmem:[%s288 + $0x44] sm:$0xf] %vm1582, %v1535
      %1601 = vst.msk [vmem:[%s288 + $0x48] sm:$0xf] %vm1582, %v1536
      %1602 = vst.msk [vmem:[%s288 + $0x4c] sm:$0xf] %vm1582, %v1537
      %1603 = vst.msk [vmem:[%s288 + $0x50] sm:$0xf] %vm1582, %v1538
      %1604 = vst.msk [vmem:[%s288 + $0x54] sm:$0xf] %vm1582, %v1539
      %1605 = vst.msk [vmem:[%s288 + $0x58] sm:$0xf] %vm1582, %v1540
      %1606 = vst.msk [vmem:[%s288 + $0x5c] sm:$0xf] %vm1582, %v1541
      %1607 = vst.msk [vmem:[%s288 + $0x60] sm:$0xf] %vm1582, %v1542
      %1608 = vst.msk [vmem:[%s288 + $0x64] sm:$0xf] %vm1582, %v1543
      %1609 = vst.msk [vmem:[%s288 + $0x68] sm:$0xf] %vm1582, %v1544
      %1610 = vst.msk [vmem:[%s288 + $0x6c] sm:$0xf] %vm1582, %v1545
      %1611 = vst.msk [vmem:[%s288 + $0x70] sm:$0xf] %vm1582, %v1546
      %1612 = vst.msk [vmem:[%s288 + $0x74] sm:$0xf] %vm1582, %v1547
      %1613 = vst.msk [vmem:[%s288 + $0x78] sm:$0xf] %vm1582, %v1548
      %1614 = vst.msk [vmem:[%s288 + $0x7c] sm:$0xf] %vm1582, %v1549
      %v1615 = vld [vmem:[%s5] sm:$0xf]
      %v1616 = vld [vmem:[%s5 + $0x4] sm:$0xf]
      %v1619 = vunpack.c.l.b16 %v1615
      %v1620 = vunpack.c.l.b16 %v1616
      %v1621 = vpack.c.b16 %v1620, %v1619
      %1623 = vmatprep.subr.bf16.mxu0 0
      %1624 = vmatpush1.bf16.msra.mxu0 %v1621
      %1625 = vmatprep.subr.bf16.mxu0 0
      %1626 = vmatpush1.bf16.msra.mxu0 0
      %1627 = vmatprep.subr.bf16.mxu0 0
      %1628 = vmatpush1.bf16.msra.mxu0 0
      %1629 = vmatprep.subr.bf16.mxu0 0
      %1630 = vmatpush1.bf16.msra.mxu0 0
      %1631 = vmatprep.subr.bf16.mxu0 0
      %1632 = vmatpush1.bf16.msra.mxu0 0
      %1633 = vmatprep.subr.bf16.mxu0 0
      %1634 = vmatpush1.bf16.msra.mxu0 0
      %1635 = vmatprep.subr.bf16.mxu0 0
      %1636 = vmatpush1.bf16.msra.mxu0 0
      %1637 = vmatprep.subr.bf16.mxu0 0
      %1638 = vmatpush1.bf16.msra.mxu0 0
      %1639 = vmatprep.subr.bf16.mxu0 0
      %1640 = vmatpush1.bf16.msra.mxu0 0
      %1641 = vmatprep.subr.bf16.mxu0 0
      %1642 = vmatpush1.bf16.msra.mxu0 0
      %1643 = vmatprep.subr.bf16.mxu0 0
      %1644 = vmatpush1.bf16.msra.mxu0 0
      %1645 = vmatprep.subr.bf16.mxu0 0
      %1646 = vmatpush1.bf16.msra.mxu0 0
      %1647 = vmatprep.subr.bf16.mxu0 0
      %1648 = vmatpush1.bf16.msra.mxu0 0
      %1649 = vmatprep.subr.bf16.mxu0 0
      %1650 = vmatpush1.bf16.msra.mxu0 0
      %1651 = vmatprep.subr.bf16.mxu0 0
      %1652 = vmatpush1.bf16.msra.mxu0 0
      %1653 = vmatprep.subr.bf16.mxu0 0
      %1654 = vmatpush1.bf16.msra.mxu0 0
      %1655 = vmatprep.mubr.bf16.mxu0 0
      %1656 = vmatmul.mubr.bf16.gmra.mrb[0].mxu0 %v419
      %v1657 = vpop.f32.mrb[0].mxu0
      %v1658 = vadd.f32 0.0, %v1657
      %v1659 = vpop.f32.mrb[0].mxu0
      %v1660 = vpop.f32.mrb[0].mxu0
      %v1661 = vadd.f32 0.0, %v1660
      %v1662 = vpop.f32.mrb[0].mxu0
      %1663 = vmatprep.mubr.bf16.mxu0 0
      %1664 = vmatmul.mubr.bf16.gmra.mrb[0].mxu0 %v422
      %v1665 = vpop.f32.mrb[0].mxu0
      %v1666 = vadd.f32 0.0, %v1665
      %v1667 = vpop.f32.mrb[0].mxu0
      %v1668 = vpop.f32.mrb[0].mxu0
      %v1669 = vadd.f32 0.0, %v1668
      %v1670 = vpop.f32.mrb[0].mxu0
      %1671 = vmatprep.mubr.bf16.mxu0 0
      %1672 = vmatmul.mubr.bf16.gmra.mrb[0].mxu0 %v425
      %v1673 = vpop.f32.mrb[0].mxu0
      %v1674 = vadd.f32 0.0, %v1673
      %v1675 = vpop.f32.mrb[0].mxu0
      %v1676 = vpop.f32.mrb[0].mxu0
      %v1677 = vadd.f32 0.0, %v1676
      %v1678 = vpop.f32.mrb[0].mxu0
      %1679 = vmatprep.mubr.bf16.mxu0 0
      %1680 = vmatmul.mubr.bf16.gmra.mrb[0].mxu0 %v428
      %v1681 = vpop.f32.mrb[0].mxu0
      %v1682 = vadd.f32 0.0, %v1681
      %v1683 = vpop.f32.mrb[0].mxu0
      %v1684 = vpop.f32.mrb[0].mxu0
      %v1685 = vadd.f32 0.0, %v1684
      %v1686 = vpop.f32.mrb[0].mxu0
      %1687 = vmatprep.mubr.bf16.mxu0 0
      %1688 = vmatmul.mubr.bf16.gmra.mrb[0].mxu0 %v431
      %v1689 = vpop.f32.mrb[0].mxu0
      %v1690 = vadd.f32 0.0, %v1689
      %v1691 = vpop.f32.mrb[0].mxu0
      %v1692 = vpop.f32.mrb[0].mxu0
      %v1693 = vadd.f32 0.0, %v1692
      %v1694 = vpop.f32.mrb[0].mxu0
      %1695 = vmatprep.mubr.bf16.mxu0 0
      %1696 = vmatmul.mubr.bf16.gmra.mrb[0].mxu0 %v434
      %v1697 = vpop.f32.mrb[0].mxu0
      %v1698 = vadd.f32 0.0, %v1697
      %v1699 = vpop.f32.mrb[0].mxu0
      %v1700 = vpop.f32.mrb[0].mxu0
      %v1701 = vadd.f32 0.0, %v1700
      %v1702 = vpop.f32.mrb[0].mxu0
      %1703 = vmatprep.mubr.bf16.mxu0 0
      %1704 = vmatmul.mubr.bf16.gmra.mrb[0].mxu0 %v437
      %v1705 = vpop.f32.mrb[0].mxu0
      %v1706 = vadd.f32 0.0, %v1705
      %v1707 = vpop.f32.mrb[0].mxu0
      %v1708 = vpop.f32.mrb[0].mxu0
      %v1709 = vadd.f32 0.0, %v1708
      %v1710 = vpop.f32.mrb[0].mxu0
      %1711 = vmatprep.mubr.bf16.mxu0 0
      %1712 = vmatmul.mubr.bf16.gmra.mrb[0].mxu0 %v440
      %v1713 = vpop.f32.mrb[0].mxu0
      %v1714 = vadd.f32 0.0, %v1713
      %v1715 = vpop.f32.mrb[0].mxu0
      %v1716 = vpop.f32.mrb[0].mxu0
      %v1717 = vadd.f32 0.0, %v1716
      %v1718 = vpop.f32.mrb[0].mxu0
      %1719 = vmatprep.mubr.bf16.mxu0 0
      %1720 = vmatmul.mubr.bf16.gmra.mrb[0].mxu0 %v443
      %v1721 = vpop.f32.mrb[0].mxu0
      %v1722 = vadd.f32 0.0, %v1721
      %v1723 = vpop.f32.mrb[0].mxu0
      %v1724 = vpop.f32.mrb[0].mxu0
      %v1725 = vadd.f32 0.0, %v1724
      %v1726 = vpop.f32.mrb[0].mxu0
      %1727 = vmatprep.mubr.bf16.mxu0 0
      %1728 = vmatmul.mubr.bf16.gmra.mrb[0].mxu0 %v446
      %v1729 = vpop.f32.mrb[0].mxu0
      %v1730 = vadd.f32 0.0, %v1729
      %v1731 = vpop.f32.mrb[0].mxu0
      %v1732 = vpop.f32.mrb[0].mxu0
      %v1733 = vadd.f32 0.0, %v1732
      %v1734 = vpop.f32.mrb[0].mxu0
      %1735 = vmatprep.mubr.bf16.mxu0 0
      %1736 = vmatmul.mubr.bf16.gmra.mrb[0].mxu0 %v449
      %v1737 = vpop.f32.mrb[0].mxu0
      %v1738 = vadd.f32 0.0, %v1737
      %v1739 = vpop.f32.mrb[0].mxu0
      %v1740 = vpop.f32.mrb[0].mxu0
      %v1741 = vadd.f32 0.0, %v1740
      %v1742 = vpop.f32.mrb[0].mxu0
      %1743 = vmatprep.mubr.bf16.mxu0 0
      %1744 = vmatmul.mubr.bf16.gmra.mrb[0].mxu0 %v452
      %v1745 = vpop.f32.mrb[0].mxu0
      %v1746 = vadd.f32 0.0, %v1745
      %v1747 = vpop.f32.mrb[0].mxu0
      %v1748 = vpop.f32.mrb[0].mxu0
      %v1749 = vadd.f32 0.0, %v1748
      %v1750 = vpop.f32.mrb[0].mxu0
      %1751 = vmatprep.mubr.bf16.mxu0 0
      %1752 = vmatmul.mubr.bf16.gmra.mrb[0].mxu0 %v455
      %v1753 = vpop.f32.mrb[0].mxu0
      %v1754 = vadd.f32 0.0, %v1753
      %v1755 = vpop.f32.mrb[0].mxu0
      %v1756 = vpop.f32.mrb[0].mxu0
      %v1757 = vadd.f32 0.0, %v1756
      %v1758 = vpop.f32.mrb[0].mxu0
      %1759 = vmatprep.mubr.bf16.mxu0 0
      %1760 = vmatmul.mubr.bf16.gmra.mrb[0].mxu0 %v458
      %v1761 = vpop.f32.mrb[0].mxu0
      %v1762 = vadd.f32 0.0, %v1761
      %v1763 = vpop.f32.mrb[0].mxu0
      %v1764 = vpop.f32.mrb[0].mxu0
      %v1765 = vadd.f32 0.0, %v1764
      %v1766 = vpop.f32.mrb[0].mxu0
      %1767 = vmatprep.mubr.bf16.mxu0 0
      %1768 = vmatmul.mubr.bf16.gmra.mrb[0].mxu0 %v461
      %v1769 = vpop.f32.mrb[0].mxu0
      %v1770 = vadd.f32 0.0, %v1769
      %v1771 = vpop.f32.mrb[0].mxu0
      %v1772 = vpop.f32.mrb[0].mxu0
      %v1773 = vadd.f32 0.0, %v1772
      %v1774 = vpop.f32.mrb[0].mxu0
      %1775 = vmatprep.mubr.bf16.mxu0 0
      %1776 = vmatmul.mubr.bf16.gmra.mrb[0].mxu0 %v464
      %v1777 = vpop.f32.mrb[0].mxu0
      %v1778 = vadd.f32 0.0, %v1777
      %v1779 = vpop.f32.mrb[0].mxu0
      %v1780 = vpop.f32.mrb[0].mxu0
      %v1781 = vadd.f32 0.0, %v1780
      %v1782 = vpop.f32.mrb[0].mxu0
      %1783 = vdwg.mxu0
      %v1784 = vpack.c.bf16 %v1661, %v1658
      %v1785 = vpack.c.bf16 %v1669, %v1666
      %v1786 = vpack.c.bf16 %v1677, %v1674
      %v1787 = vpack.c.bf16 %v1685, %v1682
      %v1788 = vpack.c.bf16 %v1693, %v1690
      %v1789 = vpack.c.bf16 %v1701, %v1698
      %v1790 = vpack.c.bf16 %v1709, %v1706
      %v1791 = vpack.c.bf16 %v1717, %v1714
      %v1792 = vpack.c.bf16 %v1725, %v1722
      %v1793 = vpack.c.bf16 %v1733, %v1730
      %v1794 = vpack.c.bf16 %v1741, %v1738
      %v1795 = vpack.c.bf16 %v1749, %v1746
      %v1796 = vpack.c.bf16 %v1757, %v1754
      %v1797 = vpack.c.bf16 %v1765, %v1762
      %v1798 = vpack.c.bf16 %v1773, %v1770
      %v1799 = vpack.c.bf16 %v1781, %v1778
      %1816 = vrot.lane.b32.xlu0 %v1784, 8
      %v1817 = vpop.permute.xlu0 %1816
      %1818 = vrot.lane.b32.xlu0 %v1785, 8
      %v1819 = vpop.permute.xlu0 %1818
      %1820 = vrot.lane.b32.xlu0 %v1786, 8
      %v1821 = vpop.permute.xlu0 %1820
      %1822 = vrot.lane.b32.xlu0 %v1787, 8
      %v1823 = vpop.permute.xlu0 %1822
      %1824 = vrot.lane.b32.xlu0 %v1788, 8
      %v1825 = vpop.permute.xlu0 %1824
      %1826 = vrot.lane.b32.xlu0 %v1789, 8
      %v1827 = vpop.permute.xlu0 %1826
      %1828 = vrot.lane.b32.xlu0 %v1790, 8
      %v1829 = vpop.permute.xlu0 %1828
      %1830 = vrot.lane.b32.xlu0 %v1791, 8
      %v1831 = vpop.permute.xlu0 %1830
      %1832 = vrot.lane.b32.xlu0 %v1792, 8
      %v1833 = vpop.permute.xlu0 %1832
      %1834 = vrot.lane.b32.xlu0 %v1793, 8
      %v1835 = vpop.permute.xlu0 %1834
      %1836 = vrot.lane.b32.xlu0 %v1794, 8
      %v1837 = vpop.permute.xlu0 %1836
      %1838 = vrot.lane.b32.xlu0 %v1795, 8
      %v1839 = vpop.permute.xlu0 %1838
      %1840 = vrot.lane.b32.xlu0 %v1796, 8
      %v1841 = vpop.permute.xlu0 %1840
      %1842 = vrot.lane.b32.xlu0 %v1797, 8
      %v1843 = vpop.permute.xlu0 %1842
      %1844 = vrot.lane.b32.xlu0 %v1798, 8
      %v1845 = vpop.permute.xlu0 %1844
      %1846 = vrot.lane.b32.xlu0 %v1799, 8
      %v1847 = vpop.permute.xlu0 %1846
      %v1849 = vsel %vm942, %v925, %v1817
      %v1851 = vsel %vm942, %v926, %v1819
      %v1853 = vsel %vm942, %v927, %v1821
      %v1855 = vsel %vm942, %v928, %v1823
      %v1857 = vsel %vm942, %v929, %v1825
      %v1859 = vsel %vm942, %v930, %v1827
      %v1861 = vsel %vm942, %v931, %v1829
      %v1863 = vsel %vm942, %v932, %v1831
      %v1865 = vsel %vm942, %v933, %v1833
      %v1867 = vsel %vm942, %v934, %v1835
      %v1869 = vsel %vm942, %v935, %v1837
      %v1871 = vsel %vm942, %v936, %v1839
      %v1873 = vsel %vm942, %v937, %v1841
      %v1875 = vsel %vm942, %v938, %v1843
      %v1877 = vsel %vm942, %v939, %v1845
      %v1879 = vsel %vm942, %v940, %v1847
      %v1896 = vunpack.c.l.b16 %v1849
      %v1897 = vunpack.c.h.b16 %v1849
      %v1898 = vunpack.c.l.b16 %v1851
      %v1899 = vunpack.c.h.b16 %v1851
      %v1900 = vunpack.c.l.b16 %v1853
      %v1901 = vunpack.c.h.b16 %v1853
      %v1902 = vunpack.c.l.b16 %v1855
      %v1903 = vunpack.c.h.b16 %v1855
      %v1904 = vunpack.c.l.b16 %v1857
      %v1905 = vunpack.c.h.b16 %v1857
      %v1906 = vunpack.c.l.b16 %v1859
      %v1907 = vunpack.c.h.b16 %v1859
      %v1908 = vunpack.c.l.b16 %v1861
      %v1909 = vunpack.c.h.b16 %v1861
      %v1910 = vunpack.c.l.b16 %v1863
      %v1911 = vunpack.c.h.b16 %v1863
      %v1912 = vunpack.c.l.b16 %v1865
      %v1913 = vunpack.c.h.b16 %v1865
      %v1914 = vunpack.c.l.b16 %v1867
      %v1915 = vunpack.c.h.b16 %v1867
      %v1916 = vunpack.c.l.b16 %v1869
      %v1917 = vunpack.c.h.b16 %v1869
      %v1918 = vunpack.c.l.b16 %v1871
      %v1919 = vunpack.c.h.b16 %v1871
      %v1920 = vunpack.c.l.b16 %v1873
      %v1921 = vunpack.c.h.b16 %v1873
      %v1922 = vunpack.c.l.b16 %v1875
      %v1923 = vunpack.c.h.b16 %v1875
      %v1924 = vunpack.c.l.b16 %v1877
      %v1925 = vunpack.c.h.b16 %v1877
      %v1926 = vunpack.c.l.b16 %v1879
      %v1927 = vunpack.c.h.b16 %v1879
      %v1928 = vpack.c.b16 %v1896, %v1896
      %v1929 = vpack.c.b16 %v1897, %v1897
      %v1930 = vpack.c.b16 %v1898, %v1898
      %v1931 = vpack.c.b16 %v1899, %v1899
      %v1932 = vpack.c.b16 %v1900, %v1900
      %v1933 = vpack.c.b16 %v1901, %v1901
      %v1934 = vpack.c.b16 %v1902, %v1902
      %v1935 = vpack.c.b16 %v1903, %v1903
      %v1936 = vpack.c.b16 %v1904, %v1904
      %v1937 = vpack.c.b16 %v1905, %v1905
      %v1938 = vpack.c.b16 %v1906, %v1906
      %v1939 = vpack.c.b16 %v1907, %v1907
      %v1940 = vpack.c.b16 %v1908, %v1908
      %v1941 = vpack.c.b16 %v1909, %v1909
      %v1942 = vpack.c.b16 %v1910, %v1910
      %v1943 = vpack.c.b16 %v1911, %v1911
      %v1944 = vpack.c.b16 %v1912, %v1912
      %v1945 = vpack.c.b16 %v1913, %v1913
      %v1946 = vpack.c.b16 %v1914, %v1914
      %v1947 = vpack.c.b16 %v1915, %v1915
      %v1948 = vpack.c.b16 %v1916, %v1916
      %v1949 = vpack.c.b16 %v1917, %v1917
      %v1950 = vpack.c.b16 %v1918, %v1918
      %v1951 = vpack.c.b16 %v1919, %v1919
      %v1952 = vpack.c.b16 %v1920, %v1920
      %v1953 = vpack.c.b16 %v1921, %v1921
      %v1954 = vpack.c.b16 %v1922, %v1922
      %v1955 = vpack.c.b16 %v1923, %v1923
      %v1956 = vpack.c.b16 %v1924, %v1924
      %v1957 = vpack.c.b16 %v1925, %v1925
      %v1958 = vpack.c.b16 %v1926, %v1926
      %v1959 = vpack.c.b16 %v1927, %v1927
      %vm1992 = vcmask 125952
      %1993 = vst.msk [vmem:[%s294] sm:$0xf] %vm1992, %v1928
      %1994 = vst.msk [vmem:[%s294 + $0x4] sm:$0xf] %vm1992, %v1929
      %1995 = vst.msk [vmem:[%s294 + $0x8] sm:$0xf] %vm1992, %v1930
      %1996 = vst.msk [vmem:[%s294 + $0xc] sm:$0xf] %vm1992, %v1931
      %1997 = vst.msk [vmem:[%s294 + $0x10] sm:$0xf] %vm1992, %v1932
      %1998 = vst.msk [vmem:[%s294 + $0x14] sm:$0xf] %vm1992, %v1933
      %1999 = vst.msk [vmem:[%s294 + $0x18] sm:$0xf] %vm1992, %v1934
      %2000 = vst.msk [vmem:[%s294 + $0x1c] sm:$0xf] %vm1992, %v1935
      %2001 = vst.msk [vmem:[%s294 + $0x20] sm:$0xf] %vm1992, %v1936
      %2002 = vst.msk [vmem:[%s294 + $0x24] sm:$0xf] %vm1992, %v1937
      %2003 = vst.msk [vmem:[%s294 + $0x28] sm:$0xf] %vm1992, %v1938
      %2004 = vst.msk [vmem:[%s294 + $0x2c] sm:$0xf] %vm1992, %v1939
      %2005 = vst.msk [vmem:[%s294 + $0x30] sm:$0xf] %vm1992, %v1940
      %2006 = vst.msk [vmem:[%s294 + $0x34] sm:$0xf] %vm1992, %v1941
      %2007 = vst.msk [vmem:[%s294 + $0x38] sm:$0xf] %vm1992, %v1942
      %2008 = vst.msk [vmem:[%s294 + $0x3c] sm:$0xf] %vm1992, %v1943
      %2009 = vst.msk [vmem:[%s294 + $0x40] sm:$0xf] %vm1992, %v1944
      %2010 = vst.msk [vmem:[%s294 + $0x44] sm:$0xf] %vm1992, %v1945
      %2011 = vst.msk [vmem:[%s294 + $0x48] sm:$0xf] %vm1992, %v1946
      %2012 = vst.msk [vmem:[%s294 + $0x4c] sm:$0xf] %vm1992, %v1947
      %2013 = vst.msk [vmem:[%s294 + $0x50] sm:$0xf] %vm1992, %v1948
      %2014 = vst.msk [vmem:[%s294 + $0x54] sm:$0xf] %vm1992, %v1949
      %2015 = vst.msk [vmem:[%s294 + $0x58] sm:$0xf] %vm1992, %v1950
      %2016 = vst.msk [vmem:[%s294 + $0x5c] sm:$0xf] %vm1992, %v1951
      %2017 = vst.msk [vmem:[%s294 + $0x60] sm:$0xf] %vm1992, %v1952
      %2018 = vst.msk [vmem:[%s294 + $0x64] sm:$0xf] %vm1992, %v1953
      %2019 = vst.msk [vmem:[%s294 + $0x68] sm:$0xf] %vm1992, %v1954
      %2020 = vst.msk [vmem:[%s294 + $0x6c] sm:$0xf] %vm1992, %v1955
      %2021 = vst.msk [vmem:[%s294 + $0x70] sm:$0xf] %vm1992, %v1956
      %2022 = vst.msk [vmem:[%s294 + $0x74] sm:$0xf] %vm1992, %v1957
      %2023 = vst.msk [vmem:[%s294 + $0x78] sm:$0xf] %vm1992, %v1958
      %2024 = vst.msk [vmem:[%s294 + $0x7c] sm:$0xf] %vm1992, %v1959
      %s2025 = smul.u32 32, %s19
      %p2026 = scmp.lt.s32.totalorder %s2025, 63
      %s2027 = scalar_select %p2026, %s2025, 63
      %s2028 = smul.addr %s2027, 4
      %s2029 = scalar_lea.vmem %s6, %s2028
      %s2030 = smul.u32 32, %s19
      %p2031 = scmp.lt.s32.totalorder %s2030, 63
      %s2032 = scalar_select %p2031, %s2030, 63
      %s2033 = smul.addr %s2032, 4
      %s2034 = scalar_lea.vmem %s7, %s2033
      // Predicated region
      $region45: #{bottleneck_csp_forward.2} parent=43 // pred_check
        %p2035 = pneg %p168
      $region46: #{bottleneck_csp_forward.2} parent=43 // pred_check_branch
        %2037 = sbr.rel (%p2035) target = $region48
      $region47: #{bottleneck_csp_forward.2} parent=43 // pred_region
        %s2038 = smul.u32 32, %s19
      $region48: #{bottleneck_csp_forward.2} parent=43 // pred_fallthru
        _
      // Predicated region
      $region49: #{bottleneck_csp_forward.2} parent=43 // pred_check
        %p2039 = pneg %p194
      $region50: #{bottleneck_csp_forward.2} parent=43 // pred_check_branch
        %2041 = sbr.rel (%p2039) target = $region52
      $region51: #{bottleneck_csp_forward.2} parent=43 // pred_region
        %s2042 = smul.u32 32, %s19
      $region52: #{bottleneck_csp_forward.2} parent=43 // pred_fallthru
        _
    $region44: #{bottleneck_csp_forward.2} parent=5 // pred_fallthru
      _
    %p2043 = scmp.le.s32.totalorder 2, %s14
    // Predicated region
    $region53: #{bottleneck_csp_forward.2} parent=5 // pred_check
      %p2044 = pneg %p2043
    $region54: #{bottleneck_csp_forward.2} parent=5 // pred_check_branch
      %2046 = sbr.rel (%p2044) target = $region56
    $region55: #{bottleneck_csp_forward.2} parent=5 // pred_region
      %s2047 = ssub.s32 %s14, 2
      // Predicated region
      $region57: #{bottleneck_csp_forward.2} parent=55 // pred_check
        %p2048 = pneg %p174
      $region58: #{bottleneck_csp_forward.2} parent=55 // pred_check_branch
        %2050 = sbr.rel (%p2048) target = $region60
      $region59: #{bottleneck_csp_forward.2} parent=55 // pred_region
        %s2051 = smul.u32 32, %s20
        %p2052 = scmp.lt.s32.totalorder %s2051, 63
        %s2053 = scalar_select %p2052, %s2051, 63
        %s2054 = smul.addr %s2053, 4
        %s2055 = scalar_lea.vmem %s6, %s2054
      $region60: #{bottleneck_csp_forward.2} parent=55 // pred_fallthru
        _
      // Predicated region
      $region61: #{bottleneck_csp_forward.2} parent=55 // pred_check
        %p2056 = pneg %p200
      $region62: #{bottleneck_csp_forward.2} parent=55 // pred_check_branch
        %2058 = sbr.rel (%p2056) target = $region64
      $region63: #{bottleneck_csp_forward.2} parent=55 // pred_region
        %s2059 = smul.u32 32, %s20
        %p2060 = scmp.lt.s32.totalorder %s2059, 63
        %s2061 = scalar_select %p2060, %s2059, 63
        %s2062 = smul.addr %s2061, 4
        %s2063 = scalar_lea.vmem %s7, %s2062
      $region64: #{bottleneck_csp_forward.2} parent=55 // pred_fallthru
        _
    $region56: #{bottleneck_csp_forward.2} parent=5 // pred_fallthru
      _
  $region6: #{bottleneck_csp_forward.2} parent=0 // loop_footer
    %s18 = sadd.s32 1, %s14
  $region7: #{bottleneck_csp_forward.2} parent=0 // loop_footer_branch
    %13 = sbr.rel target = $region3
  $region8: #{bottleneck_csp_forward.2} parent=0 // loop_exit
    _

// kernel: bottleneck_csp_forward.3
$region0: #{bottleneck_csp_forward.3}
  #allocation0 [shape = 'u32[]', space=smem, size = 0x4, offset = 0x4, fixed_abs, tag = 'smem constant byte address 0x4 - core index']
  #allocation1 [shape = 'u32[144,128]{1,0:T(1,128)}', space=vmem, size = 0x12000, scoped, tag = 'internal scratch']
  %s0 = inlined_call_operand.vmem [shape: bf16[2,16,18,8], index: 0, kind: input, shape index: {}, may-alias: {0,1,2}]
  %s1 = inlined_call_operand.vmem [shape: bf16[2,16,18,8], index: 1, kind: input, shape index: {}, may-alias: {0,1,2}]
  %s2 = inlined_call_operand.vmem [shape: bf16[2,16,18,8], index: 2, kind: input, shape index: {}, may-alias: {0,1,2}]
  %s3 = inlined_call_operand.vmem [shape: bf16[2,16,16,16], index: 3, kind: input, shape index: {}]
  %s4 = inlined_call_operand.vmem [shape: bf16[72,8], index: 4, kind: input, shape index: {}]
  %s5 = inlined_call_operand.vmem [shape: f32[2,8], index: 5, kind: input, shape index: {}]
  %s6 = inlined_call_operand.vmem [shape: bf16[8,8], index: 6, kind: input, shape index: {}]
  %s7 = inlined_call_operand.vmem [shape: f32[2,8], index: 7, kind: input, shape index: {}]
  %s8 = inlined_call_operand.vmem [shape: f32[2,8], index: 8, kind: input, shape index: {}]
  %s9 = inlined_call_operand.vmem [shape: bf16[16,16], index: 9, kind: input, shape index: {}]
  %s10 = inlined_call_operand.vmem [shape: f32[2,16], index: 10, kind: input, shape index: {}]
  %s11 = inlined_call_operand.vmem [shape: bf16[2,16,16,16], index: 11, kind: output, shape index: {}]
  %s12 = sld [smem:[#allocation0]]
  $region77: #{bottleneck_csp_forward.3} parent=0
    _
  %s14 = ssub.s32 1, %s12
  %s15 = scalar_select 0, %s14, %s12
  loop: start=0, step=1, limit=4
  $region2: #{bottleneck_csp_forward.3} parent=0 // loop_pre_header
    _
  $region3: #{bottleneck_csp_forward.3} parent=0 // loop_header
    %s17 = sphi 0, %s21
    %p18 = scmp.ge.s32.totalorder %s17, 4
    %s24 = sphi 0, %s36
    %s25 = sphi 0, %s32
    %s26 = sphi 0, %s24
    %s27 = sphi 0, %s25
    %s28 = sphi 0, %s26
    %s29 = sphi 0, %s27
    %s41 = sphi 0, %s43
    %s44 = sphi 0, %s41
    %s45 = sphi 0, %s44
    %s61 = sphi 0, %s45
    %s77 = sphi 0, %s79
    %s80 = sphi 0, %s77
    %s81 = sphi 0, %s80
    %s97 = sphi 0, %s81
    %s113 = sphi 0, %s115
    %s116 = sphi 0, %s113
    %s117 = sphi 0, %s116
    %s133 = sphi 0, %s117
    %s141 = sphi 0, %s143
    %s144 = sphi 0, %s141
    %s145 = sphi 0, %s144
    %s161 = sphi 0, %s145
    %s165 = sphi 0, %s165
    %s167 = sphi 0, %s165
    %s168 = sphi 0, %s167
    %s182 = sphi 0, %s168
    %s186 = sphi 0, %s186
    %s188 = sphi 0, %s186
    %s189 = sphi 0, %s188
    %s203 = sphi 0, %s189
    %s207 = sphi 0, %s207
    %s209 = sphi 0, %s207
    %s210 = sphi 0, %s209
    %s224 = sphi 0, %s210
    %s228 = sphi 0, %s228
    %s230 = sphi 0, %s228
    %s231 = sphi 0, %s230
    %s245 = sphi 0, %s231
    %s249 = sphi 0, %s249
    %s251 = sphi 0, %s249
    %s252 = sphi 0, %s251
    %s266 = sphi 0, %s252
    %s270 = sphi 0, %s270
    %s272 = sphi 0, %s270
    %s273 = sphi 0, %s272
    %s287 = sphi 0, %s273
    %s291 = sphi 0, %s291
    %s293 = sphi 0, %s291
    %s294 = sphi 0, %s293
    %s308 = sphi 0, %s294
    %s316 = sphi 0, %s318
    %s319 = sphi 0, %s316
    %s320 = sphi 0, %s319
    %s336 = sphi 0, %s320
  $region4: #{bottleneck_csp_forward.3} parent=0 // loop_header_branch
    %20 = sbr.rel (%p18) target = $region8
  $region5: #{bottleneck_csp_forward.3} parent=0 // loop_body
    %s22 = ssub.s32 %s17, 1
    %s23 = ssub.s32 %s17, 2
    %s30 = sadd.s32 1, %s25
    %p31 = scmp.ge.s32.totalorder %s30, 1
    %s32 = scalar_select %p31, 0, %s30
    %s33 = sadd.s32 1, %s24
    %s34 = scalar_select %p31, %s33, %s24
    %p35 = scmp.ge.s32.totalorder %s34, 2
    %s36 = scalar_select %p35, 0, %s34
    %s37 = ssub.s32 %s24, %s36
    %s38 = ssub.s32 %s25, %s32
    %s39 = sor.u32 %s37, %s38
    %p40 = scmp.eq.s32.totalorder %s39, 0
    %s42 = sadd.s32 %s41, 1
    %s43 = scalar_select %p40, %s41, %s42
    %p46 = pneg %p40
    %p47 = scmp.eq.s32.totalorder %s17, 1
    %p48 = por %p46, %p47
    %p49 = scmp.ne.s32.totalorder %s41, %s44
    %p50 = scmp.eq.s32.totalorder %s17, 0
    %p51 = por %p49, %p50
    %p52 = scmp.ne.s32.totalorder %s41, %s44
    %p53 = scmp.eq.s32.totalorder %s22, 1
    %p54 = por %p52, %p53
    %p55 = scmp.ne.s32.totalorder %s44, %s45
    %p56 = scmp.eq.s32.totalorder %s22, 0
    %p57 = por %p55, %p56
    %p58 = scmp.ne.s32.totalorder %s44, %s45
    %p59 = scmp.eq.s32.totalorder %s23, 1
    %p60 = por %p58, %p59
    %p62 = scmp.ne.s32.totalorder %s45, %s61
    %p63 = scmp.eq.s32.totalorder %s23, 0
    %p64 = por %p62, %p63
    %s65 = smul.u32 %s25, 16
    %s66 = ssub.s32 %s65, 1
    %p67 = scmp.gt.s32.totalorder %s66, 0
    %s68 = scalar_select %p67, %s66, 0
    %s69 = smul.u32 %s32, 16
    %s70 = ssub.s32 %s69, 1
    %p71 = scmp.gt.s32.totalorder %s70, 0
    %s72 = scalar_select %p71, %s70, 0
    %s73 = ssub.s32 %s24, %s36
    %s74 = ssub.s32 %s68, %s72
    %s75 = sor.u32 %s73, %s74
    %p76 = scmp.eq.s32.totalorder %s75, 0
    %s78 = sadd.s32 %s77, 1
    %s79 = scalar_select %p76, %s77, %s78
    %p82 = pneg %p76
    %p83 = scmp.eq.s32.totalorder %s17, 1
    %p84 = por %p82, %p83
    %p85 = scmp.ne.s32.totalorder %s77, %s80
    %p86 = scmp.eq.s32.totalorder %s17, 0
    %p87 = por %p85, %p86
    %p88 = scmp.ne.s32.totalorder %s77, %s80
    %p89 = scmp.eq.s32.totalorder %s22, 1
    %p90 = por %p88, %p89
    %p91 = scmp.ne.s32.totalorder %s80, %s81
    %p92 = scmp.eq.s32.totalorder %s22, 0
    %p93 = por %p91, %p92
    %p94 = scmp.ne.s32.totalorder %s80, %s81
    %p95 = scmp.eq.s32.totalorder %s23, 1
    %p96 = por %p94, %p95
    %p98 = scmp.ne.s32.totalorder %s81, %s97
    %p99 = scmp.eq.s32.totalorder %s23, 0
    %p100 = por %p98, %p99
    %s101 = smul.u32 %s25, 16
    %s102 = sadd.s32 %s101, 16
    %p103 = scmp.lt.s32.totalorder %s102, 15
    %s104 = scalar_select %p103, %s102, 15
    %s105 = smul.u32 %s32, 16
    %s106 = sadd.s32 %s105, 16
    %p107 = scmp.lt.s32.totalorder %s106, 15
    %s108 = scalar_select %p107, %s106, 15
    %s109 = ssub.s32 %s24, %s36
    %s110 = ssub.s32 %s104, %s108
    %s111 = sor.u32 %s109, %s110
    %p112 = scmp.eq.s32.totalorder %s111, 0
    %s114 = sadd.s32 %s113, 1
    %s115 = scalar_select %p112, %s113, %s114
    %p118 = pneg %p112
    %p119 = scmp.eq.s32.totalorder %s17, 1
    %p120 = por %p118, %p119
    %p121 = scmp.ne.s32.totalorder %s113, %s116
    %p122 = scmp.eq.s32.totalorder %s17, 0
    %p123 = por %p121, %p122
    %p124 = scmp.ne.s32.totalorder %s113, %s116
    %p125 = scmp.eq.s32.totalorder %s22, 1
    %p126 = por %p124, %p125
    %p127 = scmp.ne.s32.totalorder %s116, %s117
    %p128 = scmp.eq.s32.totalorder %s22, 0
    %p129 = por %p127, %p128
    %p130 = scmp.ne.s32.totalorder %s116, %s117
    %p131 = scmp.eq.s32.totalorder %s23, 1
    %p132 = por %p130, %p131
    %p134 = scmp.ne.s32.totalorder %s117, %s133
    %p135 = scmp.eq.s32.totalorder %s23, 0
    %p136 = por %p134, %p135
    %s137 = ssub.s32 %s24, %s36
    %s138 = ssub.s32 %s25, %s32
    %s139 = sor.u32 %s137, %s138
    %p140 = scmp.eq.s32.totalorder %s139, 0
    %s142 = sadd.s32 %s141, 1
    %s143 = scalar_select %p140, %s141, %s142
    %p146 = pneg %p140
    %p147 = scmp.eq.s32.totalorder %s17, 1
    %p148 = por %p146, %p147
    %p149 = scmp.ne.s32.totalorder %s141, %s144
    %p150 = scmp.eq.s32.totalorder %s17, 0
    %p151 = por %p149, %p150
    %p152 = scmp.ne.s32.totalorder %s141, %s144
    %p153 = scmp.eq.s32.totalorder %s22, 1
    %p154 = por %p152, %p153
    %p155 = scmp.ne.s32.totalorder %s144, %s145
    %p156 = scmp.eq.s32.totalorder %s22, 0
    %p157 = por %p155, %p156
    %p158 = scmp.ne.s32.totalorder %s144, %s145
    %p159 = scmp.eq.s32.totalorder %s23, 1
    %p160 = por %p158, %p159
    %p162 = scmp.ne.s32.totalorder %s145, %s161
    %p163 = scmp.eq.s32.totalorder %s23, 0
    %p164 = por %p162, %p163
    %s166 = sadd.s32 %s165, 1
    %p169 = scmp.eq.s32.totalorder %s17, 1
    %p170 = scmp.ne.s32.totalorder %s165, %s167
    %p171 = scmp.eq.s32.totalorder %s17, 0
    %p172 = por %p170, %p171
    %p173 = scmp.ne.s32.totalorder %s165, %s167
    %p174 = scmp.eq.s32.totalorder %s22, 1
    %p175 = por %p173, %p174
    %p176 = scmp.ne.s32.totalorder %s167, %s168
    %p177 = scmp.eq.s32.totalorder %s22, 0
    %p178 = por %p176, %p177
    %p179 = scmp.ne.s32.totalorder %s167, %s168
    %p180 = scmp.eq.s32.totalorder %s23, 1
    %p181 = por %p179, %p180
    %p183 = scmp.ne.s32.totalorder %s168, %s182
    %p184 = scmp.eq.s32.totalorder %s23, 0
    %p185 = por %p183, %p184
    %s187 = sadd.s32 %s186, 1
    %p190 = scmp.eq.s32.totalorder %s17, 1
    %p191 = scmp.ne.s32.totalorder %s186, %s188
    %p192 = scmp.eq.s32.totalorder %s17, 0
    %p193 = por %p191, %p192
    %p194 = scmp.ne.s32.totalorder %s186, %s188
    %p195 = scmp.eq.s32.totalorder %s22, 1
    %p196 = por %p194, %p195
    %p197 = scmp.ne.s32.totalorder %s188, %s189
    %p198 = scmp.eq.s32.totalorder %s22, 0
    %p199 = por %p197, %p198
    %p200 = scmp.ne.s32.totalorder %s188, %s189
    %p201 = scmp.eq.s32.totalorder %s23, 1
    %p202 = por %p200, %p201
    %p204 = scmp.ne.s32.totalorder %s189, %s203
    %p205 = scmp.eq.s32.totalorder %s23, 0
    %p206 = por %p204, %p205
    %s208 = sadd.s32 %s207, 1
    %p211 = scmp.eq.s32.totalorder %s17, 1
    %p212 = scmp.ne.s32.totalorder %s207, %s209
    %p213 = scmp.eq.s32.totalorder %s17, 0
    %p214 = por %p212, %p213
    %p215 = scmp.ne.s32.totalorder %s207, %s209
    %p216 = scmp.eq.s32.totalorder %s22, 1
    %p217 = por %p215, %p216
    %p218 = scmp.ne.s32.totalorder %s209, %s210
    %p219 = scmp.eq.s32.totalorder %s22, 0
    %p220 = por %p218, %p219
    %p221 = scmp.ne.s32.totalorder %s209, %s210
    %p222 = scmp.eq.s32.totalorder %s23, 1
    %p223 = por %p221, %p222
    %p225 = scmp.ne.s32.totalorder %s210, %s224
    %p226 = scmp.eq.s32.totalorder %s23, 0
    %p227 = por %p225, %p226
    %s229 = sadd.s32 %s228, 1
    %p232 = scmp.eq.s32.totalorder %s17, 1
    %p233 = scmp.ne.s32.totalorder %s228, %s230
    %p234 = scmp.eq.s32.totalorder %s17, 0
    %p235 = por %p233, %p234
    %p236 = scmp.ne.s32.totalorder %s228, %s230
    %p237 = scmp.eq.s32.totalorder %s22, 1
    %p238 = por %p236, %p237
    %p239 = scmp.ne.s32.totalorder %s230, %s231
    %p240 = scmp.eq.s32.totalorder %s22, 0
    %p241 = por %p239, %p240
    %p242 = scmp.ne.s32.totalorder %s230, %s231
    %p243 = scmp.eq.s32.totalorder %s23, 1
    %p244 = por %p242, %p243
    %p246 = scmp.ne.s32.totalorder %s231, %s245
    %p247 = scmp.eq.s32.totalorder %s23, 0
    %p248 = por %p246, %p247
    %s250 = sadd.s32 %s249, 1
    %p253 = scmp.eq.s32.totalorder %s17, 1
    %p254 = scmp.ne.s32.totalorder %s249, %s251
    %p255 = scmp.eq.s32.totalorder %s17, 0
    %p256 = por %p254, %p255
    %p257 = scmp.ne.s32.totalorder %s249, %s251
    %p258 = scmp.eq.s32.totalorder %s22, 1
    %p259 = por %p257, %p258
    %p260 = scmp.ne.s32.totalorder %s251, %s252
    %p261 = scmp.eq.s32.totalorder %s22, 0
    %p262 = por %p260, %p261
    %p263 = scmp.ne.s32.totalorder %s251, %s252
    %p264 = scmp.eq.s32.totalorder %s23, 1
    %p265 = por %p263, %p264
    %p267 = scmp.ne.s32.totalorder %s252, %s266
    %p268 = scmp.eq.s32.totalorder %s23, 0
    %p269 = por %p267, %p268
    %s271 = sadd.s32 %s270, 1
    %p274 = scmp.eq.s32.totalorder %s17, 1
    %p275 = scmp.ne.s32.totalorder %s270, %s272
    %p276 = scmp.eq.s32.totalorder %s17, 0
    %p277 = por %p275, %p276
    %p278 = scmp.ne.s32.totalorder %s270, %s272
    %p279 = scmp.eq.s32.totalorder %s22, 1
    %p280 = por %p278, %p279
    %p281 = scmp.ne.s32.totalorder %s272, %s273
    %p282 = scmp.eq.s32.totalorder %s22, 0
    %p283 = por %p281, %p282
    %p284 = scmp.ne.s32.totalorder %s272, %s273
    %p285 = scmp.eq.s32.totalorder %s23, 1
    %p286 = por %p284, %p285
    %p288 = scmp.ne.s32.totalorder %s273, %s287
    %p289 = scmp.eq.s32.totalorder %s23, 0
    %p290 = por %p288, %p289
    %s292 = sadd.s32 %s291, 1
    %p295 = scmp.eq.s32.totalorder %s17, 1
    %p296 = scmp.ne.s32.totalorder %s291, %s293
    %p297 = scmp.eq.s32.totalorder %s17, 0
    %p298 = por %p296, %p297
    %p299 = scmp.ne.s32.totalorder %s291, %s293
    %p300 = scmp.eq.s32.totalorder %s22, 1
    %p301 = por %p299, %p300
    %p302 = scmp.ne.s32.totalorder %s293, %s294
    %p303 = scmp.eq.s32.totalorder %s22, 0
    %p304 = por %p302, %p303
    %p305 = scmp.ne.s32.totalorder %s293, %s294
    %p306 = scmp.eq.s32.totalorder %s23, 1
    %p307 = por %p305, %p306
    %p309 = scmp.ne.s32.totalorder %s294, %s308
    %p310 = scmp.eq.s32.totalorder %s23, 0
    %p311 = por %p309, %p310
    %s312 = ssub.s32 %s24, %s36
    %s313 = ssub.s32 %s25, %s32
    %s314 = sor.u32 %s312, %s313
    %p315 = scmp.eq.s32.totalorder %s314, 0
    %s317 = sadd.s32 %s316, 1
    %s318 = scalar_select %p315, %s316, %s317
    %p321 = pneg %p315
    %p322 = scmp.eq.s32.totalorder %s17, 1
    %p323 = por %p321, %p322
    %p324 = scmp.ne.s32.totalorder %s316, %s319
    %p325 = scmp.eq.s32.totalorder %s17, 0
    %p326 = por %p324, %p325
    %p327 = scmp.ne.s32.totalorder %s316, %s319
    %p328 = scmp.eq.s32.totalorder %s22, 1
    %p329 = por %p327, %p328
    %p330 = scmp.ne.s32.totalorder %s319, %s320
    %p331 = scmp.eq.s32.totalorder %s22, 0
    %p332 = por %p330, %p331
    %p333 = scmp.ne.s32.totalorder %s319, %s320
    %p334 = scmp.eq.s32.totalorder %s23, 1
    %p335 = por %p333, %p334
    %p337 = scmp.ne.s32.totalorder %s320, %s336
    %p338 = scmp.eq.s32.totalorder %s23, 0
    %p339 = por %p337, %p338
    %p340 = scmp.le.s32.totalorder 1, %s17
    %p341 = scmp.lt.s32.totalorder %s17, 3
    %p342 = pnand %p340, %p341
    %p343 = pneg %p342
    // Predicated region
    $region9: #{bottleneck_csp_forward.3} parent=5 // pred_check
      _
    $region10: #{bottleneck_csp_forward.3} parent=5 // pred_check_branch
      %345 = sbr.rel (%p342) target = $region12
    $region11: #{bottleneck_csp_forward.3} parent=5 // pred_region
      %s346 = ssub.s32 %s17, 1
      // Predicated region
      $region13: #{bottleneck_csp_forward.3} parent=11 // pred_check
        %p347 = pneg %p178
      $region14: #{bottleneck_csp_forward.3} parent=11 // pred_check_branch
        %349 = sbr.rel (%p347) target = $region16
      $region15: #{bottleneck_csp_forward.3} parent=11 // pred_region
        _
      $region16: #{bottleneck_csp_forward.3} parent=11 // pred_fallthru
        _
      // Predicated region
      $region17: #{bottleneck_csp_forward.3} parent=11 // pred_check
        %p350 = pneg %p199
      $region18: #{bottleneck_csp_forward.3} parent=11 // pred_check_branch
        %352 = sbr.rel (%p350) target = $region20
      $region19: #{bottleneck_csp_forward.3} parent=11 // pred_region
        _
      $region20: #{bottleneck_csp_forward.3} parent=11 // pred_fallthru
        _
      // Predicated region
      $region21: #{bottleneck_csp_forward.3} parent=11 // pred_check
        %p353 = pneg %p220
      $region22: #{bottleneck_csp_forward.3} parent=11 // pred_check_branch
        %355 = sbr.rel (%p353) target = $region24
      $region23: #{bottleneck_csp_forward.3} parent=11 // pred_region
        _
      $region24: #{bottleneck_csp_forward.3} parent=11 // pred_fallthru
        _
      // Predicated region
      $region25: #{bottleneck_csp_forward.3} parent=11 // pred_check
        %p356 = pneg %p241
      $region26: #{bottleneck_csp_forward.3} parent=11 // pred_check_branch
        %358 = sbr.rel (%p356) target = $region28
      $region27: #{bottleneck_csp_forward.3} parent=11 // pred_region
        _
      $region28: #{bottleneck_csp_forward.3} parent=11 // pred_fallthru
        _
      // Predicated region
      $region29: #{bottleneck_csp_forward.3} parent=11 // pred_check
        %p359 = pneg %p262
      $region30: #{bottleneck_csp_forward.3} parent=11 // pred_check_branch
        %361 = sbr.rel (%p359) target = $region32
      $region31: #{bottleneck_csp_forward.3} parent=11 // pred_region
        _
      $region32: #{bottleneck_csp_forward.3} parent=11 // pred_fallthru
        _
      // Predicated region
      $region33: #{bottleneck_csp_forward.3} parent=11 // pred_check
        %p362 = pneg %p283
      $region34: #{bottleneck_csp_forward.3} parent=11 // pred_check_branch
        %364 = sbr.rel (%p362) target = $region36
      $region35: #{bottleneck_csp_forward.3} parent=11 // pred_region
        _
      $region36: #{bottleneck_csp_forward.3} parent=11 // pred_fallthru
        _
      // Predicated region
      $region37: #{bottleneck_csp_forward.3} parent=11 // pred_check
        %p365 = pneg %p304
      $region38: #{bottleneck_csp_forward.3} parent=11 // pred_check_branch
        %367 = sbr.rel (%p365) target = $region40
      $region39: #{bottleneck_csp_forward.3} parent=11 // pred_region
        _
      $region40: #{bottleneck_csp_forward.3} parent=11 // pred_fallthru
        _
    $region12: #{bottleneck_csp_forward.3} parent=5 // pred_fallthru
      _
    %p368 = scmp.lt.s32.totalorder %s17, 2
    // Predicated region
    $region41: #{bottleneck_csp_forward.3} parent=5 // pred_check
      %p369 = pneg %p368
    $region42: #{bottleneck_csp_forward.3} parent=5 // pred_check_branch
      %371 = sbr.rel (%p369) target = $region44
    $region43: #{bottleneck_csp_forward.3} parent=5 // pred_region
      // Predicated region
      $region45: #{bottleneck_csp_forward.3} parent=43 // pred_check
        %p372 = pneg %p51
      $region46: #{bottleneck_csp_forward.3} parent=43 // pred_check_branch
        %374 = sbr.rel (%p372) target = $region48
      $region47: #{bottleneck_csp_forward.3} parent=43 // pred_region
        %s375 = smul.u32 16, %s25
        %p376 = scmp.lt.s32.totalorder %s24, 1
        %s377 = scalar_select %p376, %s24, 1
        %p378 = scmp.lt.s32.totalorder %s375, 15
        %s379 = scalar_select %p378, %s375, 15
        %s380 = smul.addr %s379, 3
        %s381 = smul.addr %s377, 48
        %s382 = sadd.s32 %s380, %s381
        %s383 = smul.addr %s382, 4
        %s384 = scalar_lea.vmem %s0, %s383
        %s385 = smul.u32 16, %s25
      $region48: #{bottleneck_csp_forward.3} parent=43 // pred_fallthru
        _
      // Predicated region
      $region49: #{bottleneck_csp_forward.3} parent=43 // pred_check
        %p386 = pneg %p87
      $region50: #{bottleneck_csp_forward.3} parent=43 // pred_check_branch
        %388 = sbr.rel (%p386) target = $region52
      $region51: #{bottleneck_csp_forward.3} parent=43 // pred_region
        %s389 = smul.u32 %s25, 16
        %s390 = ssub.s32 %s389, 1
        %p391 = scmp.gt.s32.totalorder %s390, 0
        %s392 = scalar_select %p391, %s390, 0
        %p393 = scmp.lt.s32.totalorder %s24, 1
        %s394 = scalar_select %p393, %s24, 1
        %p395 = scmp.lt.s32.totalorder %s392, 15
        %s396 = scalar_select %p395, %s392, 15
        %s397 = smul.addr %s396, 3
        %s398 = smul.addr %s394, 48
        %s399 = sadd.s32 %s397, %s398
        %s400 = smul.addr %s399, 4
        %s401 = scalar_lea.vmem %s1, %s400
        %s402 = smul.u32 %s25, 16
        %s403 = ssub.s32 %s402, 1
        %p404 = scmp.gt.s32.totalorder %s403, 0
        %s405 = scalar_select %p404, %s403, 0
      $region52: #{bottleneck_csp_forward.3} parent=43 // pred_fallthru
        _
      // Predicated region
      $region53: #{bottleneck_csp_forward.3} parent=43 // pred_check
        %p406 = pneg %p123
      $region54: #{bottleneck_csp_forward.3} parent=43 // pred_check_branch
        %408 = sbr.rel (%p406) target = $region56
      $region55: #{bottleneck_csp_forward.3} parent=43 // pred_region
        %s409 = smul.u32 %s25, 16
        %s410 = sadd.s32 %s409, 16
        %p411 = scmp.lt.s32.totalorder %s410, 15
        %s412 = scalar_select %p411, %s410, 15
        %p413 = scmp.lt.s32.totalorder %s24, 1
        %s414 = scalar_select %p413, %s24, 1
        %p415 = scmp.lt.s32.totalorder %s412, 15
        %s416 = scalar_select %p415, %s412, 15
        %s417 = smul.addr %s416, 3
        %s418 = smul.addr %s414, 48
        %s419 = sadd.s32 %s417, %s418
        %s420 = smul.addr %s419, 4
        %s421 = scalar_lea.vmem %s2, %s420
        %s422 = smul.u32 %s25, 16
        %s423 = sadd.s32 %s422, 16
        %p424 = scmp.lt.s32.totalorder %s423, 15
        %s425 = scalar_select %p424, %s423, 15
      $region56: #{bottleneck_csp_forward.3} parent=43 // pred_fallthru
        _
      // Predicated region
      $region57: #{bottleneck_csp_forward.3} parent=43 // pred_check
        %p426 = pneg %p151
      $region58: #{bottleneck_csp_forward.3} parent=43 // pred_check_branch
        %428 = sbr.rel (%p426) target = $region60
      $region59: #{bottleneck_csp_forward.3} parent=43 // pred_region
        %s429 = smul.u32 16, %s25
        %p430 = scmp.lt.s32.totalorder %s24, 1
        %s431 = scalar_select %p430, %s24, 1
        %p432 = scmp.lt.s32.totalorder %s429, 15
        %s433 = scalar_select %p432, %s429, 15
        %s434 = smul.addr %s433, 2
        %s435 = smul.addr %s431, 32
        %s436 = sadd.s32 %s434, %s435
        %s437 = smul.addr %s436, 4
        %s438 = scalar_lea.vmem %s3, %s437
        %s439 = smul.u32 16, %s25
      $region60: #{bottleneck_csp_forward.3} parent=43 // pred_fallthru
        _
    $region44: #{bottleneck_csp_forward.3} parent=5 // pred_fallthru
      _
    %p440 = scmp.le.s32.totalorder 1, %s17
    %p441 = scmp.lt.s32.totalorder %s17, 3
    %p442 = pnand %p440, %p441
    %p443 = pneg %p442
    // Predicated region
    $region61: #{bottleneck_csp_forward.3} parent=5 // pred_check
      _
    $region62: #{bottleneck_csp_forward.3} parent=5 // pred_check_branch
      %445 = sbr.rel (%p442) target = $region64
    $region63: #{bottleneck_csp_forward.3} parent=5 // pred_region
      %s446 = ssub.s32 %s17, 1
      %s447 = smul.u32 16, %s27
      %p448 = scmp.lt.s32.totalorder %s26, 1
      %s449 = scalar_select %p448, %s26, 1
      %p450 = scmp.lt.s32.totalorder %s447, 15
      %s451 = scalar_select %p450, %s447, 15
      %s452 = smul.addr %s451, 3
      %s453 = smul.addr %s449, 48
      %s454 = sadd.s32 %s452, %s453
      %s455 = smul.addr %s454, 4
      %s456 = scalar_lea.vmem %s0, %s455
      %p457 = pneg %p57
      %p458 = pneg %p54
      %s459 = smul.u32 %s27, 16
      %s460 = ssub.s32 %s459, 1
      %p461 = scmp.gt.s32.totalorder %s460, 0
      %s462 = scalar_select %p461, %s460, 0
      %p463 = scmp.lt.s32.totalorder %s26, 1
      %s464 = scalar_select %p463, %s26, 1
      %p465 = scmp.lt.s32.totalorder %s462, 15
      %s466 = scalar_select %p465, %s462, 15
      %s467 = smul.addr %s466, 3
      %s468 = smul.addr %s464, 48
      %s469 = sadd.s32 %s467, %s468
      %s470 = smul.addr %s469, 4
      %s471 = scalar_lea.vmem %s1, %s470
      %p472 = pneg %p93
      %p473 = pneg %p90
      %s474 = smul.u32 %s27, 16
      %s475 = sadd.s32 %s474, 16
      %p476 = scmp.lt.s32.totalorder %s475, 15
      %s477 = scalar_select %p476, %s475, 15
      %p478 = scmp.lt.s32.totalorder %s26, 1
      %s479 = scalar_select %p478, %s26, 1
      %p480 = scmp.lt.s32.totalorder %s477, 15
      %s481 = scalar_select %p480, %s477, 15
      %s482 = smul.addr %s481, 3
      %s483 = smul.addr %s479, 48
      %s484 = sadd.s32 %s482, %s483
      %s485 = smul.addr %s484, 4
      %s486 = scalar_lea.vmem %s2, %s485
      %p487 = pneg %p129
      %p488 = pneg %p126
      %s489 = smul.u32 16, %s27
      %p490 = scmp.lt.s32.totalorder %s26, 1
      %s491 = scalar_select %p490, %s26, 1
      %p492 = scmp.lt.s32.totalorder %s489, 15
      %s493 = scalar_select %p492, %s489, 15
      %s494 = smul.addr %s493, 2
      %s495 = smul.addr %s491, 32
      %s496 = sadd.s32 %s494, %s495
      %s497 = smul.addr %s496, 4
      %s498 = scalar_lea.vmem %s3, %s497
      %p499 = pneg %p157
      %p500 = pneg %p154
      %p501 = pneg %p178
      %p502 = pneg %p175
      %p503 = pneg %p199
      %p504 = pneg %p196
      %p505 = pneg %p220
      %p506 = pneg %p217
      %p507 = pneg %p241
      %p508 = pneg %p238
      %p509 = pneg %p262
      %p510 = pneg %p259
      %p511 = pneg %p283
      %p512 = pneg %p280
      %p513 = pneg %p304
      %p514 = pneg %p301
      %p515 = pneg %p332
      %p516 = pneg %p329
      %s517 = smul.u32 16, %s27
      %p518 = scmp.lt.s32.totalorder %s26, 1
      %s519 = scalar_select %p518, %s26, 1
      %p520 = scmp.lt.s32.totalorder %s517, 15
      %s521 = scalar_select %p520, %s517, 15
      %s522 = smul.addr %s521, 2
      %s523 = smul.addr %s519, 32
      %s524 = sadd.s32 %s522, %s523
      %s525 = smul.addr %s524, 4
      %s526 = scalar_lea.vmem %s11, %s525
      %s527 = smul.u32 16, %s27
      %p528 = scmp.lt.s32.totalorder %s26, 1
      %s529 = scalar_select %p528, %s26, 1
      %p530 = scmp.lt.s32.totalorder %s527, 15
      %s531 = scalar_select %p530, %s527, 15
      %s532 = smul.addr %s531, 3
      %s533 = smul.addr %s529, 48
      %s534 = sadd.s32 %s532, %s533
      %s535 = smul.addr %s534, 4
      %s536 = scalar_lea.vmem %s0, %s535
      %s537 = smul.u32 16, %s27
      %s538 = smul.u32 %s27, 16
      %s539 = ssub.s32 %s538, 1
      %p540 = scmp.gt.s32.totalorder %s539, 0
      %s541 = scalar_select %p540, %s539, 0
      %p542 = scmp.lt.s32.totalorder %s26, 1
      %s543 = scalar_select %p542, %s26, 1
      %p544 = scmp.lt.s32.totalorder %s541, 15
      %s545 = scalar_select %p544, %s541, 15
      %s546 = smul.addr %s545, 3
      %s547 = smul.addr %s543, 48
      %s548 = sadd.s32 %s546, %s547
      %s549 = smul.addr %s548, 4
      %s550 = scalar_lea.vmem %s1, %s549
      %s551 = smul.u32 %s27, 16
      %s552 = ssub.s32 %s551, 1
      %p553 = scmp.gt.s32.totalorder %s552, 0
      %s554 = scalar_select %p553, %s552, 0
      %s555 = smul.u32 %s27, 16
      %s556 = sadd.s32 %s555, 16
      %p557 = scmp.lt.s32.totalorder %s556, 15
      %s558 = scalar_select %p557, %s556, 15
      %p559 = scmp.lt.s32.totalorder %s26, 1
      %s560 = scalar_select %p559, %s26, 1
      %p561 = scmp.lt.s32.totalorder %s558, 15
      %s562 = scalar_select %p561, %s558, 15
      %s563 = smul.addr %s562, 3
      %s564 = smul.addr %s560, 48
      %s565 = sadd.s32 %s563, %s564
      %s566 = smul.addr %s565, 4
      %s567 = scalar_lea.vmem %s2, %s566
      %s568 = smul.u32 %s27, 16
      %s569 = sadd.s32 %s568, 16
      %p570 = scmp.lt.s32.totalorder %s569, 15
      %s571 = scalar_select %p570, %s569, 15
      %s572 = smul.u32 16, %s27
      %p573 = scmp.lt.s32.totalorder %s26, 1
      %s574 = scalar_select %p573, %s26, 1
      %p575 = scmp.lt.s32.totalorder %s572, 15
      %s576 = scalar_select %p575, %s572, 15
      %s577 = smul.addr %s576, 2
      %s578 = smul.addr %s574, 32
      %s579 = sadd.s32 %s577, %s578
      %s580 = smul.addr %s579, 4
      %s581 = scalar_lea.vmem %s3, %s580
      %s582 = smul.u32 16, %s27
      %s583 = smul.u32 16, %s27
      %p584 = scmp.lt.s32.totalorder %s26, 1
      %s585 = scalar_select %p584, %s26, 1
      %p586 = scmp.lt.s32.totalorder %s583, 15
      %s587 = scalar_select %p586, %s583, 15
      %s588 = smul.addr %s587, 2
      %s589 = smul.addr %s585, 32
      %s590 = sadd.s32 %s588, %s589
      %s591 = smul.addr %s590, 4
      %s592 = scalar_lea.vmem %s11, %s591
      %s593 = smul.u32 16, %s27
      %v595 = vld [vmem:[%s536] sm:$0xf]
      %v596 = vld [vmem:[%s536 + $0x4] sm:$0xf]
      %v597 = vld [vmem:[%s536 + $0x8] sm:$0x1]
      %v598 = vld [vmem:[%s536 + $0xc] sm:$0xf]
      %v599 = vld [vmem:[%s536 + $0x10] sm:$0xf]
      %v600 = vld [vmem:[%s536 + $0x14] sm:$0x1]
      %v601 = vld [vmem:[%s536 + $0x18] sm:$0xf]
      %v602 = vld [vmem:[%s536 + $0x1c] sm:$0xf]
      %v603 = vld [vmem:[%s536 + $0x20] sm:$0x1]
      %v604 = vld [vmem:[%s536 + $0x24] sm:$0xf]
      %v605 = vld [vmem:[%s536 + $0x28] sm:$0xf]
      %v606 = vld [vmem:[%s536 + $0x2c] sm:$0x1]
      %v607 = vld [vmem:[%s536 + $0x30] sm:$0xf]
      %v608 = vld [vmem:[%s536 + $0x34] sm:$0xf]
      %v609 = vld [vmem:[%s536 + $0x38] sm:$0x1]
      %v610 = vld [vmem:[%s536 + $0x3c] sm:$0xf]
      %v611 = vld [vmem:[%s536 + $0x40] sm:$0xf]
      %v612 = vld [vmem:[%s536 + $0x44] sm:$0x1]
      %v613 = vld [vmem:[%s536 + $0x48] sm:$0xf]
      %v614 = vld [vmem:[%s536 + $0x4c] sm:$0xf]
      %v615 = vld [vmem:[%s536 + $0x50] sm:$0x1]
      %v616 = vld [vmem:[%s536 + $0x54] sm:$0xf]
      %v617 = vld [vmem:[%s536 + $0x58] sm:$0xf]
      %v618 = vld [vmem:[%s536 + $0x5c] sm:$0x1]
      %v619 = vld [vmem:[%s536 + $0x60] sm:$0xf]
      %v620 = vld [vmem:[%s536 + $0x64] sm:$0xf]
      %v621 = vld [vmem:[%s536 + $0x68] sm:$0x1]
      %v622 = vld [vmem:[%s536 + $0x6c] sm:$0xf]
      %v623 = vld [vmem:[%s536 + $0x70] sm:$0xf]
      %v624 = vld [vmem:[%s536 + $0x74] sm:$0x1]
      %v625 = vld [vmem:[%s536 + $0x78] sm:$0xf]
      %v626 = vld [vmem:[%s536 + $0x7c] sm:$0xf]
      %v627 = vld [vmem:[%s536 + $0x80] sm:$0x1]
      %v628 = vld [vmem:[%s536 + $0x84] sm:$0xf]
      %v629 = vld [vmem:[%s536 + $0x88] sm:$0xf]
      %v630 = vld [vmem:[%s536 + $0x8c] sm:$0x1]
      %v631 = vld [vmem:[%s536 + $0x90] sm:$0xf]
      %v632 = vld [vmem:[%s536 + $0x94] sm:$0xf]
      %v633 = vld [vmem:[%s536 + $0x98] sm:$0x1]
      %v634 = vld [vmem:[%s536 + $0x9c] sm:$0xf]
      %v635 = vld [vmem:[%s536 + $0xa0] sm:$0xf]
      %v636 = vld [vmem:[%s536 + $0xa4] sm:$0x1]
      %v637 = vld [vmem:[%s536 + $0xa8] sm:$0xf]
      %v638 = vld [vmem:[%s536 + $0xac] sm:$0xf]
      %v639 = vld [vmem:[%s536 + $0xb0] sm:$0x1]
      %v640 = vld [vmem:[%s536 + $0xb4] sm:$0xf]
      %v641 = vld [vmem:[%s536 + $0xb8] sm:$0xf]
      %v642 = vld [vmem:[%s536 + $0xbc] sm:$0x1]
      %v643 = vld [vmem:[%s550] sm:$0xf]
      %v644 = vld [vmem:[%s550 + $0x4] sm:$0xf]
      %v645 = vld [vmem:[%s550 + $0x8] sm:$0x1]
      %v646 = vld [vmem:[%s567] sm:$0xf]
      %v647 = vld [vmem:[%s567 + $0x4] sm:$0xf]
      %v648 = vld [vmem:[%s567 + $0x8] sm:$0x1]
      %p649 = scmp.eq.s32.totalorder %s27, 0
      %s650 = scalar_select %p649, 1, 0
      %v651 = vstv %s650
      %vm652 = vcmp.eq.s32.totalorder %v651, 1
      %v653 = vsel %vm652, 0, %v643
      %v654 = vsel %vm652, 0, %v644
      %v655 = vsel %vm652, 0, %v645
      %v656 = vsel %vm652, 0, %v646
      %v657 = vsel %vm652, 0, %v647
      %v658 = vsel %vm652, 0, %v648
      %vm659 = vsmask.f32 3328
      %vm660 = vsmask.f32 7440
      %vm661 = vmor %vm659, %vm660
      %v663 = vshrl.u32 %v653, 16
      %v665 = vrot.slane %v663, 4
      %v666 = vshll.u32 %v653, 16
      %v668 = vrot.slane %v666, 5
      %v669 = vor.u32 %v665, %v668
      %v670 = vrot.slane %v669, 4
      %v672 = vshll.u32 %v654, 16
      %v674 = vrot.slane %v672, 5
      %v675 = vsel %vm661, %v670, %v674
      %v676 = vshrl.u32 %v654, 16
      %v678 = vrot.slane %v676, 4
      %v679 = vor.u32 %v678, %v674
      %v680 = vrot.slane %v679, 4
      %v682 = vshll.u32 %v655, 16
      %v684 = vrot.slane %v682, 5
      %v685 = vsel %vm661, %v680, %v684
      %v687 = vshrl.u32 %v595, 16
      %v689 = vrot.slane %v687, 4
      %v690 = vshll.u32 %v595, 16
      %v692 = vrot.slane %v690, 5
      %v693 = vor.u32 %v689, %v692
      %v694 = vrot.slane %v693, 4
      %v696 = vshll.u32 %v596, 16
      %v698 = vrot.slane %v696, 5
      %v699 = vsel %vm661, %v694, %v698
      %v700 = vshrl.u32 %v596, 16
      %v702 = vrot.slane %v700, 4
      %v703 = vor.u32 %v702, %v698
      %v704 = vrot.slane %v703, 4
      %v706 = vshll.u32 %v597, 16
      %v708 = vrot.slane %v706, 5
      %v709 = vsel %vm661, %v704, %v708
      %v711 = vshrl.u32 %v598, 16
      %v713 = vrot.slane %v711, 4
      %v714 = vshll.u32 %v598, 16
      %v716 = vrot.slane %v714, 5
      %v717 = vor.u32 %v713, %v716
      %v718 = vrot.slane %v717, 4
      %v720 = vshll.u32 %v599, 16
      %v722 = vrot.slane %v720, 5
      %v723 = vsel %vm661, %v718, %v722
      %v724 = vshrl.u32 %v599, 16
      %v726 = vrot.slane %v724, 4
      %v727 = vor.u32 %v726, %v722
      %v728 = vrot.slane %v727, 4
      %v730 = vshll.u32 %v600, 16
      %v732 = vrot.slane %v730, 5
      %v733 = vsel %vm661, %v728, %v732
      %v735 = vshrl.u32 %v601, 16
      %v737 = vrot.slane %v735, 4
      %v738 = vshll.u32 %v601, 16
      %v740 = vrot.slane %v738, 5
      %v741 = vor.u32 %v737, %v740
      %v742 = vrot.slane %v741, 4
      %v744 = vshll.u32 %v602, 16
      %v746 = vrot.slane %v744, 5
      %v747 = vsel %vm661, %v742, %v746
      %v748 = vshrl.u32 %v602, 16
      %v750 = vrot.slane %v748, 4
      %v751 = vor.u32 %v750, %v746
      %v752 = vrot.slane %v751, 4
      %v754 = vshll.u32 %v603, 16
      %v756 = vrot.slane %v754, 5
      %v757 = vsel %vm661, %v752, %v756
      %v759 = vshrl.u32 %v604, 16
      %v761 = vrot.slane %v759, 4
      %v762 = vshll.u32 %v604, 16
      %v764 = vrot.slane %v762, 5
      %v765 = vor.u32 %v761, %v764
      %v766 = vrot.slane %v765, 4
      %v768 = vshll.u32 %v605, 16
      %v770 = vrot.slane %v768, 5
      %v771 = vsel %vm661, %v766, %v770
      %v772 = vshrl.u32 %v605, 16
      %v774 = vrot.slane %v772, 4
      %v775 = vor.u32 %v774, %v770
      %v776 = vrot.slane %v775, 4
      %v778 = vshll.u32 %v606, 16
      %v780 = vrot.slane %v778, 5
      %v781 = vsel %vm661, %v776, %v780
      %v783 = vshrl.u32 %v607, 16
      %v785 = vrot.slane %v783, 4
      %v786 = vshll.u32 %v607, 16
      %v788 = vrot.slane %v786, 5
      %v789 = vor.u32 %v785, %v788
      %v790 = vrot.slane %v789, 4
      %v792 = vshll.u32 %v608, 16
      %v794 = vrot.slane %v792, 5
      %v795 = vsel %vm661, %v790, %v794
      %v796 = vshrl.u32 %v608, 16
      %v798 = vrot.slane %v796, 4
      %v799 = vor.u32 %v798, %v794
      %v800 = vrot.slane %v799, 4
      %v802 = vshll.u32 %v609, 16
      %v804 = vrot.slane %v802, 5
      %v805 = vsel %vm661, %v800, %v804
      %v807 = vshrl.u32 %v610, 16
      %v809 = vrot.slane %v807, 4
      %v810 = vshll.u32 %v610, 16
      %v812 = vrot.slane %v810, 5
      %v813 = vor.u32 %v809, %v812
      %v814 = vrot.slane %v813, 4
      %v816 = vshll.u32 %v611, 16
      %v818 = vrot.slane %v816, 5
      %v819 = vsel %vm661, %v814, %v818
      %v820 = vshrl.u32 %v611, 16
      %v822 = vrot.slane %v820, 4
      %v823 = vor.u32 %v822, %v818
      %v824 = vrot.slane %v823, 4
      %v826 = vshll.u32 %v612, 16
      %v828 = vrot.slane %v826, 5
      %v829 = vsel %vm661, %v824, %v828
      %v831 = vshrl.u32 %v613, 16
      %v833 = vrot.slane %v831, 4
      %v834 = vshll.u32 %v613, 16
      %v836 = vrot.slane %v834, 5
      %v837 = vor.u32 %v833, %v836
      %v838 = vrot.slane %v837, 4
      %v840 = vshll.u32 %v614, 16
      %v842 = vrot.slane %v840, 5
      %v843 = vsel %vm661, %v838, %v842
      %v844 = vshrl.u32 %v614, 16
      %v846 = vrot.slane %v844, 4
      %v847 = vor.u32 %v846, %v842
      %v848 = vrot.slane %v847, 4
      %v850 = vshll.u32 %v615, 16
      %v852 = vrot.slane %v850, 5
      %v853 = vsel %vm661, %v848, %v852
      %v855 = vshrl.u32 %v616, 16
      %v857 = vrot.slane %v855, 4
      %v858 = vshll.u32 %v616, 16
      %v860 = vrot.slane %v858, 5
      %v861 = vor.u32 %v857, %v860
      %v862 = vrot.slane %v861, 4
      %v864 = vshll.u32 %v617, 16
      %v866 = vrot.slane %v864, 5
      %v867 = vsel %vm661, %v862, %v866
      %v868 = vshrl.u32 %v617, 16
      %v870 = vrot.slane %v868, 4
      %v871 = vor.u32 %v870, %v866
      %v872 = vrot.slane %v871, 4
      %v874 = vshll.u32 %v618, 16
      %v876 = vrot.slane %v874, 5
      %v877 = vsel %vm661, %v872, %v876
      %v879 = vshrl.u32 %v619, 16
      %v881 = vrot.slane %v879, 4
      %v882 = vshll.u32 %v619, 16
      %v884 = vrot.slane %v882, 5
      %v885 = vor.u32 %v881, %v884
      %v886 = vrot.slane %v885, 4
      %v888 = vshll.u32 %v620, 16
      %v890 = vrot.slane %v888, 5
      %v891 = vsel %vm661, %v886, %v890
      %v892 = vshrl.u32 %v620, 16
      %v894 = vrot.slane %v892, 4
      %v895 = vor.u32 %v894, %v890
      %v896 = vrot.slane %v895, 4
      %v898 = vshll.u32 %v621, 16
      %v900 = vrot.slane %v898, 5
      %v901 = vsel %vm661, %v896, %v900
      %v903 = vshrl.u32 %v622, 16
      %v905 = vrot.slane %v903, 4
      %v906 = vshll.u32 %v622, 16
      %v908 = vrot.slane %v906, 5
      %v909 = vor.u32 %v905, %v908
      %v910 = vrot.slane %v909, 4
      %v912 = vshll.u32 %v623, 16
      %v914 = vrot.slane %v912, 5
      %v915 = vsel %vm661, %v910, %v914
      %v916 = vshrl.u32 %v623, 16
      %v918 = vrot.slane %v916, 4
      %v919 = vor.u32 %v918, %v914
      %v920 = vrot.slane %v919, 4
      %v922 = vshll.u32 %v624, 16
      %v924 = vrot.slane %v922, 5
      %v925 = vsel %vm661, %v920, %v924
      %v927 = vshrl.u32 %v625, 16
      %v929 = vrot.slane %v927, 4
      %v930 = vshll.u32 %v625, 16
      %v932 = vrot.slane %v930, 5
      %v933 = vor.u32 %v929, %v932
      %v934 = vrot.slane %v933, 4
      %v936 = vshll.u32 %v626, 16
      %v938 = vrot.slane %v936, 5
      %v939 = vsel %vm661, %v934, %v938
      %v940 = vshrl.u32 %v626, 16
      %v942 = vrot.slane %v940, 4
      %v943 = vor.u32 %v942, %v938
      %v944 = vrot.slane %v943, 4
      %v946 = vshll.u32 %v627, 16
      %v948 = vrot.slane %v946, 5
      %v949 = vsel %vm661, %v944, %v948
      %v951 = vshrl.u32 %v628, 16
      %v953 = vrot.slane %v951, 4
      %v954 = vshll.u32 %v628, 16
      %v956 = vrot.slane %v954, 5
      %v957 = vor.u32 %v953, %v956
      %v958 = vrot.slane %v957, 4
      %v960 = vshll.u32 %v629, 16
      %v962 = vrot.slane %v960, 5
      %v963 = vsel %vm661, %v958, %v962
      %v964 = vshrl.u32 %v629, 16
      %v966 = vrot.slane %v964, 4
      %v967 = vor.u32 %v966, %v962
      %v968 = vrot.slane %v967, 4
      %v970 = vshll.u32 %v630, 16
      %v972 = vrot.slane %v970, 5
      %v973 = vsel %vm661, %v968, %v972
      %v975 = vshrl.u32 %v631, 16
      %v977 = vrot.slane %v975, 4
      %v978 = vshll.u32 %v631, 16
      %v980 = vrot.slane %v978, 5
      %v981 = vor.u32 %v977, %v980
      %v982 = vrot.slane %v981, 4
      %v984 = vshll.u32 %v632, 16
      %v986 = vrot.slane %v984, 5
      %v987 = vsel %vm661, %v982, %v986
      %v988 = vshrl.u32 %v632, 16
      %v990 = vrot.slane %v988, 4
      %v991 = vor.u32 %v990, %v986
      %v992 = vrot.slane %v991, 4
      %v994 = vshll.u32 %v633, 16
      %v996 = vrot.slane %v994, 5
      %v997 = vsel %vm661, %v992, %v996
      %v999 = vshrl.u32 %v634, 16
      %v1001 = vrot.slane %v999, 4
      %v1002 = vshll.u32 %v634, 16
      %v1004 = vrot.slane %v1002, 5
      %v1005 = vor.u32 %v1001, %v1004
      %v1006 = vrot.slane %v1005, 4
      %v1008 = vshll.u32 %v635, 16
      %v1010 = vrot.slane %v1008, 5
      %v1011 = vsel %vm661, %v1006, %v1010
      %v1012 = vshrl.u32 %v635, 16
      %v1014 = vrot.slane %v1012, 4
      %v1015 = vor.u32 %v1014, %v1010
      %v1016 = vrot.slane %v1015, 4
      %v1018 = vshll.u32 %v636, 16
      %v1020 = vrot.slane %v1018, 5
      %v1021 = vsel %vm661, %v1016, %v1020
      %v1023 = vshrl.u32 %v637, 16
      %v1025 = vrot.slane %v1023, 4
      %v1026 = vshll.u32 %v637, 16
      %v1028 = vrot.slane %v1026, 5
      %v1029 = vor.u32 %v1025, %v1028
      %v1030 = vrot.slane %v1029, 4
      %v1032 = vshll.u32 %v638, 16
      %v1034 = vrot.slane %v1032, 5
      %v1035 = vsel %vm661, %v1030, %v1034
      %v1036 = vshrl.u32 %v638, 16
      %v1038 = vrot.slane %v1036, 4
      %v1039 = vor.u32 %v1038, %v1034
      %v1040 = vrot.slane %v1039, 4
      %v1042 = vshll.u32 %v639, 16
      %v1044 = vrot.slane %v1042, 5
      %v1045 = vsel %vm661, %v1040, %v1044
      %vm1094 = vcmask 1042432
      %vm1095 = vcmask 1046532
      %vm1096 = vmor %vm1094, %vm1095
      %v1097 = vrot.slane %v653, 5
      %v1098 = vrot.slane %v1097, 4
      %v1099 = vrot.slane %v654, 5
      %v1100 = vsel %vm1096, %v1098, %v1099
      %v1101 = vrot.slane %v1099, 4
      %v1102 = vrot.slane %v655, 5
      %v1103 = vsel %vm1096, %v1101, %v1102
      %v1104 = vrot.slane %v595, 5
      %v1105 = vrot.slane %v1104, 4
      %v1106 = vrot.slane %v596, 5
      %v1107 = vsel %vm1096, %v1105, %v1106
      %v1108 = vrot.slane %v1106, 4
      %v1109 = vrot.slane %v597, 5
      %v1110 = vsel %vm1096, %v1108, %v1109
      %v1111 = vrot.slane %v598, 5
      %v1112 = vrot.slane %v1111, 4
      %v1113 = vrot.slane %v599, 5
      %v1114 = vsel %vm1096, %v1112, %v1113
      %v1115 = vrot.slane %v1113, 4
      %v1116 = vrot.slane %v600, 5
      %v1117 = vsel %vm1096, %v1115, %v1116
      %v1118 = vrot.slane %v601, 5
      %v1119 = vrot.slane %v1118, 4
      %v1120 = vrot.slane %v602, 5
      %v1121 = vsel %vm1096, %v1119, %v1120
      %v1122 = vrot.slane %v1120, 4
      %v1123 = vrot.slane %v603, 5
      %v1124 = vsel %vm1096, %v1122, %v1123
      %v1125 = vrot.slane %v604, 5
      %v1126 = vrot.slane %v1125, 4
      %v1127 = vrot.slane %v605, 5
      %v1128 = vsel %vm1096, %v1126, %v1127
      %v1129 = vrot.slane %v1127, 4
      %v1130 = vrot.slane %v606, 5
      %v1131 = vsel %vm1096, %v1129, %v1130
      %v1132 = vrot.slane %v607, 5
      %v1133 = vrot.slane %v1132, 4
      %v1134 = vrot.slane %v608, 5
      %v1135 = vsel %vm1096, %v1133, %v1134
      %v1136 = vrot.slane %v1134, 4
      %v1137 = vrot.slane %v609, 5
      %v1138 = vsel %vm1096, %v1136, %v1137
      %v1139 = vrot.slane %v610, 5
      %v1140 = vrot.slane %v1139, 4
      %v1141 = vrot.slane %v611, 5
      %v1142 = vsel %vm1096, %v1140, %v1141
      %v1143 = vrot.slane %v1141, 4
      %v1144 = vrot.slane %v612, 5
      %v1145 = vsel %vm1096, %v1143, %v1144
      %v1146 = vrot.slane %v613, 5
      %v1147 = vrot.slane %v1146, 4
      %v1148 = vrot.slane %v614, 5
      %v1149 = vsel %vm1096, %v1147, %v1148
      %v1150 = vrot.slane %v1148, 4
      %v1151 = vrot.slane %v615, 5
      %v1152 = vsel %vm1096, %v1150, %v1151
      %v1153 = vrot.slane %v616, 5
      %v1154 = vrot.slane %v1153, 4
      %v1155 = vrot.slane %v617, 5
      %v1156 = vsel %vm1096, %v1154, %v1155
      %v1157 = vrot.slane %v1155, 4
      %v1158 = vrot.slane %v618, 5
      %v1159 = vsel %vm1096, %v1157, %v1158
      %v1160 = vrot.slane %v619, 5
      %v1161 = vrot.slane %v1160, 4
      %v1162 = vrot.slane %v620, 5
      %v1163 = vsel %vm1096, %v1161, %v1162
      %v1164 = vrot.slane %v1162, 4
      %v1165 = vrot.slane %v621, 5
      %v1166 = vsel %vm1096, %v1164, %v1165
      %v1167 = vrot.slane %v622, 5
      %v1168 = vrot.slane %v1167, 4
      %v1169 = vrot.slane %v623, 5
      %v1170 = vsel %vm1096, %v1168, %v1169
      %v1171 = vrot.slane %v1169, 4
      %v1172 = vrot.slane %v624, 5
      %v1173 = vsel %vm1096, %v1171, %v1172
      %v1174 = vrot.slane %v625, 5
      %v1175 = vrot.slane %v1174, 4
      %v1176 = vrot.slane %v626, 5
      %v1177 = vsel %vm1096, %v1175, %v1176
      %v1178 = vrot.slane %v1176, 4
      %v1179 = vrot.slane %v627, 5
      %v1180 = vsel %vm1096, %v1178, %v1179
      %v1181 = vrot.slane %v628, 5
      %v1182 = vrot.slane %v1181, 4
      %v1183 = vrot.slane %v629, 5
      %v1184 = vsel %vm1096, %v1182, %v1183
      %v1185 = vrot.slane %v1183, 4
      %v1186 = vrot.slane %v630, 5
      %v1187 = vsel %vm1096, %v1185, %v1186
      %v1188 = vrot.slane %v631, 5
      %v1189 = vrot.slane %v1188, 4
      %v1190 = vrot.slane %v632, 5
      %v1191 = vsel %vm1096, %v1189, %v1190
      %v1192 = vrot.slane %v1190, 4
      %v1193 = vrot.slane %v633, 5
      %v1194 = vsel %vm1096, %v1192, %v1193
      %v1195 = vrot.slane %v634, 5
      %v1196 = vrot.slane %v1195, 4
      %v1197 = vrot.slane %v635, 5
      %v1198 = vsel %vm1096, %v1196, %v1197
      %v1199 = vrot.slane %v1197, 4
      %v1200 = vrot.slane %v636, 5
      %v1201 = vsel %vm1096, %v1199, %v1200
      %v1202 = vrot.slane %v637, 5
      %v1203 = vrot.slane %v1202, 4
      %v1204 = vrot.slane %v638, 5
      %v1205 = vsel %vm1096, %v1203, %v1204
      %v1206 = vrot.slane %v1204, 4
      %v1207 = vrot.slane %v639, 5
      %v1208 = vsel %vm1096, %v1206, %v1207
      %v1210 = vshrl.u32 %v640, 16
      %v1212 = vrot.slane %v1210, 4
      %v1213 = vshll.u32 %v640, 16
      %v1215 = vrot.slane %v1213, 5
      %v1216 = vor.u32 %v1212, %v1215
      %v1217 = vrot.slane %v1216, 4
      %v1219 = vshll.u32 %v641, 16
      %v1221 = vrot.slane %v1219, 5
      %v1222 = vsel %vm661, %v1217, %v1221
      %v1223 = vshrl.u32 %v641, 16
      %v1225 = vrot.slane %v1223, 4
      %v1226 = vor.u32 %v1225, %v1221
      %v1227 = vrot.slane %v1226, 4
      %v1229 = vshll.u32 %v642, 16
      %v1231 = vrot.slane %v1229, 5
      %v1232 = vsel %vm661, %v1227, %v1231
      %v1236 = vrot.slane %v640, 5
      %v1237 = vrot.slane %v1236, 4
      %v1238 = vrot.slane %v641, 5
      %v1239 = vsel %vm1096, %v1237, %v1238
      %v1240 = vrot.slane %v1238, 4
      %v1241 = vrot.slane %v642, 5
      %v1242 = vsel %vm1096, %v1240, %v1241
      %v1244 = vshrl.u32 %v656, 16
      %v1246 = vrot.slane %v1244, 4
      %v1247 = vshll.u32 %v656, 16
      %v1249 = vrot.slane %v1247, 5
      %v1250 = vor.u32 %v1246, %v1249
      %v1251 = vrot.slane %v1250, 4
      %v1253 = vshll.u32 %v657, 16
      %v1255 = vrot.slane %v1253, 5
      %v1256 = vsel %vm661, %v1251, %v1255
      %v1257 = vshrl.u32 %v657, 16
      %v1259 = vrot.slane %v1257, 4
      %v1260 = vor.u32 %v1259, %v1255
      %v1261 = vrot.slane %v1260, 4
      %v1263 = vshll.u32 %v658, 16
      %v1265 = vrot.slane %v1263, 5
      %v1266 = vsel %vm661, %v1261, %v1265
      %v1270 = vrot.slane %v656, 5
      %v1271 = vrot.slane %v1270, 4
      %v1272 = vrot.slane %v657, 5
      %v1273 = vsel %vm1096, %v1271, %v1272
      %v1274 = vrot.slane %v1272, 4
      %v1275 = vrot.slane %v658, 5
      %v1276 = vsel %vm1096, %v1274, %v1275
      %v1277 = vunpack.c.l.b16 %v653
      %v1278 = vunpack.c.l.b16 %v654
      %v1279 = vunpack.c.l.b16 %v595
      %v1280 = vunpack.c.l.b16 %v596
      %v1281 = vunpack.c.l.b16 %v598
      %v1282 = vunpack.c.l.b16 %v599
      %v1283 = vunpack.c.l.b16 %v601
      %v1284 = vunpack.c.l.b16 %v602
      %v1285 = vunpack.c.l.b16 %v604
      %v1286 = vunpack.c.l.b16 %v605
      %v1287 = vunpack.c.l.b16 %v607
      %v1288 = vunpack.c.l.b16 %v608
      %v1289 = vunpack.c.l.b16 %v610
      %v1290 = vunpack.c.l.b16 %v611
      %v1291 = vunpack.c.l.b16 %v613
      %v1292 = vunpack.c.l.b16 %v614
      %v1293 = vunpack.c.l.b16 %v616
      %v1294 = vunpack.c.l.b16 %v617
      %v1295 = vunpack.c.l.b16 %v619
      %v1296 = vunpack.c.l.b16 %v620
      %v1297 = vunpack.c.l.b16 %v622
      %v1298 = vunpack.c.l.b16 %v623
      %v1299 = vunpack.c.l.b16 %v625
      %v1300 = vunpack.c.l.b16 %v626
      %v1301 = vunpack.c.l.b16 %v628
      %v1302 = vunpack.c.l.b16 %v629
      %v1303 = vunpack.c.l.b16 %v631
      %v1304 = vunpack.c.l.b16 %v632
      %v1305 = vunpack.c.l.b16 %v634
      %v1306 = vunpack.c.l.b16 %v635
      %v1307 = vunpack.c.l.b16 %v637
      %v1308 = vunpack.c.l.b16 %v638
      %v1309 = vpack.c.b16 %v1278, %v1277
      %v1310 = vpack.c.b16 %v1280, %v1279
      %v1311 = vpack.c.b16 %v1282, %v1281
      %v1312 = vpack.c.b16 %v1284, %v1283
      %v1313 = vpack.c.b16 %v1286, %v1285
      %v1314 = vpack.c.b16 %v1288, %v1287
      %v1315 = vpack.c.b16 %v1290, %v1289
      %v1316 = vpack.c.b16 %v1292, %v1291
      %v1317 = vpack.c.b16 %v1294, %v1293
      %v1318 = vpack.c.b16 %v1296, %v1295
      %v1319 = vpack.c.b16 %v1298, %v1297
      %v1320 = vpack.c.b16 %v1300, %v1299
      %v1321 = vpack.c.b16 %v1302, %v1301
      %v1322 = vpack.c.b16 %v1304, %v1303
      %v1323 = vpack.c.b16 %v1306, %v1305
      %v1324 = vpack.c.b16 %v1308, %v1307
      %v1325 = vunpack.c.l.b16 %v675
      %v1326 = vunpack.c.l.b16 %v685
      %v1327 = vunpack.c.l.b16 %v699
      %v1328 = vunpack.c.l.b16 %v709
      %v1329 = vunpack.c.l.b16 %v723
      %v1330 = vunpack.c.l.b16 %v733
      %v1331 = vunpack.c.l.b16 %v747
      %v1332 = vunpack.c.l.b16 %v757
      %v1333 = vunpack.c.l.b16 %v771
      %v1334 = vunpack.c.l.b16 %v781
      %v1335 = vunpack.c.l.b16 %v795
      %v1336 = vunpack.c.l.b16 %v805
      %v1337 = vunpack.c.l.b16 %v819
      %v1338 = vunpack.c.l.b16 %v829
      %v1339 = vunpack.c.l.b16 %v843
      %v1340 = vunpack.c.l.b16 %v853
      %v1341 = vunpack.c.l.b16 %v867
      %v1342 = vunpack.c.l.b16 %v877
      %v1343 = vunpack.c.l.b16 %v891
      %v1344 = vunpack.c.l.b16 %v901
      %v1345 = vunpack.c.l.b16 %v915
      %v1346 = vunpack.c.l.b16 %v925
      %v1347 = vunpack.c.l.b16 %v939
      %v1348 = vunpack.c.l.b16 %v949
      %v1349 = vunpack.c.l.b16 %v963
      %v1350 = vunpack.c.l.b16 %v973
      %v1351 = vunpack.c.l.b16 %v987
      %v1352 = vunpack.c.l.b16 %v997
      %v1353 = vunpack.c.l.b16 %v1011
      %v1354 = vunpack.c.l.b16 %v1021
      %v1355 = vunpack.c.l.b16 %v1035
      %v1356 = vunpack.c.l.b16 %v1045
      %v1357 = vpack.c.b16 %v1326, %v1325
      %v1358 = vpack.c.b16 %v1328, %v1327
      %v1359 = vpack.c.b16 %v1330, %v1329
      %v1360 = vpack.c.b16 %v1332, %v1331
      %v1361 = vpack.c.b16 %v1334, %v1333
      %v1362 = vpack.c.b16 %v1336, %v1335
      %v1363 = vpack.c.b16 %v1338, %v1337
      %v1364 = vpack.c.b16 %v1340, %v1339
      %v1365 = vpack.c.b16 %v1342, %v1341
      %v1366 = vpack.c.b16 %v1344, %v1343
      %v1367 = vpack.c.b16 %v1346, %v1345
      %v1368 = vpack.c.b16 %v1348, %v1347
      %v1369 = vpack.c.b16 %v1350, %v1349
      %v1370 = vpack.c.b16 %v1352, %v1351
      %v1371 = vpack.c.b16 %v1354, %v1353
      %v1372 = vpack.c.b16 %v1356, %v1355
      %1373 = vrot.lane.b32.xlu0 %v1357, 8
      %v1374 = vpop.permute.xlu0 %1373
      %1375 = vrot.lane.b32.xlu0 %v1358, 8
      %v1376 = vpop.permute.xlu0 %1375
      %1377 = vrot.lane.b32.xlu0 %v1359, 8
      %v1378 = vpop.permute.xlu0 %1377
      %1379 = vrot.lane.b32.xlu0 %v1360, 8
      %v1380 = vpop.permute.xlu0 %1379
      %1381 = vrot.lane.b32.xlu0 %v1361, 8
      %v1382 = vpop.permute.xlu0 %1381
      %1383 = vrot.lane.b32.xlu0 %v1362, 8
      %v1384 = vpop.permute.xlu0 %1383
      %1385 = vrot.lane.b32.xlu0 %v1363, 8
      %v1386 = vpop.permute.xlu0 %1385
      %1387 = vrot.lane.b32.xlu0 %v1364, 8
      %v1388 = vpop.permute.xlu0 %1387
      %1389 = vrot.lane.b32.xlu0 %v1365, 8
      %v1390 = vpop.permute.xlu0 %1389
      %1391 = vrot.lane.b32.xlu0 %v1366, 8
      %v1392 = vpop.permute.xlu0 %1391
      %1393 = vrot.lane.b32.xlu0 %v1367, 8
      %v1394 = vpop.permute.xlu0 %1393
      %1395 = vrot.lane.b32.xlu0 %v1368, 8
      %v1396 = vpop.permute.xlu0 %1395
      %1397 = vrot.lane.b32.xlu0 %v1369, 8
      %v1398 = vpop.permute.xlu0 %1397
      %1399 = vrot.lane.b32.xlu0 %v1370, 8
      %v1400 = vpop.permute.xlu0 %1399
      %1401 = vrot.lane.b32.xlu0 %v1371, 8
      %v1402 = vpop.permute.xlu0 %1401
      %1403 = vrot.lane.b32.xlu0 %v1372, 8
      %v1404 = vpop.permute.xlu0 %1403
      %v1405 = vunpack.c.l.b16 %v1100
      %v1406 = vunpack.c.l.b16 %v1103
      %v1407 = vunpack.c.l.b16 %v1107
      %v1408 = vunpack.c.l.b16 %v1110
      %v1409 = vunpack.c.l.b16 %v1114
      %v1410 = vunpack.c.l.b16 %v1117
      %v1411 = vunpack.c.l.b16 %v1121
      %v1412 = vunpack.c.l.b16 %v1124
      %v1413 = vunpack.c.l.b16 %v1128
      %v1414 = vunpack.c.l.b16 %v1131
      %v1415 = vunpack.c.l.b16 %v1135
      %v1416 = vunpack.c.l.b16 %v1138
      %v1417 = vunpack.c.l.b16 %v1142
      %v1418 = vunpack.c.l.b16 %v1145
      %v1419 = vunpack.c.l.b16 %v1149
      %v1420 = vunpack.c.l.b16 %v1152
      %v1421 = vunpack.c.l.b16 %v1156
      %v1422 = vunpack.c.l.b16 %v1159
      %v1423 = vunpack.c.l.b16 %v1163
      %v1424 = vunpack.c.l.b16 %v1166
      %v1425 = vunpack.c.l.b16 %v1170
      %v1426 = vunpack.c.l.b16 %v1173
      %v1427 = vunpack.c.l.b16 %v1177
      %v1428 = vunpack.c.l.b16 %v1180
      %v1429 = vunpack.c.l.b16 %v1184
      %v1430 = vunpack.c.l.b16 %v1187
      %v1431 = vunpack.c.l.b16 %v1191
      %v1432 = vunpack.c.l.b16 %v1194
      %v1433 = vunpack.c.l.b16 %v1198
      %v1434 = vunpack.c.l.b16 %v1201
      %v1435 = vunpack.c.l.b16 %v1205
      %v1436 = vunpack.c.l.b16 %v1208
      %v1437 = vpack.c.b16 %v1406, %v1405
      %v1438 = vpack.c.b16 %v1408, %v1407
      %v1439 = vpack.c.b16 %v1410, %v1409
      %v1440 = vpack.c.b16 %v1412, %v1411
      %v1441 = vpack.c.b16 %v1414, %v1413
      %v1442 = vpack.c.b16 %v1416, %v1415
      %v1443 = vpack.c.b16 %v1418, %v1417
      %v1444 = vpack.c.b16 %v1420, %v1419
      %v1445 = vpack.c.b16 %v1422, %v1421
      %v1446 = vpack.c.b16 %v1424, %v1423
      %v1447 = vpack.c.b16 %v1426, %v1425
      %v1448 = vpack.c.b16 %v1428, %v1427
      %v1449 = vpack.c.b16 %v1430, %v1429
      %v1450 = vpack.c.b16 %v1432, %v1431
      %v1451 = vpack.c.b16 %v1434, %v1433
      %v1452 = vpack.c.b16 %v1436, %v1435
      %1453 = vrot.lane.b32.xlu0 %v1437, 16
      %v1454 = vpop.permute.xlu0 %1453
      %1455 = vrot.lane.b32.xlu0 %v1438, 16
      %v1456 = vpop.permute.xlu0 %1455
      %1457 = vrot.lane.b32.xlu0 %v1439, 16
      %v1458 = vpop.permute.xlu0 %1457
      %1459 = vrot.lane.b32.xlu0 %v1440, 16
      %v1460 = vpop.permute.xlu0 %1459
      %1461 = vrot.lane.b32.xlu0 %v1441, 16
      %v1462 = vpop.permute.xlu0 %1461
      %1463 = vrot.lane.b32.xlu0 %v1442, 16
      %v1464 = vpop.permute.xlu0 %1463
      %1465 = vrot.lane.b32.xlu0 %v1443, 16
      %v1466 = vpop.permute.xlu0 %1465
      %1467 = vrot.lane.b32.xlu0 %v1444, 16
      %v1468 = vpop.permute.xlu0 %1467
      %1469 = vrot.lane.b32.xlu0 %v1445, 16
      %v1470 = vpop.permute.xlu0 %1469
      %1471 = vrot.lane.b32.xlu0 %v1446, 16
      %v1472 = vpop.permute.xlu0 %1471
      %1473 = vrot.lane.b32.xlu0 %v1447, 16
      %v1474 = vpop.permute.xlu0 %1473
      %1475 = vrot.lane.b32.xlu0 %v1448, 16
      %v1476 = vpop.permute.xlu0 %1475
      %1477 = vrot.lane.b32.xlu0 %v1449, 16
      %v1478 = vpop.permute.xlu0 %1477
      %1479 = vrot.lane.b32.xlu0 %v1450, 16
      %v1480 = vpop.permute.xlu0 %1479
      %1481 = vrot.lane.b32.xlu0 %v1451, 16
      %v1482 = vpop.permute.xlu0 %1481
      %1483 = vrot.lane.b32.xlu0 %v1452, 16
      %v1484 = vpop.permute.xlu0 %1483
      %v1485 = vunpack.c.l.b16 %v640
      %v1486 = vunpack.c.l.b16 %v641
      %v1487 = vpack.c.b16 %v1486, %v1485
      %1488 = vrot.lane.b32.xlu0 %v1310, 24
      %v1489 = vpop.permute.xlu0 %1488
      %1490 = vrot.lane.b32.xlu0 %v1311, 24
      %v1491 = vpop.permute.xlu0 %1490
      %1492 = vrot.lane.b32.xlu0 %v1312, 24
      %v1493 = vpop.permute.xlu0 %1492
      %1494 = vrot.lane.b32.xlu0 %v1313, 24
      %v1495 = vpop.permute.xlu0 %1494
      %1496 = vrot.lane.b32.xlu0 %v1314, 24
      %v1497 = vpop.permute.xlu0 %1496
      %1498 = vrot.lane.b32.xlu0 %v1315, 24
      %v1499 = vpop.permute.xlu0 %1498
      %1500 = vrot.lane.b32.xlu0 %v1316, 24
      %v1501 = vpop.permute.xlu0 %1500
      %1502 = vrot.lane.b32.xlu0 %v1317, 24
      %v1503 = vpop.permute.xlu0 %1502
      %1504 = vrot.lane.b32.xlu0 %v1318, 24
      %v1505 = vpop.permute.xlu0 %1504
      %1506 = vrot.lane.b32.xlu0 %v1319, 24
      %v1507 = vpop.permute.xlu0 %1506
      %1508 = vrot.lane.b32.xlu0 %v1320, 24
      %v1509 = vpop.permute.xlu0 %1508
      %1510 = vrot.lane.b32.xlu0 %v1321, 24
      %v1511 = vpop.permute.xlu0 %1510
      %1512 = vrot.lane.b32.xlu0 %v1322, 24
      %v1513 = vpop.permute.xlu0 %1512
      %1514 = vrot.lane.b32.xlu0 %v1323, 24
      %v1515 = vpop.permute.xlu0 %1514
      %1516 = vrot.lane.b32.xlu0 %v1324, 24
      %v1517 = vpop.permute.xlu0 %1516
      %1518 = vrot.lane.b32.xlu0 %v1487, 24
      %v1519 = vpop.permute.xlu0 %1518
      %v1520 = vunpack.c.l.b16 %v1222
      %v1521 = vunpack.c.l.b16 %v1232
      %v1522 = vpack.c.b16 %v1521, %v1520
      %1523 = vrot.lane.b32.xlu0 %v1358, 32
      %v1524 = vpop.permute.xlu0 %1523
      %1525 = vrot.lane.b32.xlu0 %v1359, 32
      %v1526 = vpop.permute.xlu0 %1525
      %1527 = vrot.lane.b32.xlu0 %v1360, 32
      %v1528 = vpop.permute.xlu0 %1527
      %1529 = vrot.lane.b32.xlu0 %v1361, 32
      %v1530 = vpop.permute.xlu0 %1529
      %1531 = vrot.lane.b32.xlu0 %v1362, 32
      %v1532 = vpop.permute.xlu0 %1531
      %1533 = vrot.lane.b32.xlu0 %v1363, 32
      %v1534 = vpop.permute.xlu0 %1533
      %1535 = vrot.lane.b32.xlu0 %v1364, 32
      %v1536 = vpop.permute.xlu0 %1535
      %1537 = vrot.lane.b32.xlu0 %v1365, 32
      %v1538 = vpop.permute.xlu0 %1537
      %1539 = vrot.lane.b32.xlu0 %v1366, 32
      %v1540 = vpop.permute.xlu0 %1539
      %1541 = vrot.lane.b32.xlu0 %v1367, 32
      %v1542 = vpop.permute.xlu0 %1541
      %1543 = vrot.lane.b32.xlu0 %v1368, 32
      %v1544 = vpop.permute.xlu0 %1543
      %1545 = vrot.lane.b32.xlu0 %v1369, 32
      %v1546 = vpop.permute.xlu0 %1545
      %1547 = vrot.lane.b32.xlu0 %v1370, 32
      %v1548 = vpop.permute.xlu0 %1547
      %1549 = vrot.lane.b32.xlu0 %v1371, 32
      %v1550 = vpop.permute.xlu0 %1549
      %1551 = vrot.lane.b32.xlu0 %v1372, 32
      %v1552 = vpop.permute.xlu0 %1551
      %1553 = vrot.lane.b32.xlu0 %v1522, 32
      %v1554 = vpop.permute.xlu0 %1553
      %v1555 = vunpack.c.l.b16 %v1239
      %v1556 = vunpack.c.l.b16 %v1242
      %v1557 = vpack.c.b16 %v1556, %v1555
      %1558 = vrot.lane.b32.xlu0 %v1438, 40
      %v1559 = vpop.permute.xlu0 %1558
      %1560 = vrot.lane.b32.xlu0 %v1439, 40
      %v1561 = vpop.permute.xlu0 %1560
      %1562 = vrot.lane.b32.xlu0 %v1440, 40
      %v1563 = vpop.permute.xlu0 %1562
      %1564 = vrot.lane.b32.xlu0 %v1441, 40
      %v1565 = vpop.permute.xlu0 %1564
      %1566 = vrot.lane.b32.xlu0 %v1442, 40
      %v1567 = vpop.permute.xlu0 %1566
      %1568 = vrot.lane.b32.xlu0 %v1443, 40
      %v1569 = vpop.permute.xlu0 %1568
      %1570 = vrot.lane.b32.xlu0 %v1444, 40
      %v1571 = vpop.permute.xlu0 %1570
      %1572 = vrot.lane.b32.xlu0 %v1445, 40
      %v1573 = vpop.permute.xlu0 %1572
      %1574 = vrot.lane.b32.xlu0 %v1446, 40
      %v1575 = vpop.permute.xlu0 %1574
      %1576 = vrot.lane.b32.xlu0 %v1447, 40
      %v1577 = vpop.permute.xlu0 %1576
      %1578 = vrot.lane.b32.xlu0 %v1448, 40
      %v1579 = vpop.permute.xlu0 %1578
      %1580 = vrot.lane.b32.xlu0 %v1449, 40
      %v1581 = vpop.permute.xlu0 %1580
      %1582 = vrot.lane.b32.xlu0 %v1450, 40
      %v1583 = vpop.permute.xlu0 %1582
      %1584 = vrot.lane.b32.xlu0 %v1451, 40
      %v1585 = vpop.permute.xlu0 %1584
      %1586 = vrot.lane.b32.xlu0 %v1452, 40
      %v1587 = vpop.permute.xlu0 %1586
      %1588 = vrot.lane.b32.xlu0 %v1557, 40
      %v1589 = vpop.permute.xlu0 %1588
      %v1590 = vunpack.c.l.b16 %v656
      %v1591 = vunpack.c.l.b16 %v657
      %v1592 = vpack.c.b16 %v1591, %v1590
      %1593 = vrot.lane.b32.xlu0 %v1311, 48
      %v1594 = vpop.permute.xlu0 %1593
      %1595 = vrot.lane.b32.xlu0 %v1312, 48
      %v1596 = vpop.permute.xlu0 %1595
      %1597 = vrot.lane.b32.xlu0 %v1313, 48
      %v1598 = vpop.permute.xlu0 %1597
      %1599 = vrot.lane.b32.xlu0 %v1314, 48
      %v1600 = vpop.permute.xlu0 %1599
      %1601 = vrot.lane.b32.xlu0 %v1315, 48
      %v1602 = vpop.permute.xlu0 %1601
      %1603 = vrot.lane.b32.xlu0 %v1316, 48
      %v1604 = vpop.permute.xlu0 %1603
      %1605 = vrot.lane.b32.xlu0 %v1317, 48
      %v1606 = vpop.permute.xlu0 %1605
      %1607 = vrot.lane.b32.xlu0 %v1318, 48
      %v1608 = vpop.permute.xlu0 %1607
      %1609 = vrot.lane.b32.xlu0 %v1319, 48
      %v1610 = vpop.permute.xlu0 %1609
      %1611 = vrot.lane.b32.xlu0 %v1320, 48
      %v1612 = vpop.permute.xlu0 %1611
      %1613 = vrot.lane.b32.xlu0 %v1321, 48
      %v1614 = vpop.permute.xlu0 %1613
      %1615 = vrot.lane.b32.xlu0 %v1322, 48
      %v1616 = vpop.permute.xlu0 %1615
      %1617 = vrot.lane.b32.xlu0 %v1323, 48
      %v1618 = vpop.permute.xlu0 %1617
      %1619 = vrot.lane.b32.xlu0 %v1324, 48
      %v1620 = vpop.permute.xlu0 %1619
      %1621 = vrot.lane.b32.xlu0 %v1487, 48
      %v1622 = vpop.permute.xlu0 %1621
      %1623 = vrot.lane.b32.xlu0 %v1592, 48
      %v1624 = vpop.permute.xlu0 %1623
      %v1625 = vunpack.c.l.b16 %v1256
      %v1626 = vunpack.c.l.b16 %v1266
      %v1627 = vpack.c.b16 %v1626, %v1625
      %1628 = vrot.lane.b32.xlu0 %v1359, 56
      %v1629 = vpop.permute.xlu0 %1628
      %1630 = vrot.lane.b32.xlu0 %v1360, 56
      %v1631 = vpop.permute.xlu0 %1630
      %1632 = vrot.lane.b32.xlu0 %v1361, 56
      %v1633 = vpop.permute.xlu0 %1632
      %1634 = vrot.lane.b32.xlu0 %v1362, 56
      %v1635 = vpop.permute.xlu0 %1634
      %1636 = vrot.lane.b32.xlu0 %v1363, 56
      %v1637 = vpop.permute.xlu0 %1636
      %1638 = vrot.lane.b32.xlu0 %v1364, 56
      %v1639 = vpop.permute.xlu0 %1638
      %1640 = vrot.lane.b32.xlu0 %v1365, 56
      %v1641 = vpop.permute.xlu0 %1640
      %1642 = vrot.lane.b32.xlu0 %v1366, 56
      %v1643 = vpop.permute.xlu0 %1642
      %1644 = vrot.lane.b32.xlu0 %v1367, 56
      %v1645 = vpop.permute.xlu0 %1644
      %1646 = vrot.lane.b32.xlu0 %v1368, 56
      %v1647 = vpop.permute.xlu0 %1646
      %1648 = vrot.lane.b32.xlu0 %v1369, 56
      %v1649 = vpop.permute.xlu0 %1648
      %1650 = vrot.lane.b32.xlu0 %v1370, 56
      %v1651 = vpop.permute.xlu0 %1650
      %1652 = vrot.lane.b32.xlu0 %v1371, 56
      %v1653 = vpop.permute.xlu0 %1652
      %1654 = vrot.lane.b32.xlu0 %v1372, 56
      %v1655 = vpop.permute.xlu0 %1654
      %1656 = vrot.lane.b32.xlu0 %v1522, 56
      %v1657 = vpop.permute.xlu0 %1656
      %1658 = vrot.lane.b32.xlu0 %v1627, 56
      %v1659 = vpop.permute.xlu0 %1658
      %v1660 = vunpack.c.l.b16 %v1273
      %v1661 = vunpack.c.l.b16 %v1276
      %v1662 = vpack.c.b16 %v1661, %v1660
      %1663 = vrot.lane.b32.xlu0 %v1439, 64
      %v1664 = vpop.permute.xlu0 %1663
      %1665 = vrot.lane.b32.xlu0 %v1440, 64
      %v1666 = vpop.permute.xlu0 %1665
      %1667 = vrot.lane.b32.xlu0 %v1441, 64
      %v1668 = vpop.permute.xlu0 %1667
      %1669 = vrot.lane.b32.xlu0 %v1442, 64
      %v1670 = vpop.permute.xlu0 %1669
      %1671 = vrot.lane.b32.xlu0 %v1443, 64
      %v1672 = vpop.permute.xlu0 %1671
      %1673 = vrot.lane.b32.xlu0 %v1444, 64
      %v1674 = vpop.permute.xlu0 %1673
      %1675 = vrot.lane.b32.xlu0 %v1445, 64
      %v1676 = vpop.permute.xlu0 %1675
      %1677 = vrot.lane.b32.xlu0 %v1446, 64
      %v1678 = vpop.permute.xlu0 %1677
      %1679 = vrot.lane.b32.xlu0 %v1447, 64
      %v1680 = vpop.permute.xlu0 %1679
      %1681 = vrot.lane.b32.xlu0 %v1448, 64
      %v1682 = vpop.permute.xlu0 %1681
      %1683 = vrot.lane.b32.xlu0 %v1449, 64
      %v1684 = vpop.permute.xlu0 %1683
      %1685 = vrot.lane.b32.xlu0 %v1450, 64
      %v1686 = vpop.permute.xlu0 %1685
      %1687 = vrot.lane.b32.xlu0 %v1451, 64
      %v1688 = vpop.permute.xlu0 %1687
      %1689 = vrot.lane.b32.xlu0 %v1452, 64
      %v1690 = vpop.permute.xlu0 %1689
      %1691 = vrot.lane.b32.xlu0 %v1557, 64
      %v1692 = vpop.permute.xlu0 %1691
      %1693 = vrot.lane.b32.xlu0 %v1662, 64
      %v1694 = vpop.permute.xlu0 %1693
      %vm1695 = vcmask 64512
      %v1698 = vsel %vm1695, %v1309, %v1374
      %v1701 = vsel %vm1695, %v1310, %v1376
      %v1704 = vsel %vm1695, %v1311, %v1378
      %v1707 = vsel %vm1695, %v1312, %v1380
      %v1710 = vsel %vm1695, %v1313, %v1382
      %v1713 = vsel %vm1695, %v1314, %v1384
      %v1716 = vsel %vm1695, %v1315, %v1386
      %v1719 = vsel %vm1695, %v1316, %v1388
      %v1722 = vsel %vm1695, %v1317, %v1390
      %v1725 = vsel %vm1695, %v1318, %v1392
      %v1728 = vsel %vm1695, %v1319, %v1394
      %v1731 = vsel %vm1695, %v1320, %v1396
      %v1734 = vsel %vm1695, %v1321, %v1398
      %v1737 = vsel %vm1695, %v1322, %v1400
      %v1740 = vsel %vm1695, %v1323, %v1402
      %v1743 = vsel %vm1695, %v1324, %v1404
      %vm1744 = vcmask 130048
      %v1746 = vsel %vm1744, %v1698, %v1454
      %v1748 = vsel %vm1744, %v1701, %v1456
      %v1750 = vsel %vm1744, %v1704, %v1458
      %v1752 = vsel %vm1744, %v1707, %v1460
      %v1754 = vsel %vm1744, %v1710, %v1462
      %v1756 = vsel %vm1744, %v1713, %v1464
      %v1758 = vsel %vm1744, %v1716, %v1466
      %v1760 = vsel %vm1744, %v1719, %v1468
      %v1762 = vsel %vm1744, %v1722, %v1470
      %v1764 = vsel %vm1744, %v1725, %v1472
      %v1766 = vsel %vm1744, %v1728, %v1474
      %v1768 = vsel %vm1744, %v1731, %v1476
      %v1770 = vsel %vm1744, %v1734, %v1478
      %v1772 = vsel %vm1744, %v1737, %v1480
      %v1774 = vsel %vm1744, %v1740, %v1482
      %v1776 = vsel %vm1744, %v1743, %v1484
      %vm1777 = vcmask 195584
      %v1779 = vsel %vm1777, %v1746, %v1489
      %v1781 = vsel %vm1777, %v1748, %v1491
      %v1783 = vsel %vm1777, %v1750, %v1493
      %v1785 = vsel %vm1777, %v1752, %v1495
      %v1787 = vsel %vm1777, %v1754, %v1497
      %v1789 = vsel %vm1777, %v1756, %v1499
      %v1791 = vsel %vm1777, %v1758, %v1501
      %v1793 = vsel %vm1777, %v1760, %v1503
      %v1795 = vsel %vm1777, %v1762, %v1505
      %v1797 = vsel %vm1777, %v1764, %v1507
      %v1799 = vsel %vm1777, %v1766, %v1509
      %v1801 = vsel %vm1777, %v1768, %v1511
      %v1803 = vsel %vm1777, %v1770, %v1513
      %v1805 = vsel %vm1777, %v1772, %v1515
      %v1807 = vsel %vm1777, %v1774, %v1517
      %v1809 = vsel %vm1777, %v1776, %v1519
      %vm1810 = vcmask 261120
      %v1812 = vsel %vm1810, %v1779, %v1524
      %v1814 = vsel %vm1810, %v1781, %v1526
      %v1816 = vsel %vm1810, %v1783, %v1528
      %v1818 = vsel %vm1810, %v1785, %v1530
      %v1820 = vsel %vm1810, %v1787, %v1532
      %v1822 = vsel %vm1810, %v1789, %v1534
      %v1824 = vsel %vm1810, %v1791, %v1536
      %v1826 = vsel %vm1810, %v1793, %v1538
      %v1828 = vsel %vm1810, %v1795, %v1540
      %v1830 = vsel %vm1810, %v1797, %v1542
      %v1832 = vsel %vm1810, %v1799, %v1544
      %v1834 = vsel %vm1810, %v1801, %v1546
      %v1836 = vsel %vm1810, %v1803, %v1548
      %v1838 = vsel %vm1810, %v1805, %v1550
      %v1840 = vsel %vm1810, %v1807, %v1552
      %v1842 = vsel %vm1810, %v1809, %v1554
      %vm1843 = vcmask 326656
      %v1845 = vsel %vm1843, %v1812, %v1559
      %v1847 = vsel %vm1843, %v1814, %v1561
      %v1849 = vsel %vm1843, %v1816, %v1563
      %v1851 = vsel %vm1843, %v1818, %v1565
      %v1853 = vsel %vm1843, %v1820, %v1567
      %v1855 = vsel %vm1843, %v1822, %v1569
      %v1857 = vsel %vm1843, %v1824, %v1571
      %v1859 = vsel %vm1843, %v1826, %v1573
      %v1861 = vsel %vm1843, %v1828, %v1575
      %v1863 = vsel %vm1843, %v1830, %v1577
      %v1865 = vsel %vm1843, %v1832, %v1579
      %v1867 = vsel %vm1843, %v1834, %v1581
      %v1869 = vsel %vm1843, %v1836, %v1583
      %v1871 = vsel %vm1843, %v1838, %v1585
      %v1873 = vsel %vm1843, %v1840, %v1587
      %v1875 = vsel %vm1843, %v1842, %v1589
      %vm1876 = vcmask 392192
      %v1878 = vsel %vm1876, %v1845, %v1594
      %v1880 = vsel %vm1876, %v1847, %v1596
      %v1882 = vsel %vm1876, %v1849, %v1598
      %v1884 = vsel %vm1876, %v1851, %v1600
      %v1886 = vsel %vm1876, %v1853, %v1602
      %v1888 = vsel %vm1876, %v1855, %v1604
      %v1890 = vsel %vm1876, %v1857, %v1606
      %v1892 = vsel %vm1876, %v1859, %v1608
      %v1894 = vsel %vm1876, %v1861, %v1610
      %v1896 = vsel %vm1876, %v1863, %v1612
      %v1898 = vsel %vm1876, %v1865, %v1614
      %v1900 = vsel %vm1876, %v1867, %v1616
      %v1902 = vsel %vm1876, %v1869, %v1618
      %v1904 = vsel %vm1876, %v1871, %v1620
      %v1906 = vsel %vm1876, %v1873, %v1622
      %v1908 = vsel %vm1876, %v1875, %v1624
      %vm1909 = vcmask 457728
      %v1911 = vsel %vm1909, %v1878, %v1629
      %v1913 = vsel %vm1909, %v1880, %v1631
      %v1915 = vsel %vm1909, %v1882, %v1633
      %v1917 = vsel %vm1909, %v1884, %v1635
      %v1919 = vsel %vm1909, %v1886, %v1637
      %v1921 = vsel %vm1909, %v1888, %v1639
      %v1923 = vsel %vm1909, %v1890, %v1641
      %v1925 = vsel %vm1909, %v1892, %v1643
      %v1927 = vsel %vm1909, %v1894, %v1645
      %v1929 = vsel %vm1909, %v1896, %v1647
      %v1931 = vsel %vm1909, %v1898, %v1649
      %v1933 = vsel %vm1909, %v1900, %v1651
      %v1935 = vsel %vm1909, %v1902, %v1653
      %v1937 = vsel %vm1909, %v1904, %v1655
      %v1939 = vsel %vm1909, %v1906, %v1657
      %v1941 = vsel %vm1909, %v1908, %v1659
      %vm1942 = vcmask 523264
      %v1944 = vsel %vm1942, %v1911, %v1664
      %v1946 = vsel %vm1942, %v1913, %v1666
      %v1948 = vsel %vm1942, %v1915, %v1668
      %v1950 = vsel %vm1942, %v1917, %v1670
      %v1952 = vsel %vm1942, %v1919, %v1672
      %v1954 = vsel %vm1942, %v1921, %v1674
      %v1956 = vsel %vm1942, %v1923, %v1676
      %v1958 = vsel %vm1942, %v1925, %v1678
      %v1960 = vsel %vm1942, %v1927, %v1680
      %v1962 = vsel %vm1942, %v1929, %v1682
      %v1964 = vsel %vm1942, %v1931, %v1684
      %v1966 = vsel %vm1942, %v1933, %v1686
      %v1968 = vsel %vm1942, %v1935, %v1688
      %v1970 = vsel %vm1942, %v1937, %v1690
      %v1972 = vsel %vm1942, %v1939, %v1692
      %v1974 = vsel %vm1942, %v1941, %v1694
      %v1975 = vld [vmem:[%s4] sm:$0xf]
      %v1976 = vld [vmem:[%s4 + $0x4] sm:$0xf]
      %v1977 = vld [vmem:[%s4 + $0x8] sm:$0xf]
      %v1978 = vld [vmem:[%s4 + $0xc] sm:$0xf]
      %v1979 = vld [vmem:[%s4 + $0x10] sm:$0xf]
      %v1980 = vld [vmem:[%s4 + $0x14] sm:$0xf]
      %v1981 = vld [vmem:[%s4 + $0x18] sm:$0xf]
      %v1982 = vld [vmem:[%s4 + $0x1c] sm:$0xf]
      %v1983 = vld [vmem:[%s4 + $0x20] sm:$0xf]
      %v1993 = vunpack.c.l.b16 %v1975
      %v1994 = vunpack.c.l.b16 %v1976
      %v1995 = vunpack.c.l.b16 %v1977
      %v1996 = vunpack.c.l.b16 %v1978
      %v1997 = vunpack.c.l.b16 %v1979
      %v1998 = vunpack.c.l.b16 %v1980
      %v1999 = vunpack.c.l.b16 %v1981
      %v2000 = vunpack.c.l.b16 %v1982
      %v2001 = vunpack.c.l.b16 %v1983
      %v2002 = vpack.c.b16 %v1994, %v1993
      %v2003 = vpack.c.b16 %v1996, %v1995
      %v2004 = vpack.c.b16 %v1998, %v1997
      %v2005 = vpack.c.b16 %v2000, %v1999
      %v2006 = vpack.c.b16 %v2001, %v2001
      %vm2011 = vcmask 588800
      %v2012 = vsel %vm2011, %v1944, 0
      %v2014 = vsel %vm2011, %v1946, 0
      %v2016 = vsel %vm2011, %v1948, 0
      %v2018 = vsel %vm2011, %v1950, 0
      %v2020 = vsel %vm2011, %v1952, 0
      %v2022 = vsel %vm2011, %v1954, 0
      %v2024 = vsel %vm2011, %v1956, 0
      %v2026 = vsel %vm2011, %v1958, 0
      %v2028 = vsel %vm2011, %v1960, 0
      %v2030 = vsel %vm2011, %v1962, 0
      %v2032 = vsel %vm2011, %v1964, 0
      %v2034 = vsel %vm2011, %v1966, 0
      %v2036 = vsel %vm2011, %v1968, 0
      %v2038 = vsel %vm2011, %v1970, 0
      %v2040 = vsel %vm2011, %v1972, 0
      %v2042 = vsel %vm2011, %v1974, 0
      %vm2044 = vcmask 1043456
      %v2046 = vsel %vm2044, %v2006, 0
      %2048 = vmatprep.subr.bf16.mxu0 0
      %2049 = vmatpush1.bf16.msra.mxu0 %v2002
      %2050 = vmatprep.subr.bf16.mxu0 0
      %2051 = vmatpush1.bf16.msra.mxu0 %v2003
      %2052 = vmatprep.subr.bf16.mxu0 0
      %2053 = vmatpush1.bf16.msra.mxu0 %v2004
      %2054 = vmatprep.subr.bf16.mxu0 0
      %2055 = vmatpush1.bf16.msra.mxu0 %v2005
      %2056 = vmatprep.subr.bf16.mxu0 0
      %2057 = vmatpush1.bf16.msra.mxu0 %v2046
      %2058 = vmatprep.subr.bf16.mxu0 0
      %2059 = vmatpush1.bf16.msra.mxu0 0
      %2060 = vmatprep.subr.bf16.mxu0 0
      %2061 = vmatpush1.bf16.msra.mxu0 0
      %2062 = vmatprep.subr.bf16.mxu0 0
      %2063 = vmatpush1.bf16.msra.mxu0 0
      %2064 = vmatprep.subr.bf16.mxu0 0
      %2065 = vmatpush1.bf16.msra.mxu0 0
      %2066 = vmatprep.subr.bf16.mxu0 0
      %2067 = vmatpush1.bf16.msra.mxu0 0
      %2068 = vmatprep.subr.bf16.mxu0 0
      %2069 = vmatpush1.bf16.msra.mxu0 0
      %2070 = vmatprep.subr.bf16.mxu0 0
      %2071 = vmatpush1.bf16.msra.mxu0 0
      %2072 = vmatprep.subr.bf16.mxu0 0
      %2073 = vmatpush1.bf16.msra.mxu0 0
      %2074 = vmatprep.subr.bf16.mxu0 0
      %2075 = vmatpush1.bf16.msra.mxu0 0
      %2076 = vmatprep.subr.bf16.mxu0 0
      %2077 = vmatpush1.bf16.msra.mxu0 0
      %2078 = vmatprep.subr.bf16.mxu0 0
      %2079 = vmatpush1.bf16.msra.mxu0 0
      %2080 = vmatprep.mubr.bf16.mxu0 0
      %2081 = vmatmul.mubr.bf16.gmra.mrb[0].mxu0 %v2012
      %v2082 = vpop.f32.mrb[0].mxu0
      %v2083 = vadd.f32 0.0, %v2082
      %v2084 = vpop.f32.mrb[0].mxu0
      %v2085 = vpop.f32.mrb[0].mxu0
      %v2086 = vadd.f32 0.0, %v2085
      %v2087 = vpop.f32.mrb[0].mxu0
      %2088 = vmatprep.mubr.bf16.mxu0 0
      %2089 = vmatmul.mubr.bf16.gmra.mrb[0].mxu0 %v2014
      %v2090 = vpop.f32.mrb[0].mxu0
      %v2091 = vadd.f32 0.0, %v2090
      %v2092 = vpop.f32.mrb[0].mxu0
      %v2093 = vpop.f32.mrb[0].mxu0
      %v2094 = vadd.f32 0.0, %v2093
      %v2095 = vpop.f32.mrb[0].mxu0
      %2096 = vmatprep.mubr.bf16.mxu0 0
      %2097 = vmatmul.mubr.bf16.gmra.mrb[0].mxu0 %v2016
      %v2098 = vpop.f32.mrb[0].mxu0
      %v2099 = vadd.f32 0.0, %v2098
      %v2100 = vpop.f32.mrb[0].mxu0
      %v2101 = vpop.f32.mrb[0].mxu0
      %v2102 = vadd.f32 0.0, %v2101
      %v2103 = vpop.f32.mrb[0].mxu0
      %2104 = vmatprep.mubr.bf16.mxu0 0
      %2105 = vmatmul.mubr.bf16.gmra.mrb[0].mxu0 %v2018
      %v2106 = vpop.f32.mrb[0].mxu0
      %v2107 = vadd.f32 0.0, %v2106
      %v2108 = vpop.f32.mrb[0].mxu0
      %v2109 = vpop.f32.mrb[0].mxu0
      %v2110 = vadd.f32 0.0, %v2109
      %v2111 = vpop.f32.mrb[0].mxu0
      %2112 = vmatprep.mubr.bf16.mxu0 0
      %2113 = vmatmul.mubr.bf16.gmra.mrb[0].mxu0 %v2020
      %v2114 = vpop.f32.mrb[0].mxu0
      %v2115 = vadd.f32 0.0, %v2114
      %v2116 = vpop.f32.mrb[0].mxu0
      %v2117 = vpop.f32.mrb[0].mxu0
      %v2118 = vadd.f32 0.0, %v2117
      %v2119 = vpop.f32.mrb[0].mxu0
      %2120 = vmatprep.mubr.bf16.mxu0 0
      %2121 = vmatmul.mubr.bf16.gmra.mrb[0].mxu0 %v2022
      %v2122 = vpop.f32.mrb[0].mxu0
      %v2123 = vadd.f32 0.0, %v2122
      %v2124 = vpop.f32.mrb[0].mxu0
      %v2125 = vpop.f32.mrb[0].mxu0
      %v2126 = vadd.f32 0.0, %v2125
      %v2127 = vpop.f32.mrb[0].mxu0
      %2128 = vmatprep.mubr.bf16.mxu0 0
      %2129 = vmatmul.mubr.bf16.gmra.mrb[0].mxu0 %v2024
      %v2130 = vpop.f32.mrb[0].mxu0
      %v2131 = vadd.f32 0.0, %v2130
      %v2132 = vpop.f32.mrb[0].mxu0
      %v2133 = vpop.f32.mrb[0].mxu0
      %v2134 = vadd.f32 0.0, %v2133
      %v2135 = vpop.f32.mrb[0].mxu0
      %2136 = vmatprep.mubr.bf16.mxu0 0
      %2137 = vmatmul.mubr.bf16.gmra.mrb[0].mxu0 %v2026
      %v2138 = vpop.f32.mrb[0].mxu0
      %v2139 = vadd.f32 0.0, %v2138
      %v2140 = vpop.f32.mrb[0].mxu0
      %v2141 = vpop.f32.mrb[0].mxu0
      %v2142 = vadd.f32 0.0, %v2141
      %v2143 = vpop.f32.mrb[0].mxu0
      %2144 = vmatprep.mubr.bf16.mxu0 0
      %2145 = vmatmul.mubr.bf16.gmra.mrb[0].mxu0 %v2028
      %v2146 = vpop.f32.mrb[0].mxu0
      %v2147 = vadd.f32 0.0, %v2146
      %v2148 = vpop.f32.mrb[0].mxu0
      %v2149 = vpop.f32.mrb[0].mxu0
      %v2150 = vadd.f32 0.0, %v2149
      %v2151 = vpop.f32.mrb[0].mxu0
      %2152 = vmatprep.mubr.bf16.mxu0 0
      %2153 = vmatmul.mubr.bf16.gmra.mrb[0].mxu0 %v2030
      %v2154 = vpop.f32.mrb[0].mxu0
      %v2155 = vadd.f32 0.0, %v2154
      %v2156 = vpop.f32.mrb[0].mxu0
      %v2157 = vpop.f32.mrb[0].mxu0
      %v2158 = vadd.f32 0.0, %v2157
      %v2159 = vpop.f32.mrb[0].mxu0
      %2160 = vmatprep.mubr.bf16.mxu0 0
      %2161 = vmatmul.mubr.bf16.gmra.mrb[0].mxu0 %v2032
      %v2162 = vpop.f32.mrb[0].mxu0
      %v2163 = vadd.f32 0.0, %v2162
      %v2164 = vpop.f32.mrb[0].mxu0
      %v2165 = vpop.f32.mrb[0].mxu0
      %v2166 = vadd.f32 0.0, %v2165
      %v2167 = vpop.f32.mrb[0].mxu0
      %2168 = vmatprep.mubr.bf16.mxu0 0
      %2169 = vmatmul.mubr.bf16.gmra.mrb[0].mxu0 %v2034
      %v2170 = vpop.f32.mrb[0].mxu0
      %v2171 = vadd.f32 0.0, %v2170
      %v2172 = vpop.f32.mrb[0].mxu0
      %v2173 = vpop.f32.mrb[0].mxu0
      %v2174 = vadd.f32 0.0, %v2173
      %v2175 = vpop.f32.mrb[0].mxu0
      %2176 = vmatprep.mubr.bf16.mxu0 0
      %2177 = vmatmul.mubr.bf16.gmra.mrb[0].mxu0 %v2036
      %v2178 = vpop.f32.mrb[0].mxu0
      %v2179 = vadd.f32 0.0, %v2178
      %v2180 = vpop.f32.mrb[0].mxu0
      %v2181 = vpop.f32.mrb[0].mxu0
      %v2182 = vadd.f32 0.0, %v2181
      %v2183 = vpop.f32.mrb[0].mxu0
      %2184 = vmatprep.mubr.bf16.mxu0 0
      %2185 = vmatmul.mubr.bf16.gmra.mrb[0].mxu0 %v2038
      %v2186 = vpop.f32.mrb[0].mxu0
      %v2187 = vadd.f32 0.0, %v2186
      %v2188 = vpop.f32.mrb[0].mxu0
      %v2189 = vpop.f32.mrb[0].mxu0
      %v2190 = vadd.f32 0.0, %v2189
      %v2191 = vpop.f32.mrb[0].mxu0
      %2192 = vmatprep.mubr.bf16.mxu0 0
      %2193 = vmatmul.mubr.bf16.gmra.mrb[0].mxu0 %v2040
      %v2194 = vpop.f32.mrb[0].mxu0
      %v2195 = vadd.f32 0.0, %v2194
      %v2196 = vpop.f32.mrb[0].mxu0
      %v2197 = vpop.f32.mrb[0].mxu0
      %v2198 = vadd.f32 0.0, %v2197
      %v2199 = vpop.f32.mrb[0].mxu0
      %2200 = vmatprep.mubr.bf16.mxu0 0
      %2201 = vmatmul.mubr.bf16.gmra.mrb[0].mxu0 %v2042
      %v2202 = vpop.f32.mrb[0].mxu0
      %v2203 = vadd.f32 0.0, %v2202
      %v2204 = vpop.f32.mrb[0].mxu0
      %v2205 = vpop.f32.mrb[0].mxu0
      %v2206 = vadd.f32 0.0, %v2205
      %v2207 = vpop.f32.mrb[0].mxu0
      %2208 = vdwg.mxu0
      %v2209 = vld [vmem:[%s5] sm:$0x1]
      %v2210 = vlaneseq
      %v2211 = vshrl.u32 %v2210, 7
      %v2212 = vsub.s32 0, %v2211
      %v2213 = vrot.slane %v2209, %v2212
      %v2214 = vmul.f32 %v2083, %v2213
      %v2215 = vmul.f32 %v2086, %v2213
      %v2216 = vmul.f32 %v2091, %v2213
      %v2217 = vmul.f32 %v2094, %v2213
      %v2218 = vmul.f32 %v2099, %v2213
      %v2219 = vmul.f32 %v2102, %v2213
      %v2220 = vmul.f32 %v2107, %v2213
      %v2221 = vmul.f32 %v2110, %v2213
      %v2222 = vmul.f32 %v2115, %v2213
      %v2223 = vmul.f32 %v2118, %v2213
      %v2224 = vmul.f32 %v2123, %v2213
      %v2225 = vmul.f32 %v2126, %v2213
      %v2226 = vmul.f32 %v2131, %v2213
      %v2227 = vmul.f32 %v2134, %v2213
      %v2228 = vmul.f32 %v2139, %v2213
      %v2229 = vmul.f32 %v2142, %v2213
      %v2230 = vmul.f32 %v2147, %v2213
      %v2231 = vmul.f32 %v2150, %v2213
      %v2232 = vmul.f32 %v2155, %v2213
      %v2233 = vmul.f32 %v2158, %v2213
      %v2234 = vmul.f32 %v2163, %v2213
      %v2235 = vmul.f32 %v2166, %v2213
      %v2236 = vmul.f32 %v2171, %v2213
      %v2237 = vmul.f32 %v2174, %v2213
      %v2238 = vmul.f32 %v2179, %v2213
      %v2239 = vmul.f32 %v2182, %v2213
      %v2240 = vmul.f32 %v2187, %v2213
      %v2241 = vmul.f32 %v2190, %v2213
      %v2242 = vmul.f32 %v2195, %v2213
      %v2243 = vmul.f32 %v2198, %v2213
      %v2244 = vmul.f32 %v2203, %v2213
      %v2245 = vmul.f32 %v2206, %v2213
      %v2246 = vld [vmem:[%s5 + $0x1] sm:$0x1]
      %v2247 = vlaneseq
      %v2248 = vshrl.u32 %v2247, 7
      %v2249 = vsub.s32 0, %v2248
      %v2250 = vrot.slane %v2246, %v2249
      %v2251 = vadd.f32 %v2214, %v2250
      %v2252 = vadd.f32 %v2215, %v2250
      %v2253 = vadd.f32 %v2216, %v2250
      %v2254 = vadd.f32 %v2217, %v2250
      %v2255 = vadd.f32 %v2218, %v2250
      %v2256 = vadd.f32 %v2219, %v2250
      %v2257 = vadd.f32 %v2220, %v2250
      %v2258 = vadd.f32 %v2221, %v2250
      %v2259 = vadd.f32 %v2222, %v2250
      %v2260 = vadd.f32 %v2223, %v2250
      %v2261 = vadd.f32 %v2224, %v2250
      %v2262 = vadd.f32 %v2225, %v2250
      %v2263 = vadd.f32 %v2226, %v2250
      %v2264 = vadd.f32 %v2227, %v2250
      %v2265 = vadd.f32 %v2228, %v2250
      %v2266 = vadd.f32 %v2229, %v2250
      %v2267 = vadd.f32 %v2230, %v2250
      %v2268 = vadd.f32 %v2231, %v2250
      %v2269 = vadd.f32 %v2232, %v2250
      %v2270 = vadd.f32 %v2233, %v2250
      %v2271 = vadd.f32 %v2234, %v2250
      %v2272 = vadd.f32 %v2235, %v2250
      %v2273 = vadd.f32 %v2236, %v2250
      %v2274 = vadd.f32 %v2237, %v2250
      %v2275 = vadd.f32 %v2238, %v2250
      %v2276 = vadd.f32 %v2239, %v2250
      %v2277 = vadd.f32 %v2240, %v2250
      %v2278 = vadd.f32 %v2241, %v2250
      %v2279 = vadd.f32 %v2242, %v2250
      %v2280 = vadd.f32 %v2243, %v2250
      %v2281 = vadd.f32 %v2244, %v2250
      %v2282 = vadd.f32 %v2245, %v2250
      %v2283 = vxor.u32 %v2251, 2147483648
      %v2284 = vxor.u32 %v2252, 2147483648
      %v2285 = vxor.u32 %v2253, 2147483648
      %v2286 = vxor.u32 %v2254, 2147483648
      %v2287 = vxor.u32 %v2255, 2147483648
      %v2288 = vxor.u32 %v2256, 2147483648
      %v2289 = vxor.u32 %v2257, 2147483648
      %v2290 = vxor.u32 %v2258, 2147483648
      %v2291 = vxor.u32 %v2259, 2147483648
      %v2292 = vxor.u32 %v2260, 2147483648
      %v2293 = vxor.u32 %v2261, 2147483648
      %v2294 = vxor.u32 %v2262, 2147483648
      %v2295 = vxor.u32 %v2263, 2147483648
      %v2296 = vxor.u32 %v2264, 2147483648
      %v2297 = vxor.u32 %v2265, 2147483648
      %v2298 = vxor.u32 %v2266, 2147483648
      %v2299 = vxor.u32 %v2267, 2147483648
      %v2300 = vxor.u32 %v2268, 2147483648
      %v2301 = vxor.u32 %v2269, 2147483648
      %v2302 = vxor.u32 %v2270, 2147483648
      %v2303 = vxor.u32 %v2271, 2147483648
      %v2304 = vxor.u32 %v2272, 2147483648
      %v2305 = vxor.u32 %v2273, 2147483648
      %v2306 = vxor.u32 %v2274, 2147483648
      %v2307 = vxor.u32 %v2275, 2147483648
      %v2308 = vxor.u32 %v2276, 2147483648
      %v2309 = vxor.u32 %v2277, 2147483648
      %v2310 = vxor.u32 %v2278, 2147483648
      %v2311 = vxor.u32 %v2279, 2147483648
      %v2312 = vxor.u32 %v2280, 2147483648
      %v2313 = vxor.u32 %v2281, 2147483648
      %v2314 = vxor.u32 %v2282, 2147483648
      %v2315 = vmul.f32 %v2283, 1.442695
      %v2316 = vpow.pop %v2315
      %v2317 = vmul.f32 %v2284, 1.442695
      %v2318 = vpow.pop %v2317
      %v2319 = vmul.f32 %v2285, 1.442695
      %v2320 = vpow.pop %v2319
      %v2321 = vmul.f32 %v2286, 1.442695
      %v2322 = vpow.pop %v2321
      %v2323 = vmul.f32 %v2287, 1.442695
      %v2324 = vpow.pop %v2323
      %v2325 = vmul.f32 %v2288, 1.442695
      %v2326 = vpow.pop %v2325
      %v2327 = vmul.f32 %v2289, 1.442695
      %v2328 = vpow.pop %v2327
      %v2329 = vmul.f32 %v2290, 1.442695
      %v2330 = vpow.pop %v2329
      %v2331 = vmul.f32 %v2291, 1.442695
      %v2332 = vpow.pop %v2331
      %v2333 = vmul.f32 %v2292, 1.442695
      %v2334 = vpow.pop %v2333
      %v2335 = vmul.f32 %v2293, 1.442695
      %v2336 = vpow.pop %v2335
      %v2337 = vmul.f32 %v2294, 1.442695
      %v2338 = vpow.pop %v2337
      %v2339 = vmul.f32 %v2295, 1.442695
      %v2340 = vpow.pop %v2339
      %v2341 = vmul.f32 %v2296, 1.442695
      %v2342 = vpow.pop %v2341
      %v2343 = vmul.f32 %v2297, 1.442695
      %v2344 = vpow.pop %v2343
      %v2345 = vmul.f32 %v2298, 1.442695
      %v2346 = vpow.pop %v2345
      %v2347 = vmul.f32 %v2299, 1.442695
      %v2348 = vpow.pop %v2347
      %v2349 = vmul.f32 %v2300, 1.442695
      %v2350 = vpow.pop %v2349
      %v2351 = vmul.f32 %v2301, 1.442695
      %v2352 = vpow.pop %v2351
      %v2353 = vmul.f32 %v2302, 1.442695
      %v2354 = vpow.pop %v2353
      %v2355 = vmul.f32 %v2303, 1.442695
      %v2356 = vpow.pop %v2355
      %v2357 = vmul.f32 %v2304, 1.442695
      %v2358 = vpow.pop %v2357
      %v2359 = vmul.f32 %v2305, 1.442695
      %v2360 = vpow.pop %v2359
      %v2361 = vmul.f32 %v2306, 1.442695
      %v2362 = vpow.pop %v2361
      %v2363 = vmul.f32 %v2307, 1.442695
      %v2364 = vpow.pop %v2363
      %v2365 = vmul.f32 %v2308, 1.442695
      %v2366 = vpow.pop %v2365
      %v2367 = vmul.f32 %v2309, 1.442695
      %v2368 = vpow.pop %v2367
      %v2369 = vmul.f32 %v2310, 1.442695
      %v2370 = vpow.pop %v2369
      %v2371 = vmul.f32 %v2311, 1.442695
      %v2372 = vpow.pop %v2371
      %v2373 = vmul.f32 %v2312, 1.442695
      %v2374 = vpow.pop %v2373
      %v2375 = vmul.f32 %v2313, 1.442695
      %v2376 = vpow.pop %v2375
      %v2377 = vmul.f32 %v2314, 1.442695
      %v2378 = vpow.pop %v2377
      %v2379 = vadd.f32 %v2316, 1.0
      %v2380 = vadd.f32 %v2318, 1.0
      %v2381 = vadd.f32 %v2320, 1.0
      %v2382 = vadd.f32 %v2322, 1.0
      %v2383 = vadd.f32 %v2324, 1.0
      %v2384 = vadd.f32 %v2326, 1.0
      %v2385 = vadd.f32 %v2328, 1.0
      %v2386 = vadd.f32 %v2330, 1.0
      %v2387 = vadd.f32 %v2332, 1.0
      %v2388 = vadd.f32 %v2334, 1.0
      %v2389 = vadd.f32 %v2336, 1.0
      %v2390 = vadd.f32 %v2338, 1.0
      %v2391 = vadd.f32 %v2340, 1.0
      %v2392 = vadd.f32 %v2342, 1.0
      %v2393 = vadd.f32 %v2344, 1.0
      %v2394 = vadd.f32 %v2346, 1.0
      %v2395 = vadd.f32 %v2348, 1.0
      %v2396 = vadd.f32 %v2350, 1.0
      %v2397 = vadd.f32 %v2352, 1.0
      %v2398 = vadd.f32 %v2354, 1.0
      %v2399 = vadd.f32 %v2356, 1.0
      %v2400 = vadd.f32 %v2358, 1.0
      %v2401 = vadd.f32 %v2360, 1.0
      %v2402 = vadd.f32 %v2362, 1.0
      %v2403 = vadd.f32 %v2364, 1.0
      %v2404 = vadd.f32 %v2366, 1.0
      %v2405 = vadd.f32 %v2368, 1.0
      %v2406 = vadd.f32 %v2370, 1.0
      %v2407 = vadd.f32 %v2372, 1.0
      %v2408 = vadd.f32 %v2374, 1.0
      %v2409 = vadd.f32 %v2376, 1.0
      %v2410 = vadd.f32 %v2378, 1.0
      %v2411 = vrcp.pop %v2379
      %v2412 = vmul.f32 1.0, %v2411
      %v2413 = vrcp.pop %v2380
      %v2414 = vmul.f32 1.0, %v2413
      %v2415 = vrcp.pop %v2381
      %v2416 = vmul.f32 1.0, %v2415
      %v2417 = vrcp.pop %v2382
      %v2418 = vmul.f32 1.0, %v2417
      %v2419 = vrcp.pop %v2383
      %v2420 = vmul.f32 1.0, %v2419
      %v2421 = vrcp.pop %v2384
      %v2422 = vmul.f32 1.0, %v2421
      %v2423 = vrcp.pop %v2385
      %v2424 = vmul.f32 1.0, %v2423
      %v2425 = vrcp.pop %v2386
      %v2426 = vmul.f32 1.0, %v2425
      %v2427 = vrcp.pop %v2387
      %v2428 = vmul.f32 1.0, %v2427
      %v2429 = vrcp.pop %v2388
      %v2430 = vmul.f32 1.0, %v2429
      %v2431 = vrcp.pop %v2389
      %v2432 = vmul.f32 1.0, %v2431
      %v2433 = vrcp.pop %v2390
      %v2434 = vmul.f32 1.0, %v2433
      %v2435 = vrcp.pop %v2391
      %v2436 = vmul.f32 1.0, %v2435
      %v2437 = vrcp.pop %v2392
      %v2438 = vmul.f32 1.0, %v2437
      %v2439 = vrcp.pop %v2393
      %v2440 = vmul.f32 1.0, %v2439
      %v2441 = vrcp.pop %v2394
      %v2442 = vmul.f32 1.0, %v2441
      %v2443 = vrcp.pop %v2395
      %v2444 = vmul.f32 1.0, %v2443
      %v2445 = vrcp.pop %v2396
      %v2446 = vmul.f32 1.0, %v2445
      %v2447 = vrcp.pop %v2397
      %v2448 = vmul.f32 1.0, %v2447
      %v2449 = vrcp.pop %v2398
      %v2450 = vmul.f32 1.0, %v2449
      %v2451 = vrcp.pop %v2399
      %v2452 = vmul.f32 1.0, %v2451
      %v2453 = vrcp.pop %v2400
      %v2454 = vmul.f32 1.0, %v2453
      %v2455 = vrcp.pop %v2401
      %v2456 = vmul.f32 1.0, %v2455
      %v2457 = vrcp.pop %v2402
      %v2458 = vmul.f32 1.0, %v2457
      %v2459 = vrcp.pop %v2403
      %v2460 = vmul.f32 1.0, %v2459
      %v2461 = vrcp.pop %v2404
      %v2462 = vmul.f32 1.0, %v2461
      %v2463 = vrcp.pop %v2405
      %v2464 = vmul.f32 1.0, %v2463
      %v2465 = vrcp.pop %v2406
      %v2466 = vmul.f32 1.0, %v2465
      %v2467 = vrcp.pop %v2407
      %v2468 = vmul.f32 1.0, %v2467
      %v2469 = vrcp.pop %v2408
      %v2470 = vmul.f32 1.0, %v2469
      %v2471 = vrcp.pop %v2409
      %v2472 = vmul.f32 1.0, %v2471
      %v2473 = vrcp.pop %v2410
      %v2474 = vmul.f32 1.0, %v2473
      %v2475 = vmul.f32 %v2251, %v2412
      %v2476 = vmul.f32 %v2252, %v2414
      %v2477 = vmul.f32 %v2253, %v2416
      %v2478 = vmul.f32 %v2254, %v2418
      %v2479 = vmul.f32 %v2255, %v2420
      %v2480 = vmul.f32 %v2256, %v2422
      %v2481 = vmul.f32 %v2257, %v2424
      %v2482 = vmul.f32 %v2258, %v2426
      %v2483 = vmul.f32 %v2259, %v2428
      %v2484 = vmul.f32 %v2260, %v2430
      %v2485 = vmul.f32 %v2261, %v2432
      %v2486 = vmul.f32 %v2262, %v2434
      %v2487 = vmul.f32 %v2263, %v2436
      %v2488 = vmul.f32 %v2264, %v2438
      %v2489 = vmul.f32 %v2265, %v2440
      %v2490 = vmul.f32 %v2266, %v2442
      %v2491 = vmul.f32 %v2267, %v2444
      %v2492 = vmul.f32 %v2268, %v2446
      %v2493 = vmul.f32 %v2269, %v2448
      %v2494 = vmul.f32 %v2270, %v2450
      %v2495 = vmul.f32 %v2271, %v2452
      %v2496 = vmul.f32 %v2272, %v2454
      %v2497 = vmul.f32 %v2273, %v2456
      %v2498 = vmul.f32 %v2274, %v2458
      %v2499 = vmul.f32 %v2275, %v2460
      %v2500 = vmul.f32 %v2276, %v2462
      %v2501 = vmul.f32 %v2277, %v2464
      %v2502 = vmul.f32 %v2278, %v2466
      %v2503 = vmul.f32 %v2279, %v2468
      %v2504 = vmul.f32 %v2280, %v2470
      %v2505 = vmul.f32 %v2281, %v2472
      %v2506 = vmul.f32 %v2282, %v2474
      %v2507 = vld [vmem:[%s581] sm:$0xf]
      %v2508 = vld [vmem:[%s581 + $0x4] sm:$0xf]
      %v2509 = vld [vmem:[%s581 + $0x8] sm:$0xf]
      %v2510 = vld [vmem:[%s581 + $0xc] sm:$0xf]
      %v2511 = vld [vmem:[%s581 + $0x10] sm:$0xf]
      %v2512 = vld [vmem:[%s581 + $0x14] sm:$0xf]
      %v2513 = vld [vmem:[%s581 + $0x18] sm:$0xf]
      %v2514 = vld [vmem:[%s581 + $0x1c] sm:$0xf]
      %v2515 = vld [vmem:[%s581 + $0x20] sm:$0xf]
      %v2516 = vld [vmem:[%s581 + $0x24] sm:$0xf]
      %v2517 = vld [vmem:[%s581 + $0x28] sm:$0xf]
      %v2518 = vld [vmem:[%s581 + $0x2c] sm:$0xf]
      %v2519 = vld [vmem:[%s581 + $0x30] sm:$0xf]
      %v2520 = vld [vmem:[%s581 + $0x34] sm:$0xf]
      %v2521 = vld [vmem:[%s581 + $0x38] sm:$0xf]
      %v2522 = vld [vmem:[%s581 + $0x3c] sm:$0xf]
      %v2523 = vld [vmem:[%s581 + $0x40] sm:$0xf]
      %v2524 = vld [vmem:[%s581 + $0x44] sm:$0xf]
      %v2525 = vld [vmem:[%s581 + $0x48] sm:$0xf]
      %v2526 = vld [vmem:[%s581 + $0x4c] sm:$0xf]
      %v2527 = vld [vmem:[%s581 + $0x50] sm:$0xf]
      %v2528 = vld [vmem:[%s581 + $0x54] sm:$0xf]
      %v2529 = vld [vmem:[%s581 + $0x58] sm:$0xf]
      %v2530 = vld [vmem:[%s581 + $0x5c] sm:$0xf]
      %v2531 = vld [vmem:[%s581 + $0x60] sm:$0xf]
      %v2532 = vld [vmem:[%s581 + $0x64] sm:$0xf]
      %v2533 = vld [vmem:[%s581 + $0x68] sm:$0xf]
      %v2534 = vld [vmem:[%s581 + $0x6c] sm:$0xf]
      %v2535 = vld [vmem:[%s581 + $0x70] sm:$0xf]
      %v2536 = vld [vmem:[%s581 + $0x74] sm:$0xf]
      %v2537 = vld [vmem:[%s581 + $0x78] sm:$0xf]
      %v2538 = vld [vmem:[%s581 + $0x7c] sm:$0xf]
      %v2539 = vunpack.c.l.bf16 %v2507
      %v2540 = vunpack.c.l.bf16 %v2508
      %v2541 = vunpack.c.l.bf16 %v2509
      %v2542 = vunpack.c.l.bf16 %v2510
      %v2543 = vunpack.c.l.bf16 %v2511
      %v2544 = vunpack.c.l.bf16 %v2512
      %v2545 = vunpack.c.l.bf16 %v2513
      %v2546 = vunpack.c.l.bf16 %v2514
      %v2547 = vunpack.c.l.bf16 %v2515
      %v2548 = vunpack.c.l.bf16 %v2516
      %v2549 = vunpack.c.l.bf16 %v2517
      %v2550 = vunpack.c.l.bf16 %v2518
      %v2551 = vunpack.c.l.bf16 %v2519
      %v2552 = vunpack.c.l.bf16 %v2520
      %v2553 = vunpack.c.l.bf16 %v2521
      %v2554 = vunpack.c.l.bf16 %v2522
      %v2555 = vunpack.c.l.bf16 %v2523
      %v2556 = vunpack.c.l.bf16 %v2524
      %v2557 = vunpack.c.l.bf16 %v2525
      %v2558 = vunpack.c.l.bf16 %v2526
      %v2559 = vunpack.c.l.bf16 %v2527
      %v2560 = vunpack.c.l.bf16 %v2528
      %v2561 = vunpack.c.l.bf16 %v2529
      %v2562 = vunpack.c.l.bf16 %v2530
      %v2563 = vunpack.c.l.bf16 %v2531
      %v2564 = vunpack.c.l.bf16 %v2532
      %v2565 = vunpack.c.l.bf16 %v2533
      %v2566 = vunpack.c.l.bf16 %v2534
      %v2567 = vunpack.c.l.bf16 %v2535
      %v2568 = vunpack.c.l.bf16 %v2536
      %v2569 = vunpack.c.l.bf16 %v2537
      %v2570 = vunpack.c.l.bf16 %v2538
      %v2571 = vadd.f32 %v2475, %v2539
      %v2572 = vadd.f32 %v2476, %v2540
      %v2573 = vadd.f32 %v2477, %v2541
      %v2574 = vadd.f32 %v2478, %v2542
      %v2575 = vadd.f32 %v2479, %v2543
      %v2576 = vadd.f32 %v2480, %v2544
      %v2577 = vadd.f32 %v2481, %v2545
      %v2578 = vadd.f32 %v2482, %v2546
      %v2579 = vadd.f32 %v2483, %v2547
      %v2580 = vadd.f32 %v2484, %v2548
      %v2581 = vadd.f32 %v2485, %v2549
      %v2582 = vadd.f32 %v2486, %v2550
      %v2583 = vadd.f32 %v2487, %v2551
      %v2584 = vadd.f32 %v2488, %v2552
      %v2585 = vadd.f32 %v2489, %v2553
      %v2586 = vadd.f32 %v2490, %v2554
      %v2587 = vadd.f32 %v2491, %v2555
      %v2588 = vadd.f32 %v2492, %v2556
      %v2589 = vadd.f32 %v2493, %v2557
      %v2590 = vadd.f32 %v2494, %v2558
      %v2591 = vadd.f32 %v2495, %v2559
      %v2592 = vadd.f32 %v2496, %v2560
      %v2593 = vadd.f32 %v2497, %v2561
      %v2594 = vadd.f32 %v2498, %v2562
      %v2595 = vadd.f32 %v2499, %v2563
      %v2596 = vadd.f32 %v2500, %v2564
      %v2597 = vadd.f32 %v2501, %v2565
      %v2598 = vadd.f32 %v2502, %v2566
      %v2599 = vadd.f32 %v2503, %v2567
      %v2600 = vadd.f32 %v2504, %v2568
      %v2601 = vadd.f32 %v2505, %v2569
      %v2602 = vadd.f32 %v2506, %v2570
      %v2603 = vpack.c.bf16 %v2572, %v2571
      %v2604 = vpack.c.bf16 %v2574, %v2573
      %v2605 = vpack.c.bf16 %v2576, %v2575
      %v2606 = vpack.c.bf16 %v2578, %v2577
      %v2607 = vpack.c.bf16 %v2580, %v2579
      %v2608 = vpack.c.bf16 %v2582, %v2581
      %v2609 = vpack.c.bf16 %v2584, %v2583
      %v2610 = vpack.c.bf16 %v2586, %v2585
      %v2611 = vpack.c.bf16 %v2588, %v2587
      %v2612 = vpack.c.bf16 %v2590, %v2589
      %v2613 = vpack.c.bf16 %v2592, %v2591
      %v2614 = vpack.c.bf16 %v2594, %v2593
      %v2615 = vpack.c.bf16 %v2596, %v2595
      %v2616 = vpack.c.bf16 %v2598, %v2597
      %v2617 = vpack.c.bf16 %v2600, %v2599
      %v2618 = vpack.c.bf16 %v2602, %v2601
      %v2619 = vld [vmem:[%s6] sm:$0xf]
      %v2621 = vsel %vm1695, %v2603, 0
      %v2624 = vsel %vm1695, %v2604, 0
      %v2627 = vsel %vm1695, %v2605, 0
      %v2630 = vsel %vm1695, %v2606, 0
      %v2633 = vsel %vm1695, %v2607, 0
      %v2636 = vsel %vm1695, %v2608, 0
      %v2639 = vsel %vm1695, %v2609, 0
      %v2642 = vsel %vm1695, %v2610, 0
      %v2645 = vsel %vm1695, %v2611, 0
      %v2648 = vsel %vm1695, %v2612, 0
      %v2651 = vsel %vm1695, %v2613, 0
      %v2654 = vsel %vm1695, %v2614, 0
      %v2657 = vsel %vm1695, %v2615, 0
      %v2660 = vsel %vm1695, %v2616, 0
      %v2663 = vsel %vm1695, %v2617, 0
      %v2666 = vsel %vm1695, %v2618, 0
      %v2669 = vsel %vm2044, %v2619, 0
      %2671 = vmatprep.subr.bf16.mxu0 0
      %2672 = vmatpush1.bf16.msra.mxu0 %v2669
      %2673 = vmatprep.subr.bf16.mxu0 0
      %2674 = vmatpush1.bf16.msra.mxu0 0
      %2675 = vmatprep.subr.bf16.mxu0 0
      %2676 = vmatpush1.bf16.msra.mxu0 0
      %2677 = vmatprep.subr.bf16.mxu0 0
      %2678 = vmatpush1.bf16.msra.mxu0 0
      %2679 = vmatprep.subr.bf16.mxu0 0
      %2680 = vmatpush1.bf16.msra.mxu0 0
      %2681 = vmatprep.subr.bf16.mxu0 0
      %2682 = vmatpush1.bf16.msra.mxu0 0
      %2683 = vmatprep.subr.bf16.mxu0 0
      %2684 = vmatpush1.bf16.msra.mxu0 0
      %2685 = vmatprep.subr.bf16.mxu0 0
      %2686 = vmatpush1.bf16.msra.mxu0 0
      %2687 = vmatprep.subr.bf16.mxu0 0
      %2688 = vmatpush1.bf16.msra.mxu0 0
      %2689 = vmatprep.subr.bf16.mxu0 0
      %2690 = vmatpush1.bf16.msra.mxu0 0
      %2691 = vmatprep.subr.bf16.mxu0 0
      %2692 = vmatpush1.bf16.msra.mxu0 0
      %2693 = vmatprep.subr.bf16.mxu0 0
      %2694 = vmatpush1.bf16.msra.mxu0 0
      %2695 = vmatprep.subr.bf16.mxu0 0
      %2696 = vmatpush1.bf16.msra.mxu0 0
      %2697 = vmatprep.subr.bf16.mxu0 0
      %2698 = vmatpush1.bf16.msra.mxu0 0
      %2699 = vmatprep.subr.bf16.mxu0 0
      %2700 = vmatpush1.bf16.msra.mxu0 0
      %2701 = vmatprep.subr.bf16.mxu0 0
      %2702 = vmatpush1.bf16.msra.mxu0 0
      %2703 = vmatprep.mubr.bf16.mxu0 0
      %2704 = vmatmul.mubr.bf16.gmra.mrb[0].mxu0 %v2621
      %v2705 = vpop.f32.mrb[0].mxu0
      %v2706 = vadd.f32 0.0, %v2705
      %v2707 = vpop.f32.mrb[0].mxu0
      %v2708 = vpop.f32.mrb[0].mxu0
      %v2709 = vadd.f32 0.0, %v2708
      %v2710 = vpop.f32.mrb[0].mxu0
      %2711 = vmatprep.mubr.bf16.mxu0 0
      %2712 = vmatmul.mubr.bf16.gmra.mrb[0].mxu0 %v2624
      %v2713 = vpop.f32.mrb[0].mxu0
      %v2714 = vadd.f32 0.0, %v2713
      %v2715 = vpop.f32.mrb[0].mxu0
      %v2716 = vpop.f32.mrb[0].mxu0
      %v2717 = vadd.f32 0.0, %v2716
      %v2718 = vpop.f32.mrb[0].mxu0
      %2719 = vmatprep.mubr.bf16.mxu0 0
      %2720 = vmatmul.mubr.bf16.gmra.mrb[0].mxu0 %v2627
      %v2721 = vpop.f32.mrb[0].mxu0
      %v2722 = vadd.f32 0.0, %v2721
      %v2723 = vpop.f32.mrb[0].mxu0
      %v2724 = vpop.f32.mrb[0].mxu0
      %v2725 = vadd.f32 0.0, %v2724
      %v2726 = vpop.f32.mrb[0].mxu0
      %2727 = vmatprep.mubr.bf16.mxu0 0
      %2728 = vmatmul.mubr.bf16.gmra.mrb[0].mxu0 %v2630
      %v2729 = vpop.f32.mrb[0].mxu0
      %v2730 = vadd.f32 0.0, %v2729
      %v2731 = vpop.f32.mrb[0].mxu0
      %v2732 = vpop.f32.mrb[0].mxu0
      %v2733 = vadd.f32 0.0, %v2732
      %v2734 = vpop.f32.mrb[0].mxu0
      %2735 = vmatprep.mubr.bf16.mxu0 0
      %2736 = vmatmul.mubr.bf16.gmra.mrb[0].mxu0 %v2633
      %v2737 = vpop.f32.mrb[0].mxu0
      %v2738 = vadd.f32 0.0, %v2737
      %v2739 = vpop.f32.mrb[0].mxu0
      %v2740 = vpop.f32.mrb[0].mxu0
      %v2741 = vadd.f32 0.0, %v2740
      %v2742 = vpop.f32.mrb[0].mxu0
      %2743 = vmatprep.mubr.bf16.mxu0 0
      %2744 = vmatmul.mubr.bf16.gmra.mrb[0].mxu0 %v2636
      %v2745 = vpop.f32.mrb[0].mxu0
      %v2746 = vadd.f32 0.0, %v2745
      %v2747 = vpop.f32.mrb[0].mxu0
      %v2748 = vpop.f32.mrb[0].mxu0
      %v2749 = vadd.f32 0.0, %v2748
      %v2750 = vpop.f32.mrb[0].mxu0
      %2751 = vmatprep.mubr.bf16.mxu0 0
      %2752 = vmatmul.mubr.bf16.gmra.mrb[0].mxu0 %v2639
      %v2753 = vpop.f32.mrb[0].mxu0
      %v2754 = vadd.f32 0.0, %v2753
      %v2755 = vpop.f32.mrb[0].mxu0
      %v2756 = vpop.f32.mrb[0].mxu0
      %v2757 = vadd.f32 0.0, %v2756
      %v2758 = vpop.f32.mrb[0].mxu0
      %2759 = vmatprep.mubr.bf16.mxu0 0
      %2760 = vmatmul.mubr.bf16.gmra.mrb[0].mxu0 %v2642
      %v2761 = vpop.f32.mrb[0].mxu0
      %v2762 = vadd.f32 0.0, %v2761
      %v2763 = vpop.f32.mrb[0].mxu0
      %v2764 = vpop.f32.mrb[0].mxu0
      %v2765 = vadd.f32 0.0, %v2764
      %v2766 = vpop.f32.mrb[0].mxu0
      %2767 = vmatprep.mubr.bf16.mxu0 0
      %2768 = vmatmul.mubr.bf16.gmra.mrb[0].mxu0 %v2645
      %v2769 = vpop.f32.mrb[0].mxu0
      %v2770 = vadd.f32 0.0, %v2769
      %v2771 = vpop.f32.mrb[0].mxu0
      %v2772 = vpop.f32.mrb[0].mxu0
      %v2773 = vadd.f32 0.0, %v2772
      %v2774 = vpop.f32.mrb[0].mxu0
      %2775 = vmatprep.mubr.bf16.mxu0 0
      %2776 = vmatmul.mubr.bf16.gmra.mrb[0].mxu0 %v2648
      %v2777 = vpop.f32.mrb[0].mxu0
      %v2778 = vadd.f32 0.0, %v2777
      %v2779 = vpop.f32.mrb[0].mxu0
      %v2780 = vpop.f32.mrb[0].mxu0
      %v2781 = vadd.f32 0.0, %v2780
      %v2782 = vpop.f32.mrb[0].mxu0
      %2783 = vmatprep.mubr.bf16.mxu0 0
      %2784 = vmatmul.mubr.bf16.gmra.mrb[0].mxu0 %v2651
      %v2785 = vpop.f32.mrb[0].mxu0
      %v2786 = vadd.f32 0.0, %v2785
      %v2787 = vpop.f32.mrb[0].mxu0
      %v2788 = vpop.f32.mrb[0].mxu0
      %v2789 = vadd.f32 0.0, %v2788
      %v2790 = vpop.f32.mrb[0].mxu0
      %2791 = vmatprep.mubr.bf16.mxu0 0
      %2792 = vmatmul.mubr.bf16.gmra.mrb[0].mxu0 %v2654
      %v2793 = vpop.f32.mrb[0].mxu0
      %v2794 = vadd.f32 0.0, %v2793
      %v2795 = vpop.f32.mrb[0].mxu0
      %v2796 = vpop.f32.mrb[0].mxu0
      %v2797 = vadd.f32 0.0, %v2796
      %v2798 = vpop.f32.mrb[0].mxu0
      %2799 = vmatprep.mubr.bf16.mxu0 0
      %2800 = vmatmul.mubr.bf16.gmra.mrb[0].mxu0 %v2657
      %v2801 = vpop.f32.mrb[0].mxu0
      %v2802 = vadd.f32 0.0, %v2801
      %v2803 = vpop.f32.mrb[0].mxu0
      %v2804 = vpop.f32.mrb[0].mxu0
      %v2805 = vadd.f32 0.0, %v2804
      %v2806 = vpop.f32.mrb[0].mxu0
      %2807 = vmatprep.mubr.bf16.mxu0 0
      %2808 = vmatmul.mubr.bf16.gmra.mrb[0].mxu0 %v2660
      %v2809 = vpop.f32.mrb[0].mxu0
      %v2810 = vadd.f32 0.0, %v2809
      %v2811 = vpop.f32.mrb[0].mxu0
      %v2812 = vpop.f32.mrb[0].mxu0
      %v2813 = vadd.f32 0.0, %v2812
      %v2814 = vpop.f32.mrb[0].mxu0
      %2815 = vmatprep.mubr.bf16.mxu0 0
      %2816 = vmatmul.mubr.bf16.gmra.mrb[0].mxu0 %v2663
      %v2817 = vpop.f32.mrb[0].mxu0
      %v2818 = vadd.f32 0.0, %v2817
      %v2819 = vpop.f32.mrb[0].mxu0
      %v2820 = vpop.f32.mrb[0].mxu0
      %v2821 = vadd.f32 0.0, %v2820
      %v2822 = vpop.f32.mrb[0].mxu0
      %2823 = vmatprep.mubr.bf16.mxu0 0
      %2824 = vmatmul.mubr.bf16.gmra.mrb[0].mxu0 %v2666
      %v2825 = vpop.f32.mrb[0].mxu0
      %v2826 = vadd.f32 0.0, %v2825
      %v2827 = vpop.f32.mrb[0].mxu0
      %v2828 = vpop.f32.mrb[0].mxu0
      %v2829 = vadd.f32 0.0, %v2828
      %v2830 = vpop.f32.mrb[0].mxu0
      %2831 = vdwg.mxu0
      %v2832 = vld [vmem:[%s7] sm:$0x1]
      %v2833 = vlaneseq
      %v2834 = vshrl.u32 %v2833, 7
      %v2835 = vsub.s32 0, %v2834
      %v2836 = vrot.slane %v2832, %v2835
      %v2837 = vmul.f32 %v2706, %v2836
      %v2838 = vmul.f32 %v2709, %v2836
      %v2839 = vmul.f32 %v2714, %v2836
      %v2840 = vmul.f32 %v2717, %v2836
      %v2841 = vmul.f32 %v2722, %v2836
      %v2842 = vmul.f32 %v2725, %v2836
      %v2843 = vmul.f32 %v2730, %v2836
      %v2844 = vmul.f32 %v2733, %v2836
      %v2845 = vmul.f32 %v2738, %v2836
      %v2846 = vmul.f32 %v2741, %v2836
      %v2847 = vmul.f32 %v2746, %v2836
      %v2848 = vmul.f32 %v2749, %v2836
      %v2849 = vmul.f32 %v2754, %v2836
      %v2850 = vmul.f32 %v2757, %v2836
      %v2851 = vmul.f32 %v2762, %v2836
      %v2852 = vmul.f32 %v2765, %v2836
      %v2853 = vmul.f32 %v2770, %v2836
      %v2854 = vmul.f32 %v2773, %v2836
      %v2855 = vmul.f32 %v2778, %v2836
      %v2856 = vmul.f32 %v2781, %v2836
      %v2857 = vmul.f32 %v2786, %v2836
      %v2858 = vmul.f32 %v2789, %v2836
      %v2859 = vmul.f32 %v2794, %v2836
      %v2860 = vmul.f32 %v2797, %v2836
      %v2861 = vmul.f32 %v2802, %v2836
      %v2862 = vmul.f32 %v2805, %v2836
      %v2863 = vmul.f32 %v2810, %v2836
      %v2864 = vmul.f32 %v2813, %v2836
      %v2865 = vmul.f32 %v2818, %v2836
      %v2866 = vmul.f32 %v2821, %v2836
      %v2867 = vmul.f32 %v2826, %v2836
      %v2868 = vmul.f32 %v2829, %v2836
      %v2869 = vld [vmem:[%s7 + $0x1] sm:$0x1]
      %v2870 = vlaneseq
      %v2871 = vshrl.u32 %v2870, 7
      %v2872 = vsub.s32 0, %v2871
      %v2873 = vrot.slane %v2869, %v2872
      %v2874 = vadd.f32 %v2837, %v2873
      %v2875 = vadd.f32 %v2838, %v2873
      %v2876 = vadd.f32 %v2839, %v2873
      %v2877 = vadd.f32 %v2840, %v2873
      %v2878 = vadd.f32 %v2841, %v2873
      %v2879 = vadd.f32 %v2842, %v2873
      %v2880 = vadd.f32 %v2843, %v2873
      %v2881 = vadd.f32 %v2844, %v2873
      %v2882 = vadd.f32 %v2845, %v2873
      %v2883 = vadd.f32 %v2846, %v2873
      %v2884 = vadd.f32 %v2847, %v2873
      %v2885 = vadd.f32 %v2848, %v2873
      %v2886 = vadd.f32 %v2849, %v2873
      %v2887 = vadd.f32 %v2850, %v2873
      %v2888 = vadd.f32 %v2851, %v2873
      %v2889 = vadd.f32 %v2852, %v2873
      %v2890 = vadd.f32 %v2853, %v2873
      %v2891 = vadd.f32 %v2854, %v2873
      %v2892 = vadd.f32 %v2855, %v2873
      %v2893 = vadd.f32 %v2856, %v2873
      %v2894 = vadd.f32 %v2857, %v2873
      %v2895 = vadd.f32 %v2858, %v2873
      %v2896 = vadd.f32 %v2859, %v2873
      %v2897 = vadd.f32 %v2860, %v2873
      %v2898 = vadd.f32 %v2861, %v2873
      %v2899 = vadd.f32 %v2862, %v2873
      %v2900 = vadd.f32 %v2863, %v2873
      %v2901 = vadd.f32 %v2864, %v2873
      %v2902 = vadd.f32 %v2865, %v2873
      %v2903 = vadd.f32 %v2866, %v2873
      %v2904 = vadd.f32 %v2867, %v2873
      %v2905 = vadd.f32 %v2868, %v2873
      %vm2906 = vcmp.ge.f32.partialorder %v2874, 0.0
      %vm2907 = vcmp.ge.f32.partialorder %v2875, 0.0
      %vm2908 = vcmp.ge.f32.partialorder %v2876, 0.0
      %vm2909 = vcmp.ge.f32.partialorder %v2877, 0.0
      %vm2910 = vcmp.ge.f32.partialorder %v2878, 0.0
      %vm2911 = vcmp.ge.f32.partialorder %v2879, 0.0
      %vm2912 = vcmp.ge.f32.partialorder %v2880, 0.0
      %vm2913 = vcmp.ge.f32.partialorder %v2881, 0.0
      %vm2914 = vcmp.ge.f32.partialorder %v2882, 0.0
      %vm2915 = vcmp.ge.f32.partialorder %v2883, 0.0
      %vm2916 = vcmp.ge.f32.partialorder %v2884, 0.0
      %vm2917 = vcmp.ge.f32.partialorder %v2885, 0.0
      %vm2918 = vcmp.ge.f32.partialorder %v2886, 0.0
      %vm2919 = vcmp.ge.f32.partialorder %v2887, 0.0
      %vm2920 = vcmp.ge.f32.partialorder %v2888, 0.0
      %vm2921 = vcmp.ge.f32.partialorder %v2889, 0.0
      %vm2922 = vcmp.ge.f32.partialorder %v2890, 0.0
      %vm2923 = vcmp.ge.f32.partialorder %v2891, 0.0
      %vm2924 = vcmp.ge.f32.partialorder %v2892, 0.0
      %vm2925 = vcmp.ge.f32.partialorder %v2893, 0.0
      %vm2926 = vcmp.ge.f32.partialorder %v2894, 0.0
      %vm2927 = vcmp.ge.f32.partialorder %v2895, 0.0
      %vm2928 = vcmp.ge.f32.partialorder %v2896, 0.0
      %vm2929 = vcmp.ge.f32.partialorder %v2897, 0.0
      %vm2930 = vcmp.ge.f32.partialorder %v2898, 0.0
      %vm2931 = vcmp.ge.f32.partialorder %v2899, 0.0
      %vm2932 = vcmp.ge.f32.partialorder %v2900, 0.0
      %vm2933 = vcmp.ge.f32.partialorder %v2901, 0.0
      %vm2934 = vcmp.ge.f32.partialorder %v2902, 0.0
      %vm2935 = vcmp.ge.f32.partialorder %v2903, 0.0
      %vm2936 = vcmp.ge.f32.partialorder %v2904, 0.0
      %vm2937 = vcmp.ge.f32.partialorder %v2905, 0.0
      %v2938 = vmul.f32 %v2874, 0.1
      %v2939 = vmul.f32 %v2875, 0.1
      %v2940 = vmul.f32 %v2876, 0.1
      %v2941 = vmul.f32 %v2877, 0.1
      %v2942 = vmul.f32 %v2878, 0.1
      %v2943 = vmul.f32 %v2879, 0.1
      %v2944 = vmul.f32 %v2880, 0.1
      %v2945 = vmul.f32 %v2881, 0.1
      %v2946 = vmul.f32 %v2882, 0.1
      %v2947 = vmul.f32 %v2883, 0.1
      %v2948 = vmul.f32 %v2884, 0.1
      %v2949 = vmul.f32 %v2885, 0.1
      %v2950 = vmul.f32 %v2886, 0.1
      %v2951 = vmul.f32 %v2887, 0.1
      %v2952 = vmul.f32 %v2888, 0.1
      %v2953 = vmul.f32 %v2889, 0.1
      %v2954 = vmul.f32 %v2890, 0.1
      %v2955 = vmul.f32 %v2891, 0.1
      %v2956 = vmul.f32 %v2892, 0.1
      %v2957 = vmul.f32 %v2893, 0.1
      %v2958 = vmul.f32 %v2894, 0.1
      %v2959 = vmul.f32 %v2895, 0.1
      %v2960 = vmul.f32 %v2896, 0.1
      %v2961 = vmul.f32 %v2897, 0.1
      %v2962 = vmul.f32 %v2898, 0.1
      %v2963 = vmul.f32 %v2899, 0.1
      %v2964 = vmul.f32 %v2900, 0.1
      %v2965 = vmul.f32 %v2901, 0.1
      %v2966 = vmul.f32 %v2902, 0.1
      %v2967 = vmul.f32 %v2903, 0.1
      %v2968 = vmul.f32 %v2904, 0.1
      %v2969 = vmul.f32 %v2905, 0.1
      %v2970 = vsel %vm2906, %v2874, %v2938
      %v2971 = vsel %vm2907, %v2875, %v2939
      %v2972 = vsel %vm2908, %v2876, %v2940
      %v2973 = vsel %vm2909, %v2877, %v2941
      %v2974 = vsel %vm2910, %v2878, %v2942
      %v2975 = vsel %vm2911, %v2879, %v2943
      %v2976 = vsel %vm2912, %v2880, %v2944
      %v2977 = vsel %vm2913, %v2881, %v2945
      %v2978 = vsel %vm2914, %v2882, %v2946
      %v2979 = vsel %vm2915, %v2883, %v2947
      %v2980 = vsel %vm2916, %v2884, %v2948
      %v2981 = vsel %vm2917, %v2885, %v2949
      %v2982 = vsel %vm2918, %v2886, %v2950
      %v2983 = vsel %vm2919, %v2887, %v2951
      %v2984 = vsel %vm2920, %v2888, %v2952
      %v2985 = vsel %vm2921, %v2889, %v2953
      %v2986 = vsel %vm2922, %v2890, %v2954
      %v2987 = vsel %vm2923, %v2891, %v2955
      %v2988 = vsel %vm2924, %v2892, %v2956
      %v2989 = vsel %vm2925, %v2893, %v2957
      %v2990 = vsel %vm2926, %v2894, %v2958
      %v2991 = vsel %vm2927, %v2895, %v2959
      %v2992 = vsel %vm2928, %v2896, %v2960
      %v2993 = vsel %vm2929, %v2897, %v2961
      %v2994 = vsel %vm2930, %v2898, %v2962
      %v2995 = vsel %vm2931, %v2899, %v2963
      %v2996 = vsel %vm2932, %v2900, %v2964
      %v2997 = vsel %vm2933, %v2901, %v2965
      %v2998 = vsel %vm2934, %v2902, %v2966
      %v2999 = vsel %vm2935, %v2903, %v2967
      %v3000 = vsel %vm2936, %v2904, %v2968
      %v3001 = vsel %vm2937, %v2905, %v2969
      %v3002 = vld [vmem:[%s8] sm:$0x1]
      %v3003 = vlaneseq
      %v3004 = vshrl.u32 %v3003, 7
      %v3005 = vsub.s32 0, %v3004
      %v3006 = vrot.slane %v3002, %v3005
      %3008 = vrot.lane.b32.xlu0 %v3006, 8
      %v3009 = vpop.permute.xlu0 %3008
      %v3011 = vmul.f32 %v2539, %v3009
      %v3012 = vmul.f32 %v2540, %v3009
      %v3013 = vmul.f32 %v2541, %v3009
      %v3014 = vmul.f32 %v2542, %v3009
      %v3015 = vmul.f32 %v2543, %v3009
      %v3016 = vmul.f32 %v2544, %v3009
      %v3017 = vmul.f32 %v2545, %v3009
      %v3018 = vmul.f32 %v2546, %v3009
      %v3019 = vmul.f32 %v2547, %v3009
      %v3020 = vmul.f32 %v2548, %v3009
      %v3021 = vmul.f32 %v2549, %v3009
      %v3022 = vmul.f32 %v2550, %v3009
      %v3023 = vmul.f32 %v2551, %v3009
      %v3024 = vmul.f32 %v2552, %v3009
      %v3025 = vmul.f32 %v2553, %v3009
      %v3026 = vmul.f32 %v2554, %v3009
      %v3027 = vmul.f32 %v2555, %v3009
      %v3028 = vmul.f32 %v2556, %v3009
      %v3029 = vmul.f32 %v2557, %v3009
      %v3030 = vmul.f32 %v2558, %v3009
      %v3031 = vmul.f32 %v2559, %v3009
      %v3032 = vmul.f32 %v2560, %v3009
      %v3033 = vmul.f32 %v2561, %v3009
      %v3034 = vmul.f32 %v2562, %v3009
      %v3035 = vmul.f32 %v2563, %v3009
      %v3036 = vmul.f32 %v2564, %v3009
      %v3037 = vmul.f32 %v2565, %v3009
      %v3038 = vmul.f32 %v2566, %v3009
      %v3039 = vmul.f32 %v2567, %v3009
      %v3040 = vmul.f32 %v2568, %v3009
      %v3041 = vmul.f32 %v2569, %v3009
      %v3042 = vmul.f32 %v2570, %v3009
      %v3043 = vld [vmem:[%s8 + $0x1] sm:$0x1]
      %v3044 = vlaneseq
      %v3045 = vshrl.u32 %v3044, 7
      %v3046 = vsub.s32 0, %v3045
      %v3047 = vrot.slane %v3043, %v3046
      %3049 = vrot.lane.b32.xlu0 %v3047, 8
      %v3050 = vpop.permute.xlu0 %3049
      %v3052 = vadd.f32 %v3011, %v3050
      %v3053 = vadd.f32 %v3012, %v3050
      %v3054 = vadd.f32 %v3013, %v3050
      %v3055 = vadd.f32 %v3014, %v3050
      %v3056 = vadd.f32 %v3015, %v3050
      %v3057 = vadd.f32 %v3016, %v3050
      %v3058 = vadd.f32 %v3017, %v3050
      %v3059 = vadd.f32 %v3018, %v3050
      %v3060 = vadd.f32 %v3019, %v3050
      %v3061 = vadd.f32 %v3020, %v3050
      %v3062 = vadd.f32 %v3021, %v3050
      %v3063 = vadd.f32 %v3022, %v3050
      %v3064 = vadd.f32 %v3023, %v3050
      %v3065 = vadd.f32 %v3024, %v3050
      %v3066 = vadd.f32 %v3025, %v3050
      %v3067 = vadd.f32 %v3026, %v3050
      %v3068 = vadd.f32 %v3027, %v3050
      %v3069 = vadd.f32 %v3028, %v3050
      %v3070 = vadd.f32 %v3029, %v3050
      %v3071 = vadd.f32 %v3030, %v3050
      %v3072 = vadd.f32 %v3031, %v3050
      %v3073 = vadd.f32 %v3032, %v3050
      %v3074 = vadd.f32 %v3033, %v3050
      %v3075 = vadd.f32 %v3034, %v3050
      %v3076 = vadd.f32 %v3035, %v3050
      %v3077 = vadd.f32 %v3036, %v3050
      %v3078 = vadd.f32 %v3037, %v3050
      %v3079 = vadd.f32 %v3038, %v3050
      %v3080 = vadd.f32 %v3039, %v3050
      %v3081 = vadd.f32 %v3040, %v3050
      %v3082 = vadd.f32 %v3041, %v3050
      %v3083 = vadd.f32 %v3042, %v3050
      %vm3084 = vcmp.ge.f32.partialorder %v3052, 0.0
      %vm3085 = vcmp.ge.f32.partialorder %v3053, 0.0
      %vm3086 = vcmp.ge.f32.partialorder %v3054, 0.0
      %vm3087 = vcmp.ge.f32.partialorder %v3055, 0.0
      %vm3088 = vcmp.ge.f32.partialorder %v3056, 0.0
      %vm3089 = vcmp.ge.f32.partialorder %v3057, 0.0
      %vm3090 = vcmp.ge.f32.partialorder %v3058, 0.0
      %vm3091 = vcmp.ge.f32.partialorder %v3059, 0.0
      %vm3092 = vcmp.ge.f32.partialorder %v3060, 0.0
      %vm3093 = vcmp.ge.f32.partialorder %v3061, 0.0
      %vm3094 = vcmp.ge.f32.partialorder %v3062, 0.0
      %vm3095 = vcmp.ge.f32.partialorder %v3063, 0.0
      %vm3096 = vcmp.ge.f32.partialorder %v3064, 0.0
      %vm3097 = vcmp.ge.f32.partialorder %v3065, 0.0
      %vm3098 = vcmp.ge.f32.partialorder %v3066, 0.0
      %vm3099 = vcmp.ge.f32.partialorder %v3067, 0.0
      %vm3100 = vcmp.ge.f32.partialorder %v3068, 0.0
      %vm3101 = vcmp.ge.f32.partialorder %v3069, 0.0
      %vm3102 = vcmp.ge.f32.partialorder %v3070, 0.0
      %vm3103 = vcmp.ge.f32.partialorder %v3071, 0.0
      %vm3104 = vcmp.ge.f32.partialorder %v3072, 0.0
      %vm3105 = vcmp.ge.f32.partialorder %v3073, 0.0
      %vm3106 = vcmp.ge.f32.partialorder %v3074, 0.0
      %vm3107 = vcmp.ge.f32.partialorder %v3075, 0.0
      %vm3108 = vcmp.ge.f32.partialorder %v3076, 0.0
      %vm3109 = vcmp.ge.f32.partialorder %v3077, 0.0
      %vm3110 = vcmp.ge.f32.partialorder %v3078, 0.0
      %vm3111 = vcmp.ge.f32.partialorder %v3079, 0.0
      %vm3112 = vcmp.ge.f32.partialorder %v3080, 0.0
      %vm3113 = vcmp.ge.f32.partialorder %v3081, 0.0
      %vm3114 = vcmp.ge.f32.partialorder %v3082, 0.0
      %vm3115 = vcmp.ge.f32.partialorder %v3083, 0.0
      %v3116 = vmul.f32 %v3052, 0.1
      %v3117 = vmul.f32 %v3053, 0.1
      %v3118 = vmul.f32 %v3054, 0.1
      %v3119 = vmul.f32 %v3055, 0.1
      %v3120 = vmul.f32 %v3056, 0.1
      %v3121 = vmul.f32 %v3057, 0.1
      %v3122 = vmul.f32 %v3058, 0.1
      %v3123 = vmul.f32 %v3059, 0.1
      %v3124 = vmul.f32 %v3060, 0.1
      %v3125 = vmul.f32 %v3061, 0.1
      %v3126 = vmul.f32 %v3062, 0.1
      %v3127 = vmul.f32 %v3063, 0.1
      %v3128 = vmul.f32 %v3064, 0.1
      %v3129 = vmul.f32 %v3065, 0.1
      %v3130 = vmul.f32 %v3066, 0.1
      %v3131 = vmul.f32 %v3067, 0.1
      %v3132 = vmul.f32 %v3068, 0.1
      %v3133 = vmul.f32 %v3069, 0.1
      %v3134 = vmul.f32 %v3070, 0.1
      %v3135 = vmul.f32 %v3071, 0.1
      %v3136 = vmul.f32 %v3072, 0.1
      %v3137 = vmul.f32 %v3073, 0.1
      %v3138 = vmul.f32 %v3074, 0.1
      %v3139 = vmul.f32 %v3075, 0.1
      %v3140 = vmul.f32 %v3076, 0.1
      %v3141 = vmul.f32 %v3077, 0.1
      %v3142 = vmul.f32 %v3078, 0.1
      %v3143 = vmul.f32 %v3079, 0.1
      %v3144 = vmul.f32 %v3080, 0.1
      %v3145 = vmul.f32 %v3081, 0.1
      %v3146 = vmul.f32 %v3082, 0.1
      %v3147 = vmul.f32 %v3083, 0.1
      %v3148 = vsel %vm3084, %v3052, %v3116
      %v3149 = vsel %vm3085, %v3053, %v3117
      %v3150 = vsel %vm3086, %v3054, %v3118
      %v3151 = vsel %vm3087, %v3055, %v3119
      %v3152 = vsel %vm3088, %v3056, %v3120
      %v3153 = vsel %vm3089, %v3057, %v3121
      %v3154 = vsel %vm3090, %v3058, %v3122
      %v3155 = vsel %vm3091, %v3059, %v3123
      %v3156 = vsel %vm3092, %v3060, %v3124
      %v3157 = vsel %vm3093, %v3061, %v3125
      %v3158 = vsel %vm3094, %v3062, %v3126
      %v3159 = vsel %vm3095, %v3063, %v3127
      %v3160 = vsel %vm3096, %v3064, %v3128
      %v3161 = vsel %vm3097, %v3065, %v3129
      %v3162 = vsel %vm3098, %v3066, %v3130
      %v3163 = vsel %vm3099, %v3067, %v3131
      %v3164 = vsel %vm3100, %v3068, %v3132
      %v3165 = vsel %vm3101, %v3069, %v3133
      %v3166 = vsel %vm3102, %v3070, %v3134
      %v3167 = vsel %vm3103, %v3071, %v3135
      %v3168 = vsel %vm3104, %v3072, %v3136
      %v3169 = vsel %vm3105, %v3073, %v3137
      %v3170 = vsel %vm3106, %v3074, %v3138
      %v3171 = vsel %vm3107, %v3075, %v3139
      %v3172 = vsel %vm3108, %v3076, %v3140
      %v3173 = vsel %vm3109, %v3077, %v3141
      %v3174 = vsel %vm3110, %v3078, %v3142
      %v3175 = vsel %vm3111, %v3079, %v3143
      %v3176 = vsel %vm3112, %v3080, %v3144
      %v3177 = vsel %vm3113, %v3081, %v3145
      %v3178 = vsel %vm3114, %v3082, %v3146
      %v3179 = vsel %vm3115, %v3083, %v3147
      %v3180 = vpack.c.bf16 %v2971, %v2970
      %v3181 = vpack.c.bf16 %v2973, %v2972
      %v3182 = vpack.c.bf16 %v2975, %v2974
      %v3183 = vpack.c.bf16 %v2977, %v2976
      %v3184 = vpack.c.bf16 %v2979, %v2978
      %v3185 = vpack.c.bf16 %v2981, %v2980
      %v3186 = vpack.c.bf16 %v2983, %v2982
      %v3187 = vpack.c.bf16 %v2985, %v2984
      %v3188 = vpack.c.bf16 %v2987, %v2986
      %v3189 = vpack.c.bf16 %v2989, %v2988
      %v3190 = vpack.c.bf16 %v2991, %v2990
      %v3191 = vpack.c.bf16 %v2993, %v2992
      %v3192 = vpack.c.bf16 %v2995, %v2994
      %v3193 = vpack.c.bf16 %v2997, %v2996
      %v3194 = vpack.c.bf16 %v2999, %v2998
      %v3195 = vpack.c.bf16 %v3001, %v3000
      %v3196 = vld [vmem:[%s9] sm:$0xf]
      %v3197 = vpack.c.bf16 %v3149, %v3148
      %v3198 = vpack.c.bf16 %v3151, %v3150
      %v3199 = vpack.c.bf16 %v3153, %v3152
      %v3200 = vpack.c.bf16 %v3155, %v3154
      %v3201 = vpack.c.bf16 %v3157, %v3156
      %v3202 = vpack.c.bf16 %v3159, %v3158
      %v3203 = vpack.c.bf16 %v3161, %v3160
      %v3204 = vpack.c.bf16 %v3163, %v3162
      %v3205 = vpack.c.bf16 %v3165, %v3164
      %v3206 = vpack.c.bf16 %v3167, %v3166
      %v3207 = vpack.c.bf16 %v3169, %v3168
      %v3208 = vpack.c.bf16 %v3171, %v3170
      %v3209 = vpack.c.bf16 %v3173, %v3172
      %v3210 = vpack.c.bf16 %v3175, %v3174
      %v3211 = vpack.c.bf16 %v3177, %v3176
      %v3212 = vpack.c.bf16 %v3179, %v3178
      %v3213 = vld [vmem:[%s9 + $0x4] sm:$0xf]
      %3230 = vrot.lane.b32.xlu0 %v3197, 120
      %v3231 = vpop.permute.xlu0 %3230
      %3232 = vrot.lane.b32.xlu0 %v3198, 120
      %v3233 = vpop.permute.xlu0 %3232
      %3234 = vrot.lane.b32.xlu0 %v3199, 120
      %v3235 = vpop.permute.xlu0 %3234
      %3236 = vrot.lane.b32.xlu0 %v3200, 120
      %v3237 = vpop.permute.xlu0 %3236
      %3238 = vrot.lane.b32.xlu0 %v3201, 120
      %v3239 = vpop.permute.xlu0 %3238
      %3240 = vrot.lane.b32.xlu0 %v3202, 120
      %v3241 = vpop.permute.xlu0 %3240
      %3242 = vrot.lane.b32.xlu0 %v3203, 120
      %v3243 = vpop.permute.xlu0 %3242
      %3244 = vrot.lane.b32.xlu0 %v3204, 120
      %v3245 = vpop.permute.xlu0 %3244
      %3246 = vrot.lane.b32.xlu0 %v3205, 120
      %v3247 = vpop.permute.xlu0 %3246
      %3248 = vrot.lane.b32.xlu0 %v3206, 120
      %v3249 = vpop.permute.xlu0 %3248
      %3250 = vrot.lane.b32.xlu0 %v3207, 120
      %v3251 = vpop.permute.xlu0 %3250
      %3252 = vrot.lane.b32.xlu0 %v3208, 120
      %v3253 = vpop.permute.xlu0 %3252
      %3254 = vrot.lane.b32.xlu0 %v3209, 120
      %v3255 = vpop.permute.xlu0 %3254
      %3256 = vrot.lane.b32.xlu0 %v3210, 120
      %v3257 = vpop.permute.xlu0 %3256
      %3258 = vrot.lane.b32.xlu0 %v3211, 120
      %v3259 = vpop.permute.xlu0 %3258
      %3260 = vrot.lane.b32.xlu0 %v3212, 120
      %v3261 = vpop.permute.xlu0 %3260
      %v3263 = vsel %vm1695, %v3231, 0
      %v3266 = vsel %vm1695, %v3233, 0
      %v3269 = vsel %vm1695, %v3235, 0
      %v3272 = vsel %vm1695, %v3237, 0
      %v3275 = vsel %vm1695, %v3239, 0
      %v3278 = vsel %vm1695, %v3241, 0
      %v3281 = vsel %vm1695, %v3243, 0
      %v3284 = vsel %vm1695, %v3245, 0
      %v3287 = vsel %vm1695, %v3247, 0
      %v3290 = vsel %vm1695, %v3249, 0
      %v3293 = vsel %vm1695, %v3251, 0
      %v3296 = vsel %vm1695, %v3253, 0
      %v3299 = vsel %vm1695, %v3255, 0
      %v3302 = vsel %vm1695, %v3257, 0
      %v3305 = vsel %vm1695, %v3259, 0
      %v3308 = vsel %vm1695, %v3261, 0
      %v3311 = vsel %vm2044, %v3213, 0
      %3313 = vmatprep.subr.bf16.mxu0 0
      %3314 = vmatpush1.bf16.msra.mxu0 %v3311
      %3315 = vmatprep.subr.bf16.mxu0 0
      %3316 = vmatpush1.bf16.msra.mxu0 0
      %3317 = vmatprep.subr.bf16.mxu0 0
      %3318 = vmatpush1.bf16.msra.mxu0 0
      %3319 = vmatprep.subr.bf16.mxu0 0
      %3320 = vmatpush1.bf16.msra.mxu0 0
      %3321 = vmatprep.subr.bf16.mxu0 0
      %3322 = vmatpush1.bf16.msra.mxu0 0
      %3323 = vmatprep.subr.bf16.mxu0 0
      %3324 = vmatpush1.bf16.msra.mxu0 0
      %3325 = vmatprep.subr.bf16.mxu0 0
      %3326 = vmatpush1.bf16.msra.mxu0 0
      %3327 = vmatprep.subr.bf16.mxu0 0
      %3328 = vmatpush1.bf16.msra.mxu0 0
      %3329 = vmatprep.subr.bf16.mxu0 0
      %3330 = vmatpush1.bf16.msra.mxu0 0
      %3331 = vmatprep.subr.bf16.mxu0 0
      %3332 = vmatpush1.bf16.msra.mxu0 0
      %3333 = vmatprep.subr.bf16.mxu0 0
      %3334 = vmatpush1.bf16.msra.mxu0 0
      %3335 = vmatprep.subr.bf16.mxu0 0
      %3336 = vmatpush1.bf16.msra.mxu0 0
      %3337 = vmatprep.subr.bf16.mxu0 0
      %3338 = vmatpush1.bf16.msra.mxu0 0
      %3339 = vmatprep.subr.bf16.mxu0 0
      %3340 = vmatpush1.bf16.msra.mxu0 0
      %3341 = vmatprep.subr.bf16.mxu0 0
      %3342 = vmatpush1.bf16.msra.mxu0 0
      %3343 = vmatprep.subr.bf16.mxu0 0
      %3344 = vmatpush1.bf16.msra.mxu0 0
      %3345 = vmatprep.mubr.bf16.mxu0 0
      %3346 = vmatmul.mubr.bf16.gmra.mrb[0].mxu0 %v3263
      %v3347 = vpop.f32.mrb[0].mxu0
      %v3348 = vadd.f32 0.0, %v3347
      %v3349 = vpop.f32.mrb[0].mxu0
      %v3350 = vpop.f32.mrb[0].mxu0
      %v3351 = vadd.f32 0.0, %v3350
      %v3352 = vpop.f32.mrb[0].mxu0
      %3353 = vmatprep.mubr.bf16.mxu0 0
      %3354 = vmatmul.mubr.bf16.gmra.mrb[0].mxu0 %v3266
      %v3355 = vpop.f32.mrb[0].mxu0
      %v3356 = vadd.f32 0.0, %v3355
      %v3357 = vpop.f32.mrb[0].mxu0
      %v3358 = vpop.f32.mrb[0].mxu0
      %v3359 = vadd.f32 0.0, %v3358
      %v3360 = vpop.f32.mrb[0].mxu0
      %3361 = vmatprep.mubr.bf16.mxu0 0
      %3362 = vmatmul.mubr.bf16.gmra.mrb[0].mxu0 %v3269
      %v3363 = vpop.f32.mrb[0].mxu0
      %v3364 = vadd.f32 0.0, %v3363
      %v3365 = vpop.f32.mrb[0].mxu0
      %v3366 = vpop.f32.mrb[0].mxu0
      %v3367 = vadd.f32 0.0, %v3366
      %v3368 = vpop.f32.mrb[0].mxu0
      %3369 = vmatprep.mubr.bf16.mxu0 0
      %3370 = vmatmul.mubr.bf16.gmra.mrb[0].mxu0 %v3272
      %v3371 = vpop.f32.mrb[0].mxu0
      %v3372 = vadd.f32 0.0, %v3371
      %v3373 = vpop.f32.mrb[0].mxu0
      %v3374 = vpop.f32.mrb[0].mxu0
      %v3375 = vadd.f32 0.0, %v3374
      %v3376 = vpop.f32.mrb[0].mxu0
      %3377 = vmatprep.mubr.bf16.mxu0 0
      %3378 = vmatmul.mubr.bf16.gmra.mrb[0].mxu0 %v3275
      %v3379 = vpop.f32.mrb[0].mxu0
      %v3380 = vadd.f32 0.0, %v3379
      %v3381 = vpop.f32.mrb[0].mxu0
      %v3382 = vpop.f32.mrb[0].mxu0
      %v3383 = vadd.f32 0.0, %v3382
      %v3384 = vpop.f32.mrb[0].mxu0
      %3385 = vmatprep.mubr.bf16.mxu0 0
      %3386 = vmatmul.mubr.bf16.gmra.mrb[0].mxu0 %v3278
      %v3387 = vpop.f32.mrb[0].mxu0
      %v3388 = vadd.f32 0.0, %v3387
      %v3389 = vpop.f32.mrb[0].mxu0
      %v3390 = vpop.f32.mrb[0].mxu0
      %v3391 = vadd.f32 0.0, %v3390
      %v3392 = vpop.f32.mrb[0].mxu0
      %3393 = vmatprep.mubr.bf16.mxu0 0
      %3394 = vmatmul.mubr.bf16.gmra.mrb[0].mxu0 %v3281
      %v3395 = vpop.f32.mrb[0].mxu0
      %v3396 = vadd.f32 0.0, %v3395
      %v3397 = vpop.f32.mrb[0].mxu0
      %v3398 = vpop.f32.mrb[0].mxu0
      %v3399 = vadd.f32 0.0, %v3398
      %v3400 = vpop.f32.mrb[0].mxu0
      %3401 = vmatprep.mubr.bf16.mxu0 0
      %3402 = vmatmul.mubr.bf16.gmra.mrb[0].mxu0 %v3284
      %v3403 = vpop.f32.mrb[0].mxu0
      %v3404 = vadd.f32 0.0, %v3403
      %v3405 = vpop.f32.mrb[0].mxu0
      %v3406 = vpop.f32.mrb[0].mxu0
      %v3407 = vadd.f32 0.0, %v3406
      %v3408 = vpop.f32.mrb[0].mxu0
      %3409 = vmatprep.mubr.bf16.mxu0 0
      %3410 = vmatmul.mubr.bf16.gmra.mrb[0].mxu0 %v3287
      %v3411 = vpop.f32.mrb[0].mxu0
      %v3412 = vadd.f32 0.0, %v3411
      %v3413 = vpop.f32.mrb[0].mxu0
      %v3414 = vpop.f32.mrb[0].mxu0
      %v3415 = vadd.f32 0.0, %v3414
      %v3416 = vpop.f32.mrb[0].mxu0
      %3417 = vmatprep.mubr.bf16.mxu0 0
      %3418 = vmatmul.mubr.bf16.gmra.mrb[0].mxu0 %v3290
      %v3419 = vpop.f32.mrb[0].mxu0
      %v3420 = vadd.f32 0.0, %v3419
      %v3421 = vpop.f32.mrb[0].mxu0
      %v3422 = vpop.f32.mrb[0].mxu0
      %v3423 = vadd.f32 0.0, %v3422
      %v3424 = vpop.f32.mrb[0].mxu0
      %3425 = vmatprep.mubr.bf16.mxu0 0
      %3426 = vmatmul.mubr.bf16.gmra.mrb[0].mxu0 %v3293
      %v3427 = vpop.f32.mrb[0].mxu0
      %v3428 = vadd.f32 0.0, %v3427
      %v3429 = vpop.f32.mrb[0].mxu0
      %v3430 = vpop.f32.mrb[0].mxu0
      %v3431 = vadd.f32 0.0, %v3430
      %v3432 = vpop.f32.mrb[0].mxu0
      %3433 = vmatprep.mubr.bf16.mxu0 0
      %3434 = vmatmul.mubr.bf16.gmra.mrb[0].mxu0 %v3296
      %v3435 = vpop.f32.mrb[0].mxu0
      %v3436 = vadd.f32 0.0, %v3435
      %v3437 = vpop.f32.mrb[0].mxu0
      %v3438 = vpop.f32.mrb[0].mxu0
      %v3439 = vadd.f32 0.0, %v3438
      %v3440 = vpop.f32.mrb[0].mxu0
      %3441 = vmatprep.mubr.bf16.mxu0 0
      %3442 = vmatmul.mubr.bf16.gmra.mrb[0].mxu0 %v3299
      %v3443 = vpop.f32.mrb[0].mxu0
      %v3444 = vadd.f32 0.0, %v3443
      %v3445 = vpop.f32.mrb[0].mxu0
      %v3446 = vpop.f32.mrb[0].mxu0
      %v3447 = vadd.f32 0.0, %v3446
      %v3448 = vpop.f32.mrb[0].mxu0
      %3449 = vmatprep.mubr.bf16.mxu0 0
      %3450 = vmatmul.mubr.bf16.gmra.mrb[0].mxu0 %v3302
      %v3451 = vpop.f32.mrb[0].mxu0
      %v3452 = vadd.f32 0.0, %v3451
      %v3453 = vpop.f32.mrb[0].mxu0
      %v3454 = vpop.f32.mrb[0].mxu0
      %v3455 = vadd.f32 0.0, %v3454
      %v3456 = vpop.f32.mrb[0].mxu0
      %3457 = vmatprep.mubr.bf16.mxu0 0
      %3458 = vmatmul.mubr.bf16.gmra.mrb[0].mxu0 %v3305
      %v3459 = vpop.f32.mrb[0].mxu0
      %v3460 = vadd.f32 0.0, %v3459
      %v3461 = vpop.f32.mrb[0].mxu0
      %v3462 = vpop.f32.mrb[0].mxu0
      %v3463 = vadd.f32 0.0, %v3462
      %v3464 = vpop.f32.mrb[0].mxu0
      %3465 = vmatprep.mubr.bf16.mxu0 0
      %3466 = vmatmul.mubr.bf16.gmra.mrb[0].mxu0 %v3308
      %v3467 = vpop.f32.mrb[0].mxu0
      %v3468 = vadd.f32 0.0, %v3467
      %v3469 = vpop.f32.mrb[0].mxu0
      %v3470 = vpop.f32.mrb[0].mxu0
      %v3471 = vadd.f32 0.0, %v3470
      %v3472 = vpop.f32.mrb[0].mxu0
      %3473 = vdwg.mxu0
      %v3475 = vsel %vm1695, %v3180, 0
      %v3478 = vsel %vm1695, %v3181, 0
      %v3481 = vsel %vm1695, %v3182, 0
      %v3484 = vsel %vm1695, %v3183, 0
      %v3487 = vsel %vm1695, %v3184, 0
      %v3490 = vsel %vm1695, %v3185, 0
      %v3493 = vsel %vm1695, %v3186, 0
      %v3496 = vsel %vm1695, %v3187, 0
      %v3499 = vsel %vm1695, %v3188, 0
      %v3502 = vsel %vm1695, %v3189, 0
      %v3505 = vsel %vm1695, %v3190, 0
      %v3508 = vsel %vm1695, %v3191, 0
      %v3511 = vsel %vm1695, %v3192, 0
      %v3514 = vsel %vm1695, %v3193, 0
      %v3517 = vsel %vm1695, %v3194, 0
      %v3520 = vsel %vm1695, %v3195, 0
      %v3523 = vsel %vm2044, %v3196, 0
      %3525 = vmatprep.subr.bf16.mxu0 0
      %3526 = vmatpush1.bf16.msra.mxu0 %v3523
      %3527 = vmatprep.subr.bf16.mxu0 0
      %3528 = vmatpush1.bf16.msra.mxu0 0
      %3529 = vmatprep.subr.bf16.mxu0 0
      %3530 = vmatpush1.bf16.msra.mxu0 0
      %3531 = vmatprep.subr.bf16.mxu0 0
      %3532 = vmatpush1.bf16.msra.mxu0 0
      %3533 = vmatprep.subr.bf16.mxu0 0
      %3534 = vmatpush1.bf16.msra.mxu0 0
      %3535 = vmatprep.subr.bf16.mxu0 0
      %3536 = vmatpush1.bf16.msra.mxu0 0
      %3537 = vmatprep.subr.bf16.mxu0 0
      %3538 = vmatpush1.bf16.msra.mxu0 0
      %3539 = vmatprep.subr.bf16.mxu0 0
      %3540 = vmatpush1.bf16.msra.mxu0 0
      %3541 = vmatprep.subr.bf16.mxu0 0
      %3542 = vmatpush1.bf16.msra.mxu0 0
      %3543 = vmatprep.subr.bf16.mxu0 0
      %3544 = vmatpush1.bf16.msra.mxu0 0
      %3545 = vmatprep.subr.bf16.mxu0 0
      %3546 = vmatpush1.bf16.msra.mxu0 0
      %3547 = vmatprep.subr.bf16.mxu0 0
      %3548 = vmatpush1.bf16.msra.mxu0 0
      %3549 = vmatprep.subr.bf16.mxu0 0
      %3550 = vmatpush1.bf16.msra.mxu0 0
      %3551 = vmatprep.subr.bf16.mxu0 0
      %3552 = vmatpush1.bf16.msra.mxu0 0
      %3553 = vmatprep.subr.bf16.mxu0 0
      %3554 = vmatpush1.bf16.msra.mxu0 0
      %3555 = vmatprep.subr.bf16.mxu0 0
      %3556 = vmatpush1.bf16.msra.mxu0 0
      %3557 = vmatprep.mubr.bf16.mxu0 0
      %3558 = vmatmul.mubr.bf16.gmra.mrb[0].mxu0 %v3475
      %v3559 = vpop.f32.mrb[0].mxu0
      %v3560 = vadd.f32 %v3348, %v3559
      %v3561 = vpop.f32.mrb[0].mxu0
      %v3562 = vpop.f32.mrb[0].mxu0
      %v3563 = vadd.f32 %v3351, %v3562
      %v3564 = vpop.f32.mrb[0].mxu0
      %3565 = vmatprep.mubr.bf16.mxu0 0
      %3566 = vmatmul.mubr.bf16.gmra.mrb[0].mxu0 %v3478
      %v3567 = vpop.f32.mrb[0].mxu0
      %v3568 = vadd.f32 %v3356, %v3567
      %v3569 = vpop.f32.mrb[0].mxu0
      %v3570 = vpop.f32.mrb[0].mxu0
      %v3571 = vadd.f32 %v3359, %v3570
      %v3572 = vpop.f32.mrb[0].mxu0
      %3573 = vmatprep.mubr.bf16.mxu0 0
      %3574 = vmatmul.mubr.bf16.gmra.mrb[0].mxu0 %v3481
      %v3575 = vpop.f32.mrb[0].mxu0
      %v3576 = vadd.f32 %v3364, %v3575
      %v3577 = vpop.f32.mrb[0].mxu0
      %v3578 = vpop.f32.mrb[0].mxu0
      %v3579 = vadd.f32 %v3367, %v3578
      %v3580 = vpop.f32.mrb[0].mxu0
      %3581 = vmatprep.mubr.bf16.mxu0 0
      %3582 = vmatmul.mubr.bf16.gmra.mrb[0].mxu0 %v3484
      %v3583 = vpop.f32.mrb[0].mxu0
      %v3584 = vadd.f32 %v3372, %v3583
      %v3585 = vpop.f32.mrb[0].mxu0
      %v3586 = vpop.f32.mrb[0].mxu0
      %v3587 = vadd.f32 %v3375, %v3586
      %v3588 = vpop.f32.mrb[0].mxu0
      %3589 = vmatprep.mubr.bf16.mxu0 0
      %3590 = vmatmul.mubr.bf16.gmra.mrb[0].mxu0 %v3487
      %v3591 = vpop.f32.mrb[0].mxu0
      %v3592 = vadd.f32 %v3380, %v3591
      %v3593 = vpop.f32.mrb[0].mxu0
      %v3594 = vpop.f32.mrb[0].mxu0
      %v3595 = vadd.f32 %v3383, %v3594
      %v3596 = vpop.f32.mrb[0].mxu0
      %3597 = vmatprep.mubr.bf16.mxu0 0
      %3598 = vmatmul.mubr.bf16.gmra.mrb[0].mxu0 %v3490
      %v3599 = vpop.f32.mrb[0].mxu0
      %v3600 = vadd.f32 %v3388, %v3599
      %v3601 = vpop.f32.mrb[0].mxu0
      %v3602 = vpop.f32.mrb[0].mxu0
      %v3603 = vadd.f32 %v3391, %v3602
      %v3604 = vpop.f32.mrb[0].mxu0
      %3605 = vmatprep.mubr.bf16.mxu0 0
      %3606 = vmatmul.mubr.bf16.gmra.mrb[0].mxu0 %v3493
      %v3607 = vpop.f32.mrb[0].mxu0
      %v3608 = vadd.f32 %v3396, %v3607
      %v3609 = vpop.f32.mrb[0].mxu0
      %v3610 = vpop.f32.mrb[0].mxu0
      %v3611 = vadd.f32 %v3399, %v3610
      %v3612 = vpop.f32.mrb[0].mxu0
      %3613 = vmatprep.mubr.bf16.mxu0 0
      %3614 = vmatmul.mubr.bf16.gmra.mrb[0].mxu0 %v3496
      %v3615 = vpop.f32.mrb[0].mxu0
      %v3616 = vadd.f32 %v3404, %v3615
      %v3617 = vpop.f32.mrb[0].mxu0
      %v3618 = vpop.f32.mrb[0].mxu0
      %v3619 = vadd.f32 %v3407, %v3618
      %v3620 = vpop.f32.mrb[0].mxu0
      %3621 = vmatprep.mubr.bf16.mxu0 0
      %3622 = vmatmul.mubr.bf16.gmra.mrb[0].mxu0 %v3499
      %v3623 = vpop.f32.mrb[0].mxu0
      %v3624 = vadd.f32 %v3412, %v3623
      %v3625 = vpop.f32.mrb[0].mxu0
      %v3626 = vpop.f32.mrb[0].mxu0
      %v3627 = vadd.f32 %v3415, %v3626
      %v3628 = vpop.f32.mrb[0].mxu0
      %3629 = vmatprep.mubr.bf16.mxu0 0
      %3630 = vmatmul.mubr.bf16.gmra.mrb[0].mxu0 %v3502
      %v3631 = vpop.f32.mrb[0].mxu0
      %v3632 = vadd.f32 %v3420, %v3631
      %v3633 = vpop.f32.mrb[0].mxu0
      %v3634 = vpop.f32.mrb[0].mxu0
      %v3635 = vadd.f32 %v3423, %v3634
      %v3636 = vpop.f32.mrb[0].mxu0
      %3637 = vmatprep.mubr.bf16.mxu0 0
      %3638 = vmatmul.mubr.bf16.gmra.mrb[0].mxu0 %v3505
      %v3639 = vpop.f32.mrb[0].mxu0
      %v3640 = vadd.f32 %v3428, %v3639
      %v3641 = vpop.f32.mrb[0].mxu0
      %v3642 = vpop.f32.mrb[0].mxu0
      %v3643 = vadd.f32 %v3431, %v3642
      %v3644 = vpop.f32.mrb[0].mxu0
      %3645 = vmatprep.mubr.bf16.mxu0 0
      %3646 = vmatmul.mubr.bf16.gmra.mrb[0].mxu0 %v3508
      %v3647 = vpop.f32.mrb[0].mxu0
      %v3648 = vadd.f32 %v3436, %v3647
      %v3649 = vpop.f32.mrb[0].mxu0
      %v3650 = vpop.f32.mrb[0].mxu0
      %v3651 = vadd.f32 %v3439, %v3650
      %v3652 = vpop.f32.mrb[0].mxu0
      %3653 = vmatprep.mubr.bf16.mxu0 0
      %3654 = vmatmul.mubr.bf16.gmra.mrb[0].mxu0 %v3511
      %v3655 = vpop.f32.mrb[0].mxu0
      %v3656 = vadd.f32 %v3444, %v3655
      %v3657 = vpop.f32.mrb[0].mxu0
      %v3658 = vpop.f32.mrb[0].mxu0
      %v3659 = vadd.f32 %v3447, %v3658
      %v3660 = vpop.f32.mrb[0].mxu0
      %3661 = vmatprep.mubr.bf16.mxu0 0
      %3662 = vmatmul.mubr.bf16.gmra.mrb[0].mxu0 %v3514
      %v3663 = vpop.f32.mrb[0].mxu0
      %v3664 = vadd.f32 %v3452, %v3663
      %v3665 = vpop.f32.mrb[0].mxu0
      %v3666 = vpop.f32.mrb[0].mxu0
      %v3667 = vadd.f32 %v3455, %v3666
      %v3668 = vpop.f32.mrb[0].mxu0
      %3669 = vmatprep.mubr.bf16.mxu0 0
      %3670 = vmatmul.mubr.bf16.gmra.mrb[0].mxu0 %v3517
      %v3671 = vpop.f32.mrb[0].mxu0
      %v3672 = vadd.f32 %v3460, %v3671
      %v3673 = vpop.f32.mrb[0].mxu0
      %v3674 = vpop.f32.mrb[0].mxu0
      %v3675 = vadd.f32 %v3463, %v3674
      %v3676 = vpop.f32.mrb[0].mxu0
      %3677 = vmatprep.mubr.bf16.mxu0 0
      %3678 = vmatmul.mubr.bf16.gmra.mrb[0].mxu0 %v3520
      %v3679 = vpop.f32.mrb[0].mxu0
      %v3680 = vadd.f32 %v3468, %v3679
      %v3681 = vpop.f32.mrb[0].mxu0
      %v3682 = vpop.f32.mrb[0].mxu0
      %v3683 = vadd.f32 %v3471, %v3682
      %v3684 = vpop.f32.mrb[0].mxu0
      %3685 = vdwg.mxu0
      %v3686 = vld [vmem:[%s10] sm:$0x1]
      %v3687 = vlaneseq
      %v3688 = vshrl.u32 %v3687, 7
      %v3689 = vsub.s32 0, %v3688
      %v3690 = vrot.slane %v3686, %v3689
      %v3691 = vmul.f32 %v3560, %v3690
      %v3692 = vmul.f32 %v3563, %v3690
      %v3693 = vmul.f32 %v3568, %v3690
      %v3694 = vmul.f32 %v3571, %v3690
      %v3695 = vmul.f32 %v3576, %v3690
      %v3696 = vmul.f32 %v3579, %v3690
      %v3697 = vmul.f32 %v3584, %v3690
      %v3698 = vmul.f32 %v3587, %v3690
      %v3699 = vmul.f32 %v3592, %v3690
      %v3700 = vmul.f32 %v3595, %v3690
      %v3701 = vmul.f32 %v3600, %v3690
      %v3702 = vmul.f32 %v3603, %v3690
      %v3703 = vmul.f32 %v3608, %v3690
      %v3704 = vmul.f32 %v3611, %v3690
      %v3705 = vmul.f32 %v3616, %v3690
      %v3706 = vmul.f32 %v3619, %v3690
      %v3707 = vmul.f32 %v3624, %v3690
      %v3708 = vmul.f32 %v3627, %v3690
      %v3709 = vmul.f32 %v3632, %v3690
      %v3710 = vmul.f32 %v3635, %v3690
      %v3711 = vmul.f32 %v3640, %v3690
      %v3712 = vmul.f32 %v3643, %v3690
      %v3713 = vmul.f32 %v3648, %v3690
      %v3714 = vmul.f32 %v3651, %v3690
      %v3715 = vmul.f32 %v3656, %v3690
      %v3716 = vmul.f32 %v3659, %v3690
      %v3717 = vmul.f32 %v3664, %v3690
      %v3718 = vmul.f32 %v3667, %v3690
      %v3719 = vmul.f32 %v3672, %v3690
      %v3720 = vmul.f32 %v3675, %v3690
      %v3721 = vmul.f32 %v3680, %v3690
      %v3722 = vmul.f32 %v3683, %v3690
      %v3723 = vld [vmem:[%s10 + $0x1] sm:$0x1]
      %v3724 = vlaneseq
      %v3725 = vshrl.u32 %v3724, 7
      %v3726 = vsub.s32 0, %v3725
      %v3727 = vrot.slane %v3723, %v3726
      %v3728 = vadd.f32 %v3691, %v3727
      %v3729 = vadd.f32 %v3692, %v3727
      %v3730 = vadd.f32 %v3693, %v3727
      %v3731 = vadd.f32 %v3694, %v3727
      %v3732 = vadd.f32 %v3695, %v3727
      %v3733 = vadd.f32 %v3696, %v3727
      %v3734 = vadd.f32 %v3697, %v3727
      %v3735 = vadd.f32 %v3698, %v3727
      %v3736 = vadd.f32 %v3699, %v3727
      %v3737 = vadd.f32 %v3700, %v3727
      %v3738 = vadd.f32 %v3701, %v3727
      %v3739 = vadd.f32 %v3702, %v3727
      %v3740 = vadd.f32 %v3703, %v3727
      %v3741 = vadd.f32 %v3704, %v3727
      %v3742 = vadd.f32 %v3705, %v3727
      %v3743 = vadd.f32 %v3706, %v3727
      %v3744 = vadd.f32 %v3707, %v3727
      %v3745 = vadd.f32 %v3708, %v3727
      %v3746 = vadd.f32 %v3709, %v3727
      %v3747 = vadd.f32 %v3710, %v3727
      %v3748 = vadd.f32 %v3711, %v3727
      %v3749 = vadd.f32 %v3712, %v3727
      %v3750 = vadd.f32 %v3713, %v3727
      %v3751 = vadd.f32 %v3714, %v3727
      %v3752 = vadd.f32 %v3715, %v3727
      %v3753 = vadd.f32 %v3716, %v3727
      %v3754 = vadd.f32 %v3717, %v3727
      %v3755 = vadd.f32 %v3718, %v3727
      %v3756 = vadd.f32 %v3719, %v3727
      %v3757 = vadd.f32 %v3720, %v3727
      %v3758 = vadd.f32 %v3721, %v3727
      %v3759 = vadd.f32 %v3722, %v3727
      %v3760 = vxor.u32 %v3728, 2147483648
      %v3761 = vxor.u32 %v3729, 2147483648
      %v3762 = vxor.u32 %v3730, 2147483648
      %v3763 = vxor.u32 %v3731, 2147483648
      %v3764 = vxor.u32 %v3732, 2147483648
      %v3765 = vxor.u32 %v3733, 2147483648
      %v3766 = vxor.u32 %v3734, 2147483648
      %v3767 = vxor.u32 %v3735, 2147483648
      %v3768 = vxor.u32 %v3736, 2147483648
      %v3769 = vxor.u32 %v3737, 2147483648
      %v3770 = vxor.u32 %v3738, 2147483648
      %v3771 = vxor.u32 %v3739, 2147483648
      %v3772 = vxor.u32 %v3740, 2147483648
      %v3773 = vxor.u32 %v3741, 2147483648
      %v3774 = vxor.u32 %v3742, 2147483648
      %v3775 = vxor.u32 %v3743, 2147483648
      %v3776 = vxor.u32 %v3744, 2147483648
      %v3777 = vxor.u32 %v3745, 2147483648
      %v3778 = vxor.u32 %v3746, 2147483648
      %v3779 = vxor.u32 %v3747, 2147483648
      %v3780 = vxor.u32 %v3748, 2147483648
      %v3781 = vxor.u32 %v3749, 2147483648
      %v3782 = vxor.u32 %v3750, 2147483648
      %v3783 = vxor.u32 %v3751, 2147483648
      %v3784 = vxor.u32 %v3752, 2147483648
      %v3785 = vxor.u32 %v3753, 2147483648
      %v3786 = vxor.u32 %v3754, 2147483648
      %v3787 = vxor.u32 %v3755, 2147483648
      %v3788 = vxor.u32 %v3756, 2147483648
      %v3789 = vxor.u32 %v3757, 2147483648
      %v3790 = vxor.u32 %v3758, 2147483648
      %v3791 = vxor.u32 %v3759, 2147483648
      %v3792 = vmul.f32 %v3760, 1.442695
      %v3793 = vpow.pop %v3792
      %v3794 = vmul.f32 %v3761, 1.442695
      %v3795 = vpow.pop %v3794
      %v3796 = vmul.f32 %v3762, 1.442695
      %v3797 = vpow.pop %v3796
      %v3798 = vmul.f32 %v3763, 1.442695
      %v3799 = vpow.pop %v3798
      %v3800 = vmul.f32 %v3764, 1.442695
      %v3801 = vpow.pop %v3800
      %v3802 = vmul.f32 %v3765, 1.442695
      %v3803 = vpow.pop %v3802
      %v3804 = vmul.f32 %v3766, 1.442695
      %v3805 = vpow.pop %v3804
      %v3806 = vmul.f32 %v3767, 1.442695
      %v3807 = vpow.pop %v3806
      %v3808 = vmul.f32 %v3768, 1.442695
      %v3809 = vpow.pop %v3808
      %v3810 = vmul.f32 %v3769, 1.442695
      %v3811 = vpow.pop %v3810
      %v3812 = vmul.f32 %v3770, 1.442695
      %v3813 = vpow.pop %v3812
      %v3814 = vmul.f32 %v3771, 1.442695
      %v3815 = vpow.pop %v3814
      %v3816 = vmul.f32 %v3772, 1.442695
      %v3817 = vpow.pop %v3816
      %v3818 = vmul.f32 %v3773, 1.442695
      %v3819 = vpow.pop %v3818
      %v3820 = vmul.f32 %v3774, 1.442695
      %v3821 = vpow.pop %v3820
      %v3822 = vmul.f32 %v3775, 1.442695
      %v3823 = vpow.pop %v3822
      %v3824 = vmul.f32 %v3776, 1.442695
      %v3825 = vpow.pop %v3824
      %v3826 = vmul.f32 %v3777, 1.442695
      %v3827 = vpow.pop %v3826
      %v3828 = vmul.f32 %v3778, 1.442695
      %v3829 = vpow.pop %v3828
      %v3830 = vmul.f32 %v3779, 1.442695
      %v3831 = vpow.pop %v3830
      %v3832 = vmul.f32 %v3780, 1.442695
      %v3833 = vpow.pop %v3832
      %v3834 = vmul.f32 %v3781, 1.442695
      %v3835 = vpow.pop %v3834
      %v3836 = vmul.f32 %v3782, 1.442695
      %v3837 = vpow.pop %v3836
      %v3838 = vmul.f32 %v3783, 1.442695
      %v3839 = vpow.pop %v3838
      %v3840 = vmul.f32 %v3784, 1.442695
      %v3841 = vpow.pop %v3840
      %v3842 = vmul.f32 %v3785, 1.442695
      %v3843 = vpow.pop %v3842
      %v3844 = vmul.f32 %v3786, 1.442695
      %v3845 = vpow.pop %v3844
      %v3846 = vmul.f32 %v3787, 1.442695
      %v3847 = vpow.pop %v3846
      %v3848 = vmul.f32 %v3788, 1.442695
      %v3849 = vpow.pop %v3848
      %v3850 = vmul.f32 %v3789, 1.442695
      %v3851 = vpow.pop %v3850
      %v3852 = vmul.f32 %v3790, 1.442695
      %v3853 = vpow.pop %v3852
      %v3854 = vmul.f32 %v3791, 1.442695
      %v3855 = vpow.pop %v3854
      %v3856 = vadd.f32 %v3793, 1.0
      %v3857 = vadd.f32 %v3795, 1.0
      %v3858 = vadd.f32 %v3797, 1.0
      %v3859 = vadd.f32 %v3799, 1.0
      %v3860 = vadd.f32 %v3801, 1.0
      %v3861 = vadd.f32 %v3803, 1.0
      %v3862 = vadd.f32 %v3805, 1.0
      %v3863 = vadd.f32 %v3807, 1.0
      %v3864 = vadd.f32 %v3809, 1.0
      %v3865 = vadd.f32 %v3811, 1.0
      %v3866 = vadd.f32 %v3813, 1.0
      %v3867 = vadd.f32 %v3815, 1.0
      %v3868 = vadd.f32 %v3817, 1.0
      %v3869 = vadd.f32 %v3819, 1.0
      %v3870 = vadd.f32 %v3821, 1.0
      %v3871 = vadd.f32 %v3823, 1.0
      %v3872 = vadd.f32 %v3825, 1.0
      %v3873 = vadd.f32 %v3827, 1.0
      %v3874 = vadd.f32 %v3829, 1.0
      %v3875 = vadd.f32 %v3831, 1.0
      %v3876 = vadd.f32 %v3833, 1.0
      %v3877 = vadd.f32 %v3835, 1.0
      %v3878 = vadd.f32 %v3837, 1.0
      %v3879 = vadd.f32 %v3839, 1.0
      %v3880 = vadd.f32 %v3841, 1.0
      %v3881 = vadd.f32 %v3843, 1.0
      %v3882 = vadd.f32 %v3845, 1.0
      %v3883 = vadd.f32 %v3847, 1.0
      %v3884 = vadd.f32 %v3849, 1.0
      %v3885 = vadd.f32 %v3851, 1.0
      %v3886 = vadd.f32 %v3853, 1.0
      %v3887 = vadd.f32 %v3855, 1.0
      %v3888 = vrcp.pop %v3856
      %v3889 = vmul.f32 1.0, %v3888
      %v3890 = vrcp.pop %v3857
      %v3891 = vmul.f32 1.0, %v3890
      %v3892 = vrcp.pop %v3858
      %v3893 = vmul.f32 1.0, %v3892
      %v3894 = vrcp.pop %v3859
      %v3895 = vmul.f32 1.0, %v3894
      %v3896 = vrcp.pop %v3860
      %v3897 = vmul.f32 1.0, %v3896
      %v3898 = vrcp.pop %v3861
      %v3899 = vmul.f32 1.0, %v3898
      %v3900 = vrcp.pop %v3862
      %v3901 = vmul.f32 1.0, %v3900
      %v3902 = vrcp.pop %v3863
      %v3903 = vmul.f32 1.0, %v3902
      %v3904 = vrcp.pop %v3864
      %v3905 = vmul.f32 1.0, %v3904
      %v3906 = vrcp.pop %v3865
      %v3907 = vmul.f32 1.0, %v3906
      %v3908 = vrcp.pop %v3866
      %v3909 = vmul.f32 1.0, %v3908
      %v3910 = vrcp.pop %v3867
      %v3911 = vmul.f32 1.0, %v3910
      %v3912 = vrcp.pop %v3868
      %v3913 = vmul.f32 1.0, %v3912
      %v3914 = vrcp.pop %v3869
      %v3915 = vmul.f32 1.0, %v3914
      %v3916 = vrcp.pop %v3870
      %v3917 = vmul.f32 1.0, %v3916
      %v3918 = vrcp.pop %v3871
      %v3919 = vmul.f32 1.0, %v3918
      %v3920 = vrcp.pop %v3872
      %v3921 = vmul.f32 1.0, %v3920
      %v3922 = vrcp.pop %v3873
      %v3923 = vmul.f32 1.0, %v3922
      %v3924 = vrcp.pop %v3874
      %v3925 = vmul.f32 1.0, %v3924
      %v3926 = vrcp.pop %v3875
      %v3927 = vmul.f32 1.0, %v3926
      %v3928 = vrcp.pop %v3876
      %v3929 = vmul.f32 1.0, %v3928
      %v3930 = vrcp.pop %v3877
      %v3931 = vmul.f32 1.0, %v3930
      %v3932 = vrcp.pop %v3878
      %v3933 = vmul.f32 1.0, %v3932
      %v3934 = vrcp.pop %v3879
      %v3935 = vmul.f32 1.0, %v3934
      %v3936 = vrcp.pop %v3880
      %v3937 = vmul.f32 1.0, %v3936
      %v3938 = vrcp.pop %v3881
      %v3939 = vmul.f32 1.0, %v3938
      %v3940 = vrcp.pop %v3882
      %v3941 = vmul.f32 1.0, %v3940
      %v3942 = vrcp.pop %v3883
      %v3943 = vmul.f32 1.0, %v3942
      %v3944 = vrcp.pop %v3884
      %v3945 = vmul.f32 1.0, %v3944
      %v3946 = vrcp.pop %v3885
      %v3947 = vmul.f32 1.0, %v3946
      %v3948 = vrcp.pop %v3886
      %v3949 = vmul.f32 1.0, %v3948
      %v3950 = vrcp.pop %v3887
      %v3951 = vmul.f32 1.0, %v3950
      %v3952 = vmul.f32 %v3728, %v3889
      %v3953 = vmul.f32 %v3729, %v3891
      %v3954 = vmul.f32 %v3730, %v3893
      %v3955 = vmul.f32 %v3731, %v3895
      %v3956 = vmul.f32 %v3732, %v3897
      %v3957 = vmul.f32 %v3733, %v3899
      %v3958 = vmul.f32 %v3734, %v3901
      %v3959 = vmul.f32 %v3735, %v3903
      %v3960 = vmul.f32 %v3736, %v3905
      %v3961 = vmul.f32 %v3737, %v3907
      %v3962 = vmul.f32 %v3738, %v3909
      %v3963 = vmul.f32 %v3739, %v3911
      %v3964 = vmul.f32 %v3740, %v3913
      %v3965 = vmul.f32 %v3741, %v3915
      %v3966 = vmul.f32 %v3742, %v3917
      %v3967 = vmul.f32 %v3743, %v3919
      %v3968 = vmul.f32 %v3744, %v3921
      %v3969 = vmul.f32 %v3745, %v3923
      %v3970 = vmul.f32 %v3746, %v3925
      %v3971 = vmul.f32 %v3747, %v3927
      %v3972 = vmul.f32 %v3748, %v3929
      %v3973 = vmul.f32 %v3749, %v3931
      %v3974 = vmul.f32 %v3750, %v3933
      %v3975 = vmul.f32 %v3751, %v3935
      %v3976 = vmul.f32 %v3752, %v3937
      %v3977 = vmul.f32 %v3753, %v3939
      %v3978 = vmul.f32 %v3754, %v3941
      %v3979 = vmul.f32 %v3755, %v3943
      %v3980 = vmul.f32 %v3756, %v3945
      %v3981 = vmul.f32 %v3757, %v3947
      %v3982 = vmul.f32 %v3758, %v3949
      %v3983 = vmul.f32 %v3759, %v3951
      %v3984 = vpack.c.bf16 %v3953, %v3952
      %v3985 = vpack.c.bf16 %v3955, %v3954
      %v3986 = vpack.c.bf16 %v3957, %v3956
      %v3987 = vpack.c.bf16 %v3959, %v3958
      %v3988 = vpack.c.bf16 %v3961, %v3960
      %v3989 = vpack.c.bf16 %v3963, %v3962
      %v3990 = vpack.c.bf16 %v3965, %v3964
      %v3991 = vpack.c.bf16 %v3967, %v3966
      %v3992 = vpack.c.bf16 %v3969, %v3968
      %v3993 = vpack.c.bf16 %v3971, %v3970
      %v3994 = vpack.c.bf16 %v3973, %v3972
      %v3995 = vpack.c.bf16 %v3975, %v3974
      %v3996 = vpack.c.bf16 %v3977, %v3976
      %v3997 = vpack.c.bf16 %v3979, %v3978
      %v3998 = vpack.c.bf16 %v3981, %v3980
      %v3999 = vpack.c.bf16 %v3983, %v3982
      %v4016 = vunpack.c.l.b16 %v3984
      %v4017 = vunpack.c.h.b16 %v3984
      %v4018 = vunpack.c.l.b16 %v3985
      %v4019 = vunpack.c.h.b16 %v3985
      %v4020 = vunpack.c.l.b16 %v3986
      %v4021 = vunpack.c.h.b16 %v3986
      %v4022 = vunpack.c.l.b16 %v3987
      %v4023 = vunpack.c.h.b16 %v3987
      %v4024 = vunpack.c.l.b16 %v3988
      %v4025 = vunpack.c.h.b16 %v3988
      %v4026 = vunpack.c.l.b16 %v3989
      %v4027 = vunpack.c.h.b16 %v3989
      %v4028 = vunpack.c.l.b16 %v3990
      %v4029 = vunpack.c.h.b16 %v3990
      %v4030 = vunpack.c.l.b16 %v3991
      %v4031 = vunpack.c.h.b16 %v3991
      %v4032 = vunpack.c.l.b16 %v3992
      %v4033 = vunpack.c.h.b16 %v3992
      %v4034 = vunpack.c.l.b16 %v3993
      %v4035 = vunpack.c.h.b16 %v3993
      %v4036 = vunpack.c.l.b16 %v3994
      %v4037 = vunpack.c.h.b16 %v3994
      %v4038 = vunpack.c.l.b16 %v3995
      %v4039 = vunpack.c.h.b16 %v3995
      %v4040 = vunpack.c.l.b16 %v3996
      %v4041 = vunpack.c.h.b16 %v3996
      %v4042 = vunpack.c.l.b16 %v3997
      %v4043 = vunpack.c.h.b16 %v3997
      %v4044 = vunpack.c.l.b16 %v3998
      %v4045 = vunpack.c.h.b16 %v3998
      %v4046 = vunpack.c.l.b16 %v3999
      %v4047 = vunpack.c.h.b16 %v3999
      %v4048 = vpack.c.b16 %v4016, %v4016
      %v4049 = vpack.c.b16 %v4017, %v4017
      %v4050 = vpack.c.b16 %v4018, %v4018
      %v4051 = vpack.c.b16 %v4019, %v4019
      %v4052 = vpack.c.b16 %v4020, %v4020
      %v4053 = vpack.c.b16 %v4021, %v4021
      %v4054 = vpack.c.b16 %v4022, %v4022
      %v4055 = vpack.c.b16 %v4023, %v4023
      %v4056 = vpack.c.b16 %v4024, %v4024
      %v4057 = vpack.c.b16 %v4025, %v4025
      %v4058 = vpack.c.b16 %v4026, %v4026
      %v4059 = vpack.c.b16 %v4027, %v4027
      %v4060 = vpack.c.b16 %v4028, %v4028
      %v4061 = vpack.c.b16 %v4029, %v4029
      %v4062 = vpack.c.b16 %v4030, %v4030
      %v4063 = vpack.c.b16 %v4031, %v4031
      %v4064 = vpack.c.b16 %v4032, %v4032
      %v4065 = vpack.c.b16 %v4033, %v4033
      %v4066 = vpack.c.b16 %v4034, %v4034
      %v4067 = vpack.c.b16 %v4035, %v4035
      %v4068 = vpack.c.b16 %v4036, %v4036
      %v4069 = vpack.c.b16 %v4037, %v4037
      %v4070 = vpack.c.b16 %v4038, %v4038
      %v4071 = vpack.c.b16 %v4039, %v4039
      %v4072 = vpack.c.b16 %v4040, %v4040
      %v4073 = vpack.c.b16 %v4041, %v4041
      %v4074 = vpack.c.b16 %v4042, %v4042
      %v4075 = vpack.c.b16 %v4043, %v4043
      %v4076 = vpack.c.b16 %v4044, %v4044
      %v4077 = vpack.c.b16 %v4045, %v4045
      %v4078 = vpack.c.b16 %v4046, %v4046
      %v4079 = vpack.c.b16 %v4047, %v4047
      %vm4112 = vcmask 125952
      %4113 = vst.msk [vmem:[%s592] sm:$0xf] %vm4112, %v4048
      %4114 = vst.msk [vmem:[%s592 + $0x4] sm:$0xf] %vm4112, %v4049
      %4115 = vst.msk [vmem:[%s592 + $0x8] sm:$0xf] %vm4112, %v4050
      %4116 = vst.msk [vmem:[%s592 + $0xc] sm:$0xf] %vm4112, %v4051
      %4117 = vst.msk [vmem:[%s592 + $0x10] sm:$0xf] %vm4112, %v4052
      %4118 = vst.msk [vmem:[%s592 + $0x14] sm:$0xf] %vm4112, %v4053
      %4119 = vst.msk [vmem:[%s592 + $0x18] sm:$0xf] %vm4112, %v4054
      %4120 = vst.msk [vmem:[%s592 + $0x1c] sm:$0xf] %vm4112, %v4055
      %4121 = vst.msk [vmem:[%s592 + $0x20] sm:$0xf] %vm4112, %v4056
      %4122 = vst.msk [vmem:[%s592 + $0x24] sm:$0xf] %vm4112, %v4057
      %4123 = vst.msk [vmem:[%s592 + $0x28] sm:$0xf] %vm4112, %v4058
      %4124 = vst.msk [vmem:[%s592 + $0x2c] sm:$0xf] %vm4112, %v4059
      %4125 = vst.msk [vmem:[%s592 + $0x30] sm:$0xf] %vm4112, %v4060
      %4126 = vst.msk [vmem:[%s592 + $0x34] sm:$0xf] %vm4112, %v4061
      %4127 = vst.msk [vmem:[%s592 + $0x38] sm:$0xf] %vm4112, %v4062
      %4128 = vst.msk [vmem:[%s592 + $0x3c] sm:$0xf] %vm4112, %v4063
      %4129 = vst.msk [vmem:[%s592 + $0x40] sm:$0xf] %vm4112, %v4064
      %4130 = vst.msk [vmem:[%s592 + $0x44] sm:$0xf] %vm4112, %v4065
      %4131 = vst.msk [vmem:[%s592 + $0x48] sm:$0xf] %vm4112, %v4066
      %4132 = vst.msk [vmem:[%s592 + $0x4c] sm:$0xf] %vm4112, %v4067
      %4133 = vst.msk [vmem:[%s592 + $0x50] sm:$0xf] %vm4112, %v4068
      %4134 = vst.msk [vmem:[%s592 + $0x54] sm:$0xf] %vm4112, %v4069
      %4135 = vst.msk [vmem:[%s592 + $0x58] sm:$0xf] %vm4112, %v4070
      %4136 = vst.msk [vmem:[%s592 + $0x5c] sm:$0xf] %vm4112, %v4071
      %4137 = vst.msk [vmem:[%s592 + $0x60] sm:$0xf] %vm4112, %v4072
      %4138 = vst.msk [vmem:[%s592 + $0x64] sm:$0xf] %vm4112, %v4073
      %4139 = vst.msk [vmem:[%s592 + $0x68] sm:$0xf] %vm4112, %v4074
      %4140 = vst.msk [vmem:[%s592 + $0x6c] sm:$0xf] %vm4112, %v4075
      %4141 = vst.msk [vmem:[%s592 + $0x70] sm:$0xf] %vm4112, %v4076
      %4142 = vst.msk [vmem:[%s592 + $0x74] sm:$0xf] %vm4112, %v4077
      %4143 = vst.msk [vmem:[%s592 + $0x78] sm:$0xf] %vm4112, %v4078
      %4144 = vst.msk [vmem:[%s592 + $0x7c] sm:$0xf] %vm4112, %v4079
      %s4145 = smul.u32 16, %s27
      %p4146 = scmp.lt.s32.totalorder %s26, 1
      %s4147 = scalar_select %p4146, %s26, 1
      %p4148 = scmp.lt.s32.totalorder %s4145, 15
      %s4149 = scalar_select %p4148, %s4145, 15
      %s4150 = smul.addr %s4149, 2
      %s4151 = smul.addr %s4147, 32
      %s4152 = sadd.s32 %s4150, %s4151
      %s4153 = smul.addr %s4152, 4
      %s4154 = scalar_lea.vmem %s11, %s4153
      // Predicated region
      $region65: #{bottleneck_csp_forward.3} parent=63 // pred_check
        %p4155 = pneg %p329
      $region66: #{bottleneck_csp_forward.3} parent=63 // pred_check_branch
        %4157 = sbr.rel (%p4155) target = $region68
      $region67: #{bottleneck_csp_forward.3} parent=63 // pred_region
        %s4158 = smul.u32 16, %s27
      $region68: #{bottleneck_csp_forward.3} parent=63 // pred_fallthru
        _
    $region64: #{bottleneck_csp_forward.3} parent=5 // pred_fallthru
      _
    %p4159 = scmp.le.s32.totalorder 2, %s17
    // Predicated region
    $region69: #{bottleneck_csp_forward.3} parent=5 // pred_check
      %p4160 = pneg %p4159
    $region70: #{bottleneck_csp_forward.3} parent=5 // pred_check_branch
      %4162 = sbr.rel (%p4160) target = $region72
    $region71: #{bottleneck_csp_forward.3} parent=5 // pred_region
      %s4163 = ssub.s32 %s17, 2
      // Predicated region
      $region73: #{bottleneck_csp_forward.3} parent=71 // pred_check
        %p4164 = pneg %p335
      $region74: #{bottleneck_csp_forward.3} parent=71 // pred_check_branch
        %4166 = sbr.rel (%p4164) target = $region76
      $region75: #{bottleneck_csp_forward.3} parent=71 // pred_region
        %s4167 = smul.u32 16, %s29
        %p4168 = scmp.lt.s32.totalorder %s28, 1
        %s4169 = scalar_select %p4168, %s28, 1
        %p4170 = scmp.lt.s32.totalorder %s4167, 15
        %s4171 = scalar_select %p4170, %s4167, 15
        %s4172 = smul.addr %s4171, 2
        %s4173 = smul.addr %s4169, 32
        %s4174 = sadd.s32 %s4172, %s4173
        %s4175 = smul.addr %s4174, 4
        %s4176 = scalar_lea.vmem %s11, %s4175
      $region76: #{bottleneck_csp_forward.3} parent=71 // pred_fallthru
        _
    $region72: #{bottleneck_csp_forward.3} parent=5 // pred_fallthru
      _
  $region6: #{bottleneck_csp_forward.3} parent=0 // loop_footer
    %s21 = sadd.s32 1, %s17
  $region7: #{bottleneck_csp_forward.3} parent=0 // loop_footer_branch
    %16 = sbr.rel target = $region3
  $region8: #{bottleneck_csp_forward.3} parent=0 // loop_exit
    _

</llo_original>
